<compile_context>
chip_gen: v6e
topology: v6e:2x2x1
jax: 0.10.0
libtpu: 0.0.40
codegen_flags: <defaults>
</compile_context>

<pallas_src>
import numpy as np
import jax
import jax.numpy as jnp
from jax.experimental import pallas as pl
from jax.experimental.pallas import tpu as pltpu

# ----- small deterministic configuration (same semantics as the validated version) -----
B   = 2                      # batch
N   = 256                    # audio samples
WIN = 32                     # STFT window
HOP = 16                     # STFT hop
F   = 16                     # frequency bins (feature channels)
T   = (N - WIN) // HOP + 1   # time frames = 15
PAD = 3                      # adaptive_normalization.to_pad
K   = 2 * PAD + 1            # smoothing filter length (7)
C1  = 16                     # first_layer out channels
C2  = 32                     # encoder hidden channels
C3  = 32                     # encoder out channels
H   = 32                     # decoder LSTM hidden size
R   = T * B                  # flattened rows, time-major: row = t*B + b
LANES = 128

# ----- constant-slab row offsets (8-aligned blocks inside one (256,128) f32 slab) -----
R_CS   = 0          # (WIN, 2F)  [cosT | sinT] STFT basis
R_SMAT = 32         # (R, R)     adaptive-norm fold (block-diag over batch)
R_W1   = 64         # (2F, C1)   first_layer weight, acts on [spect | norm]
R_W2   = 96         # (C1, C2)
R_W3   = 112        # (C2, C3)
R_WIH  = 144        # (C3, 4H)   LSTM input weights   (g-gate cols pre-scaled x2)
R_WHH  = 176        # (H, 4H)    LSTM recurrent weights (g-gate cols pre-scaled x2)
R_WOUT = 208        # (H, 1)     decoder output projection
R_AVG  = 240        # (B, R)     mean-over-time matrix
R_BIAS = 248        # rows: +0 b1, +1 b2, +2 b3, +3 bg(scaled), +4 bout
SLAB_ROWS = 256


def _sig(v):
    return 1.0 / (1.0 + jnp.exp(-v))


# ----------------------------------------------------------------------------
# The single fused kernel: x (B,N), const slab (256,128), h0/c0 (B,H) -> (B,128).
# ----------------------------------------------------------------------------
def _fused_kernel(x_ref, slab_ref, h0_ref, c0_ref, out_ref):
    f32 = jnp.float32

    # ---- static views into the single constant slab (one weight DMA total) ----
    cs   = slab_ref[R_CS:R_CS + WIN, 0:2 * F]            # (WIN, 2F)
    smat = slab_ref[R_SMAT:R_SMAT + R, 0:R]              # (R, R)
    w1   = slab_ref[R_W1:R_W1 + 2 * F, 0:C1]             # (2F, C1)
    w2   = slab_ref[R_W2:R_W2 + C1, 0:C2]                # (C1, C2)
    w3   = slab_ref[R_W3:R_W3 + C2, 0:C3]                # (C2, C3)
    wih  = slab_ref[R_WIH:R_WIH + C3, 0:4 * H]           # (C3, 4H)
    whh  = slab_ref[R_WHH:R_WHH + H, 0:4 * H]            # (H, 4H)
    wout = slab_ref[R_WOUT:R_WOUT + H, 0:1]              # (H, 1)
    avg  = slab_ref[R_AVG:R_AVG + B, 0:R]                # (B, R)
    b1   = slab_ref[R_BIAS + 0:R_BIAS + 1, 0:C1]         # (1, C1)
    b2   = slab_ref[R_BIAS + 1:R_BIAS + 2, 0:C2]         # (1, C2)
    b3   = slab_ref[R_BIAS + 2:R_BIAS + 3, 0:C3]         # (1, C3)
    bg   = slab_ref[R_BIAS + 3:R_BIAS + 4, 0:4 * H]      # (1, 4H)
    bout = slab_ref[R_BIAS + 4:R_BIAS + 5, 0:1]          # (1, 1)

    # ---- in-kernel frame extraction (no XLA glue, no HBM intermediate) ----
    x = x_ref[...]                                        # (B, N)
    frames = jnp.concatenate(
        [x[:, t * HOP:t * HOP + WIN] for t in range(T)], axis=0)   # (R, WIN), row=t*B+b

    # ---- feature extractor: STFT magnitude (single fused cos|sin matmul) ----
    ri = jnp.dot(frames, cs, preferred_element_type=f32)            # (R, 2F)
    real = ri[:, 0:F]
    imag = ri[:, F:2 * F]
    spect = jnp.sqrt(real * real + imag * imag + 1e-9)              # (R, F)

    # ---- adaptive normalization: reflect-pad + conv1d + time-mean folded into smat ----
    s = jnp.log(spect + 1.0) + 13.86294                             # (R, F)
    ones_ff = jnp.full((F, F), 1.0 / F, f32)
    mean_b = jnp.dot(s, ones_ff, preferred_element_type=f32)        # (R, F) row-mean, lane-dense
    mean_mean = jnp.dot(smat, mean_b, preferred_element_type=f32)   # (R, F) per-batch scalar bcast
    norm = s - mean_mean                                            # (R, F)

    # ---- first_layer + encoder (1x1 convs == channel matmuls) ----
    xcat = jnp.concatenate([spect, norm], axis=1)                   # (R, 2F) lane concat
    h1 = jnp.maximum(jnp.dot(xcat, w1, preferred_element_type=f32) + b1, 0.0)  # (R, C1)
    h2 = jnp.maximum(jnp.dot(h1, w2, preferred_element_type=f32) + b2, 0.0)    # (R, C2)
    h3 = jnp.maximum(jnp.dot(h2, w3, preferred_element_type=f32) + b3, 0.0)    # (R, C3)

    # ---- decoder: batched LSTM over time, fully unrolled (T=15 static) ----
    gx = jnp.dot(h3, wih, preferred_element_type=f32) + bg          # (R, 4H)
    gx_t = [gx[t * B:(t + 1) * B, :] for t in range(T)]             # off the recurrence path
    h = h0_ref[...]                                                 # (B, H)
    c = c0_ref[...]                                                 # (B, H)
    hs_list = []
    for t in range(T):
        g = gx_t[t] + jnp.dot(h, whh, preferred_element_type=f32)   # (B, 4H)
        ga = _sig(g)                    # one full-vreg sigmoid (g-gate cols pre-scaled x2)
        i_g = ga[:, 0:H]
        f_g = ga[:, H:2 * H]
        g_g = 2.0 * ga[:, 2 * H:3 * H] - 1.0                        # == tanh(original preact)
        o_g = ga[:, 3 * H:4 * H]
        c = f_g * c + i_g * g_g
        h = o_g * jnp.tanh(c)
        hs_list.append(h)

    # ---- output projection + sigmoid hoisted out of the recurrence; mean over time ----
    hs = jnp.concatenate(hs_list, axis=0)                           # (R, H), no scratch stores
    y = _sig(jnp.dot(hs, wout, preferred_element_type=f32) + bout)  # (R, 1)
    prob = jnp.dot(avg, y, preferred_element_type=f32)              # (B, 1)

    # ---- single lane-dense packed output: [ h | c | prob | zero-pad ] ----
    pad = jnp.zeros((B, LANES - 2 * H - 1), f32)
    out_ref[...] = jnp.concatenate([h, c, prob, pad], axis=1)       # (B, 128), one store


# ----------------------------------------------------------------------------
# Host-side precomputed folds (exact linear algebra, no approximation).
# ----------------------------------------------------------------------------
def _adanorm_matrix(filt):
    """Fold simple_pad(reflect) + conv1d(filter) + mean-over-time into one (R,R)
    block-diagonal matrix applied to the per-row channel mean."""
    filt = np.asarray(filt, np.float32).reshape(-1)                 # (K,)
    idx = ([PAD - p for p in range(PAD)] + list(range(T)) +
           [T - 2 - q for q in range(PAD)])                         # padded time index map
    w_eff = np.zeros(T, np.float32)
    for j in range(T):            # conv output position
        for k in range(K):
            w_eff[idx[j + k]] += filt[k]
    w_eff /= T                    # mean over conv outputs
    smat = np.zeros((R, R), np.float32)
    for b in range(B):
        for t1 in range(T):
            for t2 in range(T):
                smat[t1 * B + b, t2 * B + b] = w_eff[t2]
    return smat


def _time_avg_matrix():
    avg = np.zeros((B, R), np.float32)
    for b in range(B):
        for t in range(T):
            avg[b, t * B + b] = 1.0 / T
    return avg


# ----------------------------------------------------------------------------
# Deterministic synthetic parameters (structural stand-in for pretrained weights).
# ----------------------------------------------------------------------------
def init_params():
    n = jnp.arange(WIN, dtype=jnp.float32)
    f = jnp.arange(F, dtype=jnp.float32)[:, None]
    ang = 2.0 * jnp.pi * f * n[None, :] / WIN
    cos_basis = jnp.cos(ang) / WIN                      # (F, WIN)
    sin_basis = -jnp.sin(ang) / WIN                     # (F, WIN)
    filt = jnp.full((1, K), 1.0 / K, jnp.float32)       # adaptive-norm smoothing filter

    ks = jax.random.split(jax.random.PRNGKey(42), 11)
    w1 = jax.random.normal(ks[0], (C1, 2 * F), jnp.float32) * 0.2
    b1 = jax.random.normal(ks[1], (C1, 1), jnp.float32) * 0.05
    w2 = jax.random.normal(ks[2], (C2, C1), jnp.float32) * 0.2
    b2 = jax.random.normal(ks[3], (C2, 1), jnp.float32) * 0.05
    w3 = jax.random.normal(ks[4], (C3, C2), jnp.float32) * 0.2
    b3 = jax.random.normal(ks[5], (C3, 1), jnp.float32) * 0.05
    wih = jax.random.normal(ks[6], (C3, 4 * H), jnp.float32) * 0.1
    whh = jax.random.normal(ks[7], (H, 4 * H), jnp.float32) * 0.1
    bg = jax.random.normal(ks[8], (1, 4 * H), jnp.float32) * 0.05
    wout = jax.random.normal(ks[9], (H, 1), jnp.float32) * 0.2
    bout = jax.random.normal(ks[10], (1, 1), jnp.float32) * 0.05
    return dict(cos=cos_basis, sin=sin_basis, filt=filt,
                w1=w1, b1=b1, w2=w2, b2=b2, w3=w3, b3=b3,
                wih=wih, whh=whh, bg=bg, wout=wout, bout=bout)


def build_const_slab(params):
    """Pack every constant into one (256, 128) f32 slab (single kernel operand)."""
    slab = np.zeros((SLAB_ROWS, LANES), np.float32)

    def put(r0, arr):
        a = np.asarray(arr, np.float32)
        slab[r0:r0 + a.shape[0], 0:a.shape[1]] = a

    cos_t = np.asarray(params["cos"]).T                  # (WIN, F)
    sin_t = np.asarray(params["sin"]).T                  # (WIN, F)
    put(R_CS, np.concatenate([cos_t, sin_t], axis=1))    # fused STFT basis
    put(R_SMAT, _adanorm_matrix(params["filt"]))
    put(R_W1, np.asarray(params["w1"]).T)                # (2F, C1)
    put(R_W2, np.asarray(params["w2"]).T)                # (C1, C2)
    put(R_W3, np.asarray(params["w3"]).T)                # (C2, C3)

    # Pre-scale the g-gate (cell-candidate) columns by 2 so the kernel can use a single
    # full-vreg sigmoid per step:  tanh(z) == 2*sigmoid(2z) - 1.
    wih = np.asarray(params["wih"]).copy()
    whh = np.asarray(params["whh"]).copy()
    bg = np.asarray(params["bg"]).copy()
    wih[:, 2 * H:3 * H] *= 2.0
    whh[:, 2 * H:3 * H] *= 2.0
    bg[:, 2 * H:3 * H] *= 2.0
    put(R_WIH, wih)
    put(R_WHH, whh)
    put(R_WOUT, np.asarray(params["wout"]))
    put(R_AVG, _time_avg_matrix())
    put(R_BIAS + 0, np.asarray(params["b1"]).reshape(1, C1))
    put(R_BIAS + 1, np.asarray(params["b2"]).reshape(1, C2))
    put(R_BIAS + 2, np.asarray(params["b3"]).reshape(1, C3))
    put(R_BIAS + 3, bg.reshape(1, 4 * H))
    put(R_BIAS + 4, np.asarray(params["bout"]).reshape(1, 1))
    return jnp.asarray(slab)


# ----------------------------------------------------------------------------
# Full forward pass (mirrors MyModule.forward): one pallas_call, 4 inputs, 1 output.
# ----------------------------------------------------------------------------
def forward(slab, x, h, c):
    vmem = pl.BlockSpec(memory_space=pltpu.MemorySpace.VMEM)
    packed = pl.pallas_call(
        _fused_kernel,
        out_shape=jax.ShapeDtypeStruct((B, LANES), jnp.float32),
        in_specs=[vmem, vmem, vmem, vmem],
        out_specs=vmem,
    )(x, slab, h, c)
    h_out = packed[:, 0:H]
    c_out = packed[:, H:2 * H]
    out = packed[:, 2 * H:2 * H + 1]
    return out, h_out, c_out


# ----------------------------------------------------------------------------
# Pure-JAX reference (direct transcription of the torch module with the same
# synthetic weights) used to validate the fused/folded kernel.
# ----------------------------------------------------------------------------
def reference_forward(params, x, h, c):
    idx = np.arange(T)[:, None] * HOP + np.arange(WIN)[None, :]      # (T, WIN)
    frames = x[:, idx]                                               # (B, T, WIN)
    real = jnp.einsum("btw,fw->bft", frames, params["cos"])
    imag = jnp.einsum("btw,fw->bft", frames, params["sin"])
    spect = jnp.sqrt(real * real + imag * imag + 1e-9)               # (B, F, T)

    s = jnp.log1p(spect) + 13.86294
    mean = jnp.mean(s, axis=1, keepdims=True)                        # (B, 1, T)
    left = jnp.flip(mean[:, :, 1:1 + PAD], axis=-1)
    right = jnp.flip(mean[:, :, -1 - PAD:-1], axis=-1)
    meanp = jnp.concatenate([left, mean, right], axis=-1)            # (B, 1, T+2P)
    filt = params["filt"].reshape(-1)
    conv = jnp.stack([jnp.sum(meanp[:, 0, j:j + K] * filt, axis=-1)
                      for j in range(T)], axis=-1)                   # (B, T)
    mean_mean = jnp.mean(conv, axis=-1)                              # (B,)
    norm = s - mean_mean[:, None, None]                              # (B, F, T)

    x1 = jnp.concatenate([spect, norm], axis=1)                      # (B, 2F, T)
    h1 = jnp.maximum(jnp.einsum("of,bft->bot", params["w1"], x1) + params["b1"][None], 0.0)
    h2 = jnp.maximum(jnp.einsum("oc,bct->bot", params["w2"], h1) + params["b2"][None], 0.0)
    h3 = jnp.maximum(jnp.einsum("oc,bct->bot", params["w3"], h2) + params["b3"][None], 0.0)

    ys = []
    for t in range(T):
        xt = h3[:, :, t]                                             # (B, C3)
        g = xt @ params["wih"] + h @ params["whh"] + params["bg"]    # (B, 4H)
        i_g = _sig(g[:, 0:H])
        f_g = _sig(g[:, H:2 * H])
        g_g = jnp.tanh(g[:, 2 * H:3 * H])
        o_g = _sig(g[:, 3 * H:4 * H])
        c = f_g * c + i_g * g_g
        h = o_g * jnp.tanh(c)
        ys.append(_sig(h @ params["wout"] + params["bout"]))         # (B, 1)
    out = jnp.mean(jnp.concatenate(ys, axis=1), axis=1, keepdims=True)  # (B, 1)
    return out, h, c


if __name__ == "__main__":
    params = init_params()
    slab = build_const_slab(params)

    kx, kh, kc = jax.random.split(jax.random.PRNGKey(0), 3)
    x = jax.random.normal(kx, (B, N), jnp.float32)
    h = jax.random.normal(kh, (B, H), jnp.float32) * 0.1
    c = jax.random.normal(kc, (B, H), jnp.float32) * 0.1

    fwd = jax.jit(forward)
    out, h_out, c_out = fwd(slab, x, h, c)
    jax.block_until_ready((out, h_out, c_out))
    assert out.shape == (B, 1) and h_out.shape == (B, H) and c_out.shape == (B, H)

    ref_out, ref_h, ref_c = reference_forward(params, x, h, c)
    np.testing.assert_allclose(np.asarray(out), np.asarray(ref_out), rtol=1e-3, atol=1e-3)
    np.testing.assert_allclose(np.asarray(h_out), np.asarray(ref_h), rtol=1e-3, atol=1e-3)
    np.testing.assert_allclose(np.asarray(c_out), np.asarray(ref_c), rtol=1e-3, atol=1e-3)

    print("KERNEL_OK")
</pallas_src>

<mosaic_0001>
module attributes {stable_mosaic.version = 11 : i64} {
  func.func @_fused_kernel(%arg0: memref<2x256xf32, #tpu.memory_space<vmem>>, %arg1: memref<256x128xf32, #tpu.memory_space<vmem>>, %arg2: memref<2x32xf32, #tpu.memory_space<vmem>>, %arg3: memref<2x32xf32, #tpu.memory_space<vmem>>, %arg4: memref<2x128xf32, #tpu.memory_space<vmem>>) attributes {dimension_semantics = [], scalar_prefetch = 0 : i64, scratch_operands = 0 : i64, tpu.core_type = #tpu.core_type<tc>} {
    %c0 = arith.constant 0 : index
    %c0_0 = arith.constant 0 : index
    %0 = vector.load %arg1[%c0, %c0_0] : memref<256x128xf32, #tpu.memory_space<vmem>>, vector<32x32xf32>
    %c32 = arith.constant 32 : index
    %c0_1 = arith.constant 0 : index
    %1 = vector.load %arg1[%c32, %c0_1] : memref<256x128xf32, #tpu.memory_space<vmem>>, vector<30x30xf32>
    %c64 = arith.constant 64 : index
    %c0_2 = arith.constant 0 : index
    %2 = vector.load %arg1[%c64, %c0_2] : memref<256x128xf32, #tpu.memory_space<vmem>>, vector<32x16xf32>
    %c96 = arith.constant 96 : index
    %c0_3 = arith.constant 0 : index
    %3 = vector.load %arg1[%c96, %c0_3] : memref<256x128xf32, #tpu.memory_space<vmem>>, vector<16x32xf32>
    %c112 = arith.constant 112 : index
    %c0_4 = arith.constant 0 : index
    %4 = vector.load %arg1[%c112, %c0_4] : memref<256x128xf32, #tpu.memory_space<vmem>>, vector<32x32xf32>
    %c144 = arith.constant 144 : index
    %c0_5 = arith.constant 0 : index
    %5 = vector.load %arg1[%c144, %c0_5] : memref<256x128xf32, #tpu.memory_space<vmem>>, vector<32x128xf32>
    %c176 = arith.constant 176 : index
    %c0_6 = arith.constant 0 : index
    %6 = vector.load %arg1[%c176, %c0_6] : memref<256x128xf32, #tpu.memory_space<vmem>>, vector<32x128xf32>
    %c208 = arith.constant 208 : index
    %c0_7 = arith.constant 0 : index
    %7 = vector.load %arg1[%c208, %c0_7] : memref<256x128xf32, #tpu.memory_space<vmem>>, vector<32x1xf32>
    %c240 = arith.constant 240 : index
    %c0_8 = arith.constant 0 : index
    %8 = vector.load %arg1[%c240, %c0_8] : memref<256x128xf32, #tpu.memory_space<vmem>>, vector<2x30xf32>
    %c248 = arith.constant 248 : index
    %c0_9 = arith.constant 0 : index
    %9 = vector.load %arg1[%c248, %c0_9] : memref<256x128xf32, #tpu.memory_space<vmem>>, vector<1x16xf32>
    %c249 = arith.constant 249 : index
    %c0_10 = arith.constant 0 : index
    %10 = vector.load %arg1[%c249, %c0_10] : memref<256x128xf32, #tpu.memory_space<vmem>>, vector<1x32xf32>
    %c250 = arith.constant 250 : index
    %c0_11 = arith.constant 0 : index
    %11 = vector.load %arg1[%c250, %c0_11] : memref<256x128xf32, #tpu.memory_space<vmem>>, vector<1x32xf32>
    %c251 = arith.constant 251 : index
    %c0_12 = arith.constant 0 : index
    %12 = vector.load %arg1[%c251, %c0_12] : memref<256x128xf32, #tpu.memory_space<vmem>>, vector<1x128xf32>
    %c252 = arith.constant 252 : index
    %c0_13 = arith.constant 0 : index
    %13 = vector.load %arg1[%c252, %c0_13] : memref<256x128xf32, #tpu.memory_space<vmem>>, vector<1x1xf32>
    %c0_14 = arith.constant 0 : index
    %c0_15 = arith.constant 0 : index
    %14 = vector.load %arg0[%c0_14, %c0_15] : memref<2x256xf32, #tpu.memory_space<vmem>>, vector<2x256xf32>
    %15 = vector.extract_strided_slice %14 {offsets = [0, 0], sizes = [2, 32], strides = [1, 1]} : vector<2x256xf32> to vector<2x32xf32>
    %16 = vector.extract_strided_slice %14 {offsets = [0, 16], sizes = [2, 32], strides = [1, 1]} : vector<2x256xf32> to vector<2x32xf32>
    %17 = vector.extract_strided_slice %14 {offsets = [0, 32], sizes = [2, 32], strides = [1, 1]} : vector<2x256xf32> to vector<2x32xf32>
    %18 = vector.extract_strided_slice %14 {offsets = [0, 48], sizes = [2, 32], strides = [1, 1]} : vector<2x256xf32> to vector<2x32xf32>
    %19 = vector.extract_strided_slice %14 {offsets = [0, 64], sizes = [2, 32], strides = [1, 1]} : vector<2x256xf32> to vector<2x32xf32>
    %20 = vector.extract_strided_slice %14 {offsets = [0, 80], sizes = [2, 32], strides = [1, 1]} : vector<2x256xf32> to vector<2x32xf32>
    %21 = vector.extract_strided_slice %14 {offsets = [0, 96], sizes = [2, 32], strides = [1, 1]} : vector<2x256xf32> to vector<2x32xf32>
    %22 = vector.extract_strided_slice %14 {offsets = [0, 112], sizes = [2, 32], strides = [1, 1]} : vector<2x256xf32> to vector<2x32xf32>
    %23 = vector.extract_strided_slice %14 {offsets = [0, 128], sizes = [2, 32], strides = [1, 1]} : vector<2x256xf32> to vector<2x32xf32>
    %24 = vector.extract_strided_slice %14 {offsets = [0, 144], sizes = [2, 32], strides = [1, 1]} : vector<2x256xf32> to vector<2x32xf32>
    %25 = vector.extract_strided_slice %14 {offsets = [0, 160], sizes = [2, 32], strides = [1, 1]} : vector<2x256xf32> to vector<2x32xf32>
    %26 = vector.extract_strided_slice %14 {offsets = [0, 176], sizes = [2, 32], strides = [1, 1]} : vector<2x256xf32> to vector<2x32xf32>
    %27 = vector.extract_strided_slice %14 {offsets = [0, 192], sizes = [2, 32], strides = [1, 1]} : vector<2x256xf32> to vector<2x32xf32>
    %28 = vector.extract_strided_slice %14 {offsets = [0, 208], sizes = [2, 32], strides = [1, 1]} : vector<2x256xf32> to vector<2x32xf32>
    %29 = vector.extract_strided_slice %14 {offsets = [0, 224], sizes = [2, 32], strides = [1, 1]} : vector<2x256xf32> to vector<2x32xf32>
    %30 = tpu.concatenate %15, %16, %17, %18, %19, %20, %21, %22, %23, %24, %25, %26, %27, %28, %29 in 0 : vector<2x32xf32>, vector<2x32xf32>, vector<2x32xf32>, vector<2x32xf32>, vector<2x32xf32>, vector<2x32xf32>, vector<2x32xf32>, vector<2x32xf32>, vector<2x32xf32>, vector<2x32xf32>, vector<2x32xf32>, vector<2x32xf32>, vector<2x32xf32>, vector<2x32xf32>, vector<2x32xf32> -> vector<30x32xf32>
    %cst = arith.constant dense<0.000000e+00> : vector<30x32xf32>
    %31 = tpu.matmul %30, %0, %cst {dimension_numbers = #tpu.dot_dimension_numbers<[1], [0], [0], [1], [0, 0, 1, 1], [], []>} : vector<30x32xf32>, vector<32x32xf32>, vector<30x32xf32> -> vector<30x32xf32>
    %32 = vector.extract_strided_slice %31 {offsets = [0, 0], sizes = [30, 16], strides = [1, 1]} : vector<30x32xf32> to vector<30x16xf32>
    %33 = vector.extract_strided_slice %31 {offsets = [0, 16], sizes = [30, 16], strides = [1, 1]} : vector<30x32xf32> to vector<30x16xf32>
    %34 = arith.mulf %32, %32 : vector<30x16xf32>
    %35 = arith.mulf %33, %33 : vector<30x16xf32>
    %36 = arith.addf %34, %35 : vector<30x16xf32>
    %cst_16 = arith.constant 9.99999971E-10 : f32
    %37 = vector.broadcast %cst_16 : f32 to vector<30x16xf32>
    %38 = arith.addf %36, %37 : vector<30x16xf32>
    %39 = math.sqrt %38 : vector<30x16xf32>
    %cst_17 = arith.constant 1.000000e+00 : f32
    %40 = vector.broadcast %cst_17 : f32 to vector<30x16xf32>
    %41 = arith.addf %39, %40 : vector<30x16xf32>
    %42 = math.log %41 : vector<30x16xf32>
    %cst_18 = arith.constant 13.8629398 : f32
    %43 = vector.broadcast %cst_18 : f32 to vector<30x16xf32>
    %44 = arith.addf %42, %43 : vector<30x16xf32>
    %cst_19 = arith.constant 6.250000e-02 : f32
    %45 = vector.broadcast %cst_19 : f32 to vector<16x16xf32>
    %cst_20 = arith.constant dense<0.000000e+00> : vector<30x16xf32>
    %46 = tpu.matmul %44, %45, %cst_20 {dimension_numbers = #tpu.dot_dimension_numbers<[1], [0], [0], [1], [0, 0, 1, 1], [], []>} : vector<30x16xf32>, vector<16x16xf32>, vector<30x16xf32> -> vector<30x16xf32>
    %cst_21 = arith.constant dense<0.000000e+00> : vector<30x16xf32>
    %47 = tpu.matmul %1, %46, %cst_21 {dimension_numbers = #tpu.dot_dimension_numbers<[1], [0], [0], [1], [0, 0, 1, 1], [], []>} : vector<30x30xf32>, vector<30x16xf32>, vector<30x16xf32> -> vector<30x16xf32>
    %48 = arith.subf %44, %47 : vector<30x16xf32>
    %49 = tpu.concatenate %39, %48 in 1 : vector<30x16xf32>, vector<30x16xf32> -> vector<30x32xf32>
    %cst_22 = arith.constant dense<0.000000e+00> : vector<30x16xf32>
    %50 = tpu.matmul %49, %2, %cst_22 {dimension_numbers = #tpu.dot_dimension_numbers<[1], [0], [0], [1], [0, 0, 1, 1], [], []>} : vector<30x32xf32>, vector<32x16xf32>, vector<30x16xf32> -> vector<30x16xf32>
    %51 = vector.broadcast %9 : vector<1x16xf32> to vector<30x16xf32>
    %52 = arith.addf %50, %51 : vector<30x16xf32>
    %cst_23 = arith.constant 0.000000e+00 : f32
    %53 = vector.broadcast %cst_23 : f32 to vector<30x16xf32>
    %54 = arith.maximumf %52, %53 : vector<30x16xf32>
    %cst_24 = arith.constant dense<0.000000e+00> : vector<30x32xf32>
    %55 = tpu.matmul %54, %3, %cst_24 {dimension_numbers = #tpu.dot_dimension_numbers<[1], [0], [0], [1], [0, 0, 1, 1], [], []>} : vector<30x16xf32>, vector<16x32xf32>, vector<30x32xf32> -> vector<30x32xf32>
    %56 = vector.broadcast %10 : vector<1x32xf32> to vector<30x32xf32>
    %57 = arith.addf %55, %56 : vector<30x32xf32>
    %cst_25 = arith.constant 0.000000e+00 : f32
    %58 = vector.broadcast %cst_25 : f32 to vector<30x32xf32>
    %59 = arith.maximumf %57, %58 : vector<30x32xf32>
    %cst_26 = arith.constant dense<0.000000e+00> : vector<30x32xf32>
    %60 = tpu.matmul %59, %4, %cst_26 {dimension_numbers = #tpu.dot_dimension_numbers<[1], [0], [0], [1], [0, 0, 1, 1], [], []>} : vector<30x32xf32>, vector<32x32xf32>, vector<30x32xf32> -> vector<30x32xf32>
    %61 = vector.broadcast %11 : vector<1x32xf32> to vector<30x32xf32>
    %62 = arith.addf %60, %61 : vector<30x32xf32>
    %cst_27 = arith.constant 0.000000e+00 : f32
    %63 = vector.broadcast %cst_27 : f32 to vector<30x32xf32>
    %64 = arith.maximumf %62, %63 : vector<30x32xf32>
    %cst_28 = arith.constant dense<0.000000e+00> : vector<30x128xf32>
    %65 = tpu.matmul %64, %5, %cst_28 {dimension_numbers = #tpu.dot_dimension_numbers<[1], [0], [0], [1], [0, 0, 1, 1], [], []>} : vector<30x32xf32>, vector<32x128xf32>, vector<30x128xf32> -> vector<30x128xf32>
    %66 = vector.broadcast %12 : vector<1x128xf32> to vector<30x128xf32>
    %67 = arith.addf %65, %66 : vector<30x128xf32>
    %68 = vector.extract_strided_slice %67 {offsets = [0, 0], sizes = [2, 128], strides = [1, 1]} : vector<30x128xf32> to vector<2x128xf32>
    %69 = vector.extract_strided_slice %67 {offsets = [2, 0], sizes = [2, 128], strides = [1, 1]} : vector<30x128xf32> to vector<2x128xf32>
    %70 = vector.extract_strided_slice %67 {offsets = [4, 0], sizes = [2, 128], strides = [1, 1]} : vector<30x128xf32> to vector<2x128xf32>
    %71 = vector.extract_strided_slice %67 {offsets = [6, 0], sizes = [2, 128], strides = [1, 1]} : vector<30x128xf32> to vector<2x128xf32>
    %72 = vector.extract_strided_slice %67 {offsets = [8, 0], sizes = [2, 128], strides = [1, 1]} : vector<30x128xf32> to vector<2x128xf32>
    %73 = vector.extract_strided_slice %67 {offsets = [10, 0], sizes = [2, 128], strides = [1, 1]} : vector<30x128xf32> to vector<2x128xf32>
    %74 = vector.extract_strided_slice %67 {offsets = [12, 0], sizes = [2, 128], strides = [1, 1]} : vector<30x128xf32> to vector<2x128xf32>
    %75 = vector.extract_strided_slice %67 {offsets = [14, 0], sizes = [2, 128], strides = [1, 1]} : vector<30x128xf32> to vector<2x128xf32>
    %76 = vector.extract_strided_slice %67 {offsets = [16, 0], sizes = [2, 128], strides = [1, 1]} : vector<30x128xf32> to vector<2x128xf32>
    %77 = vector.extract_strided_slice %67 {offsets = [18, 0], sizes = [2, 128], strides = [1, 1]} : vector<30x128xf32> to vector<2x128xf32>
    %78 = vector.extract_strided_slice %67 {offsets = [20, 0], sizes = [2, 128], strides = [1, 1]} : vector<30x128xf32> to vector<2x128xf32>
    %79 = vector.extract_strided_slice %67 {offsets = [22, 0], sizes = [2, 128], strides = [1, 1]} : vector<30x128xf32> to vector<2x128xf32>
    %80 = vector.extract_strided_slice %67 {offsets = [24, 0], sizes = [2, 128], strides = [1, 1]} : vector<30x128xf32> to vector<2x128xf32>
    %81 = vector.extract_strided_slice %67 {offsets = [26, 0], sizes = [2, 128], strides = [1, 1]} : vector<30x128xf32> to vector<2x128xf32>
    %82 = vector.extract_strided_slice %67 {offsets = [28, 0], sizes = [2, 128], strides = [1, 1]} : vector<30x128xf32> to vector<2x128xf32>
    %c0_29 = arith.constant 0 : index
    %c0_30 = arith.constant 0 : index
    %83 = vector.load %arg2[%c0_29, %c0_30] : memref<2x32xf32, #tpu.memory_space<vmem>>, vector<2x32xf32>
    %c0_31 = arith.constant 0 : index
    %c0_32 = arith.constant 0 : index
    %84 = vector.load %arg3[%c0_31, %c0_32] : memref<2x32xf32, #tpu.memory_space<vmem>>, vector<2x32xf32>
    %cst_33 = arith.constant dense<0.000000e+00> : vector<2x128xf32>
    %85 = tpu.matmul %83, %6, %cst_33 {dimension_numbers = #tpu.dot_dimension_numbers<[1], [0], [0], [1], [0, 0, 1, 1], [], []>} : vector<2x32xf32>, vector<32x128xf32>, vector<2x128xf32> -> vector<2x128xf32>
    %86 = arith.addf %68, %85 : vector<2x128xf32>
    %cst_34 = arith.constant 0.000000e+00 : f32
    %87 = vector.broadcast %cst_34 : f32 to vector<2x128xf32>
    %88 = arith.subf %87, %86 : vector<2x128xf32>
    %89 = math.exp %88 : vector<2x128xf32>
    %cst_35 = arith.constant 1.000000e+00 : f32
    %90 = vector.broadcast %cst_35 : f32 to vector<2x128xf32>
    %91 = arith.addf %90, %89 : vector<2x128xf32>
    %cst_36 = arith.constant 1.000000e+00 : f32
    %92 = vector.broadcast %cst_36 : f32 to vector<2x128xf32>
    %93 = arith.divf %92, %91 : vector<2x128xf32>
    %94 = vector.extract_strided_slice %93 {offsets = [0, 0], sizes = [2, 32], strides = [1, 1]} : vector<2x128xf32> to vector<2x32xf32>
    %95 = vector.extract_strided_slice %93 {offsets = [0, 32], sizes = [2, 32], strides = [1, 1]} : vector<2x128xf32> to vector<2x32xf32>
    %96 = vector.extract_strided_slice %93 {offsets = [0, 64], sizes = [2, 32], strides = [1, 1]} : vector<2x128xf32> to vector<2x32xf32>
    %cst_37 = arith.constant 2.000000e+00 : f32
    %97 = vector.broadcast %cst_37 : f32 to vector<2x32xf32>
    %98 = arith.mulf %97, %96 : vector<2x32xf32>
    %cst_38 = arith.constant 1.000000e+00 : f32
    %99 = vector.broadcast %cst_38 : f32 to vector<2x32xf32>
    %100 = arith.subf %98, %99 : vector<2x32xf32>
    %101 = vector.extract_strided_slice %93 {offsets = [0, 96], sizes = [2, 32], strides = [1, 1]} : vector<2x128xf32> to vector<2x32xf32>
    %102 = arith.mulf %95, %84 : vector<2x32xf32>
    %103 = arith.mulf %94, %100 : vector<2x32xf32>
    %104 = arith.addf %102, %103 : vector<2x32xf32>
    %105 = math.tanh %104 : vector<2x32xf32>
    %106 = arith.mulf %101, %105 : vector<2x32xf32>
    %cst_39 = arith.constant dense<0.000000e+00> : vector<2x128xf32>
    %107 = tpu.matmul %106, %6, %cst_39 {dimension_numbers = #tpu.dot_dimension_numbers<[1], [0], [0], [1], [0, 0, 1, 1], [], []>} : vector<2x32xf32>, vector<32x128xf32>, vector<2x128xf32> -> vector<2x128xf32>
    %108 = arith.addf %69, %107 : vector<2x128xf32>
    %cst_40 = arith.constant 0.000000e+00 : f32
    %109 = vector.broadcast %cst_40 : f32 to vector<2x128xf32>
    %110 = arith.subf %109, %108 : vector<2x128xf32>
    %111 = math.exp %110 : vector<2x128xf32>
    %cst_41 = arith.constant 1.000000e+00 : f32
    %112 = vector.broadcast %cst_41 : f32 to vector<2x128xf32>
    %113 = arith.addf %112, %111 : vector<2x128xf32>
    %cst_42 = arith.constant 1.000000e+00 : f32
    %114 = vector.broadcast %cst_42 : f32 to vector<2x128xf32>
    %115 = arith.divf %114, %113 : vector<2x128xf32>
    %116 = vector.extract_strided_slice %115 {offsets = [0, 0], sizes = [2, 32], strides = [1, 1]} : vector<2x128xf32> to vector<2x32xf32>
    %117 = vector.extract_strided_slice %115 {offsets = [0, 32], sizes = [2, 32], strides = [1, 1]} : vector<2x128xf32> to vector<2x32xf32>
    %118 = vector.extract_strided_slice %115 {offsets = [0, 64], sizes = [2, 32], strides = [1, 1]} : vector<2x128xf32> to vector<2x32xf32>
    %cst_43 = arith.constant 2.000000e+00 : f32
    %119 = vector.broadcast %cst_43 : f32 to vector<2x32xf32>
    %120 = arith.mulf %119, %118 : vector<2x32xf32>
    %cst_44 = arith.constant 1.000000e+00 : f32
    %121 = vector.broadcast %cst_44 : f32 to vector<2x32xf32>
    %122 = arith.subf %120, %121 : vector<2x32xf32>
    %123 = vector.extract_strided_slice %115 {offsets = [0, 96], sizes = [2, 32], strides = [1, 1]} : vector<2x128xf32> to vector<2x32xf32>
    %124 = arith.mulf %117, %104 : vector<2x32xf32>
    %125 = arith.mulf %116, %122 : vector<2x32xf32>
    %126 = arith.addf %124, %125 : vector<2x32xf32>
    %127 = math.tanh %126 : vector<2x32xf32>
    %128 = arith.mulf %123, %127 : vector<2x32xf32>
    %cst_45 = arith.constant dense<0.000000e+00> : vector<2x128xf32>
    %129 = tpu.matmul %128, %6, %cst_45 {dimension_numbers = #tpu.dot_dimension_numbers<[1], [0], [0], [1], [0, 0, 1, 1], [], []>} : vector<2x32xf32>, vector<32x128xf32>, vector<2x128xf32> -> vector<2x128xf32>
    %130 = arith.addf %70, %129 : vector<2x128xf32>
    %cst_46 = arith.constant 0.000000e+00 : f32
    %131 = vector.broadcast %cst_46 : f32 to vector<2x128xf32>
    %132 = arith.subf %131, %130 : vector<2x128xf32>
    %133 = math.exp %132 : vector<2x128xf32>
    %cst_47 = arith.constant 1.000000e+00 : f32
    %134 = vector.broadcast %cst_47 : f32 to vector<2x128xf32>
    %135 = arith.addf %134, %133 : vector<2x128xf32>
    %cst_48 = arith.constant 1.000000e+00 : f32
    %136 = vector.broadcast %cst_48 : f32 to vector<2x128xf32>
    %137 = arith.divf %136, %135 : vector<2x128xf32>
    %138 = vector.extract_strided_slice %137 {offsets = [0, 0], sizes = [2, 32], strides = [1, 1]} : vector<2x128xf32> to vector<2x32xf32>
    %139 = vector.extract_strided_slice %137 {offsets = [0, 32], sizes = [2, 32], strides = [1, 1]} : vector<2x128xf32> to vector<2x32xf32>
    %140 = vector.extract_strided_slice %137 {offsets = [0, 64], sizes = [2, 32], strides = [1, 1]} : vector<2x128xf32> to vector<2x32xf32>
    %cst_49 = arith.constant 2.000000e+00 : f32
    %141 = vector.broadcast %cst_49 : f32 to vector<2x32xf32>
    %142 = arith.mulf %141, %140 : vector<2x32xf32>
    %cst_50 = arith.constant 1.000000e+00 : f32
    %143 = vector.broadcast %cst_50 : f32 to vector<2x32xf32>
    %144 = arith.subf %142, %143 : vector<2x32xf32>
    %145 = vector.extract_strided_slice %137 {offsets = [0, 96], sizes = [2, 32], strides = [1, 1]} : vector<2x128xf32> to vector<2x32xf32>
    %146 = arith.mulf %139, %126 : vector<2x32xf32>
    %147 = arith.mulf %138, %144 : vector<2x32xf32>
    %148 = arith.addf %146, %147 : vector<2x32xf32>
    %149 = math.tanh %148 : vector<2x32xf32>
    %150 = arith.mulf %145, %149 : vector<2x32xf32>
    %cst_51 = arith.constant dense<0.000000e+00> : vector<2x128xf32>
    %151 = tpu.matmul %150, %6, %cst_51 {dimension_numbers = #tpu.dot_dimension_numbers<[1], [0], [0], [1], [0, 0, 1, 1], [], []>} : vector<2x32xf32>, vector<32x128xf32>, vector<2x128xf32> -> vector<2x128xf32>
    %152 = arith.addf %71, %151 : vector<2x128xf32>
    %cst_52 = arith.constant 0.000000e+00 : f32
    %153 = vector.broadcast %cst_52 : f32 to vector<2x128xf32>
    %154 = arith.subf %153, %152 : vector<2x128xf32>
    %155 = math.exp %154 : vector<2x128xf32>
    %cst_53 = arith.constant 1.000000e+00 : f32
    %156 = vector.broadcast %cst_53 : f32 to vector<2x128xf32>
    %157 = arith.addf %156, %155 : vector<2x128xf32>
    %cst_54 = arith.constant 1.000000e+00 : f32
    %158 = vector.broadcast %cst_54 : f32 to vector<2x128xf32>
    %159 = arith.divf %158, %157 : vector<2x128xf32>
    %160 = vector.extract_strided_slice %159 {offsets = [0, 0], sizes = [2, 32], strides = [1, 1]} : vector<2x128xf32> to vector<2x32xf32>
    %161 = vector.extract_strided_slice %159 {offsets = [0, 32], sizes = [2, 32], strides = [1, 1]} : vector<2x128xf32> to vector<2x32xf32>
    %162 = vector.extract_strided_slice %159 {offsets = [0, 64], sizes = [2, 32], strides = [1, 1]} : vector<2x128xf32> to vector<2x32xf32>
    %cst_55 = arith.constant 2.000000e+00 : f32
    %163 = vector.broadcast %cst_55 : f32 to vector<2x32xf32>
    %164 = arith.mulf %163, %162 : vector<2x32xf32>
    %cst_56 = arith.constant 1.000000e+00 : f32
    %165 = vector.broadcast %cst_56 : f32 to vector<2x32xf32>
    %166 = arith.subf %164, %165 : vector<2x32xf32>
    %167 = vector.extract_strided_slice %159 {offsets = [0, 96], sizes = [2, 32], strides = [1, 1]} : vector<2x128xf32> to vector<2x32xf32>
    %168 = arith.mulf %161, %148 : vector<2x32xf32>
    %169 = arith.mulf %160, %166 : vector<2x32xf32>
    %170 = arith.addf %168, %169 : vector<2x32xf32>
    %171 = math.tanh %170 : vector<2x32xf32>
    %172 = arith.mulf %167, %171 : vector<2x32xf32>
    %cst_57 = arith.constant dense<0.000000e+00> : vector<2x128xf32>
    %173 = tpu.matmul %172, %6, %cst_57 {dimension_numbers = #tpu.dot_dimension_numbers<[1], [0], [0], [1], [0, 0, 1, 1], [], []>} : vector<2x32xf32>, vector<32x128xf32>, vector<2x128xf32> -> vector<2x128xf32>
    %174 = arith.addf %72, %173 : vector<2x128xf32>
    %cst_58 = arith.constant 0.000000e+00 : f32
    %175 = vector.broadcast %cst_58 : f32 to vector<2x128xf32>
    %176 = arith.subf %175, %174 : vector<2x128xf32>
    %177 = math.exp %176 : vector<2x128xf32>
    %cst_59 = arith.constant 1.000000e+00 : f32
    %178 = vector.broadcast %cst_59 : f32 to vector<2x128xf32>
    %179 = arith.addf %178, %177 : vector<2x128xf32>
    %cst_60 = arith.constant 1.000000e+00 : f32
    %180 = vector.broadcast %cst_60 : f32 to vector<2x128xf32>
    %181 = arith.divf %180, %179 : vector<2x128xf32>
    %182 = vector.extract_strided_slice %181 {offsets = [0, 0], sizes = [2, 32], strides = [1, 1]} : vector<2x128xf32> to vector<2x32xf32>
    %183 = vector.extract_strided_slice %181 {offsets = [0, 32], sizes = [2, 32], strides = [1, 1]} : vector<2x128xf32> to vector<2x32xf32>
    %184 = vector.extract_strided_slice %181 {offsets = [0, 64], sizes = [2, 32], strides = [1, 1]} : vector<2x128xf32> to vector<2x32xf32>
    %cst_61 = arith.constant 2.000000e+00 : f32
    %185 = vector.broadcast %cst_61 : f32 to vector<2x32xf32>
    %186 = arith.mulf %185, %184 : vector<2x32xf32>
    %cst_62 = arith.constant 1.000000e+00 : f32
    %187 = vector.broadcast %cst_62 : f32 to vector<2x32xf32>
    %188 = arith.subf %186, %187 : vector<2x32xf32>
    %189 = vector.extract_strided_slice %181 {offsets = [0, 96], sizes = [2, 32], strides = [1, 1]} : vector<2x128xf32> to vector<2x32xf32>
    %190 = arith.mulf %183, %170 : vector<2x32xf32>
    %191 = arith.mulf %182, %188 : vector<2x32xf32>
    %192 = arith.addf %190, %191 : vector<2x32xf32>
    %193 = math.tanh %192 : vector<2x32xf32>
    %194 = arith.mulf %189, %193 : vector<2x32xf32>
    %cst_63 = arith.constant dense<0.000000e+00> : vector<2x128xf32>
    %195 = tpu.matmul %194, %6, %cst_63 {dimension_numbers = #tpu.dot_dimension_numbers<[1], [0], [0], [1], [0, 0, 1, 1], [], []>} : vector<2x32xf32>, vector<32x128xf32>, vector<2x128xf32> -> vector<2x128xf32>
    %196 = arith.addf %73, %195 : vector<2x128xf32>
    %cst_64 = arith.constant 0.000000e+00 : f32
    %197 = vector.broadcast %cst_64 : f32 to vector<2x128xf32>
    %198 = arith.subf %197, %196 : vector<2x128xf32>
    %199 = math.exp %198 : vector<2x128xf32>
    %cst_65 = arith.constant 1.000000e+00 : f32
    %200 = vector.broadcast %cst_65 : f32 to vector<2x128xf32>
    %201 = arith.addf %200, %199 : vector<2x128xf32>
    %cst_66 = arith.constant 1.000000e+00 : f32
    %202 = vector.broadcast %cst_66 : f32 to vector<2x128xf32>
    %203 = arith.divf %202, %201 : vector<2x128xf32>
    %204 = vector.extract_strided_slice %203 {offsets = [0, 0], sizes = [2, 32], strides = [1, 1]} : vector<2x128xf32> to vector<2x32xf32>
    %205 = vector.extract_strided_slice %203 {offsets = [0, 32], sizes = [2, 32], strides = [1, 1]} : vector<2x128xf32> to vector<2x32xf32>
    %206 = vector.extract_strided_slice %203 {offsets = [0, 64], sizes = [2, 32], strides = [1, 1]} : vector<2x128xf32> to vector<2x32xf32>
    %cst_67 = arith.constant 2.000000e+00 : f32
    %207 = vector.broadcast %cst_67 : f32 to vector<2x32xf32>
    %208 = arith.mulf %207, %206 : vector<2x32xf32>
    %cst_68 = arith.constant 1.000000e+00 : f32
    %209 = vector.broadcast %cst_68 : f32 to vector<2x32xf32>
    %210 = arith.subf %208, %209 : vector<2x32xf32>
    %211 = vector.extract_strided_slice %203 {offsets = [0, 96], sizes = [2, 32], strides = [1, 1]} : vector<2x128xf32> to vector<2x32xf32>
    %212 = arith.mulf %205, %192 : vector<2x32xf32>
    %213 = arith.mulf %204, %210 : vector<2x32xf32>
    %214 = arith.addf %212, %213 : vector<2x32xf32>
    %215 = math.tanh %214 : vector<2x32xf32>
    %216 = arith.mulf %211, %215 : vector<2x32xf32>
    %cst_69 = arith.constant dense<0.000000e+00> : vector<2x128xf32>
    %217 = tpu.matmul %216, %6, %cst_69 {dimension_numbers = #tpu.dot_dimension_numbers<[1], [0], [0], [1], [0, 0, 1, 1], [], []>} : vector<2x32xf32>, vector<32x128xf32>, vector<2x128xf32> -> vector<2x128xf32>
    %218 = arith.addf %74, %217 : vector<2x128xf32>
    %cst_70 = arith.constant 0.000000e+00 : f32
    %219 = vector.broadcast %cst_70 : f32 to vector<2x128xf32>
    %220 = arith.subf %219, %218 : vector<2x128xf32>
    %221 = math.exp %220 : vector<2x128xf32>
    %cst_71 = arith.constant 1.000000e+00 : f32
    %222 = vector.broadcast %cst_71 : f32 to vector<2x128xf32>
    %223 = arith.addf %222, %221 : vector<2x128xf32>
    %cst_72 = arith.constant 1.000000e+00 : f32
    %224 = vector.broadcast %cst_72 : f32 to vector<2x128xf32>
    %225 = arith.divf %224, %223 : vector<2x128xf32>
    %226 = vector.extract_strided_slice %225 {offsets = [0, 0], sizes = [2, 32], strides = [1, 1]} : vector<2x128xf32> to vector<2x32xf32>
    %227 = vector.extract_strided_slice %225 {offsets = [0, 32], sizes = [2, 32], strides = [1, 1]} : vector<2x128xf32> to vector<2x32xf32>
    %228 = vector.extract_strided_slice %225 {offsets = [0, 64], sizes = [2, 32], strides = [1, 1]} : vector<2x128xf32> to vector<2x32xf32>
    %cst_73 = arith.constant 2.000000e+00 : f32
    %229 = vector.broadcast %cst_73 : f32 to vector<2x32xf32>
    %230 = arith.mulf %229, %228 : vector<2x32xf32>
    %cst_74 = arith.constant 1.000000e+00 : f32
    %231 = vector.broadcast %cst_74 : f32 to vector<2x32xf32>
    %232 = arith.subf %230, %231 : vector<2x32xf32>
    %233 = vector.extract_strided_slice %225 {offsets = [0, 96], sizes = [2, 32], strides = [1, 1]} : vector<2x128xf32> to vector<2x32xf32>
    %234 = arith.mulf %227, %214 : vector<2x32xf32>
    %235 = arith.mulf %226, %232 : vector<2x32xf32>
    %236 = arith.addf %234, %235 : vector<2x32xf32>
    %237 = math.tanh %236 : vector<2x32xf32>
    %238 = arith.mulf %233, %237 : vector<2x32xf32>
    %cst_75 = arith.constant dense<0.000000e+00> : vector<2x128xf32>
    %239 = tpu.matmul %238, %6, %cst_75 {dimension_numbers = #tpu.dot_dimension_numbers<[1], [0], [0], [1], [0, 0, 1, 1], [], []>} : vector<2x32xf32>, vector<32x128xf32>, vector<2x128xf32> -> vector<2x128xf32>
    %240 = arith.addf %75, %239 : vector<2x128xf32>
    %cst_76 = arith.constant 0.000000e+00 : f32
    %241 = vector.broadcast %cst_76 : f32 to vector<2x128xf32>
    %242 = arith.subf %241, %240 : vector<2x128xf32>
    %243 = math.exp %242 : vector<2x128xf32>
    %cst_77 = arith.constant 1.000000e+00 : f32
    %244 = vector.broadcast %cst_77 : f32 to vector<2x128xf32>
    %245 = arith.addf %244, %243 : vector<2x128xf32>
    %cst_78 = arith.constant 1.000000e+00 : f32
    %246 = vector.broadcast %cst_78 : f32 to vector<2x128xf32>
    %247 = arith.divf %246, %245 : vector<2x128xf32>
    %248 = vector.extract_strided_slice %247 {offsets = [0, 0], sizes = [2, 32], strides = [1, 1]} : vector<2x128xf32> to vector<2x32xf32>
    %249 = vector.extract_strided_slice %247 {offsets = [0, 32], sizes = [2, 32], strides = [1, 1]} : vector<2x128xf32> to vector<2x32xf32>
    %250 = vector.extract_strided_slice %247 {offsets = [0, 64], sizes = [2, 32], strides = [1, 1]} : vector<2x128xf32> to vector<2x32xf32>
    %cst_79 = arith.constant 2.000000e+00 : f32
    %251 = vector.broadcast %cst_79 : f32 to vector<2x32xf32>
    %252 = arith.mulf %251, %250 : vector<2x32xf32>
    %cst_80 = arith.constant 1.000000e+00 : f32
    %253 = vector.broadcast %cst_80 : f32 to vector<2x32xf32>
    %254 = arith.subf %252, %253 : vector<2x32xf32>
    %255 = vector.extract_strided_slice %247 {offsets = [0, 96], sizes = [2, 32], strides = [1, 1]} : vector<2x128xf32> to vector<2x32xf32>
    %256 = arith.mulf %249, %236 : vector<2x32xf32>
    %257 = arith.mulf %248, %254 : vector<2x32xf32>
    %258 = arith.addf %256, %257 : vector<2x32xf32>
    %259 = math.tanh %258 : vector<2x32xf32>
    %260 = arith.mulf %255, %259 : vector<2x32xf32>
    %cst_81 = arith.constant dense<0.000000e+00> : vector<2x128xf32>
    %261 = tpu.matmul %260, %6, %cst_81 {dimension_numbers = #tpu.dot_dimension_numbers<[1], [0], [0], [1], [0, 0, 1, 1], [], []>} : vector<2x32xf32>, vector<32x128xf32>, vector<2x128xf32> -> vector<2x128xf32>
    %262 = arith.addf %76, %261 : vector<2x128xf32>
    %cst_82 = arith.constant 0.000000e+00 : f32
    %263 = vector.broadcast %cst_82 : f32 to vector<2x128xf32>
    %264 = arith.subf %263, %262 : vector<2x128xf32>
    %265 = math.exp %264 : vector<2x128xf32>
    %cst_83 = arith.constant 1.000000e+00 : f32
    %266 = vector.broadcast %cst_83 : f32 to vector<2x128xf32>
    %267 = arith.addf %266, %265 : vector<2x128xf32>
    %cst_84 = arith.constant 1.000000e+00 : f32
    %268 = vector.broadcast %cst_84 : f32 to vector<2x128xf32>
    %269 = arith.divf %268, %267 : vector<2x128xf32>
    %270 = vector.extract_strided_slice %269 {offsets = [0, 0], sizes = [2, 32], strides = [1, 1]} : vector<2x128xf32> to vector<2x32xf32>
    %271 = vector.extract_strided_slice %269 {offsets = [0, 32], sizes = [2, 32], strides = [1, 1]} : vector<2x128xf32> to vector<2x32xf32>
    %272 = vector.extract_strided_slice %269 {offsets = [0, 64], sizes = [2, 32], strides = [1, 1]} : vector<2x128xf32> to vector<2x32xf32>
    %cst_85 = arith.constant 2.000000e+00 : f32
    %273 = vector.broadcast %cst_85 : f32 to vector<2x32xf32>
    %274 = arith.mulf %273, %272 : vector<2x32xf32>
    %cst_86 = arith.constant 1.000000e+00 : f32
    %275 = vector.broadcast %cst_86 : f32 to vector<2x32xf32>
    %276 = arith.subf %274, %275 : vector<2x32xf32>
    %277 = vector.extract_strided_slice %269 {offsets = [0, 96], sizes = [2, 32], strides = [1, 1]} : vector<2x128xf32> to vector<2x32xf32>
    %278 = arith.mulf %271, %258 : vector<2x32xf32>
    %279 = arith.mulf %270, %276 : vector<2x32xf32>
    %280 = arith.addf %278, %279 : vector<2x32xf32>
    %281 = math.tanh %280 : vector<2x32xf32>
    %282 = arith.mulf %277, %281 : vector<2x32xf32>
    %cst_87 = arith.constant dense<0.000000e+00> : vector<2x128xf32>
    %283 = tpu.matmul %282, %6, %cst_87 {dimension_numbers = #tpu.dot_dimension_numbers<[1], [0], [0], [1], [0, 0, 1, 1], [], []>} : vector<2x32xf32>, vector<32x128xf32>, vector<2x128xf32> -> vector<2x128xf32>
    %284 = arith.addf %77, %283 : vector<2x128xf32>
    %cst_88 = arith.constant 0.000000e+00 : f32
    %285 = vector.broadcast %cst_88 : f32 to vector<2x128xf32>
    %286 = arith.subf %285, %284 : vector<2x128xf32>
    %287 = math.exp %286 : vector<2x128xf32>
    %cst_89 = arith.constant 1.000000e+00 : f32
    %288 = vector.broadcast %cst_89 : f32 to vector<2x128xf32>
    %289 = arith.addf %288, %287 : vector<2x128xf32>
    %cst_90 = arith.constant 1.000000e+00 : f32
    %290 = vector.broadcast %cst_90 : f32 to vector<2x128xf32>
    %291 = arith.divf %290, %289 : vector<2x128xf32>
    %292 = vector.extract_strided_slice %291 {offsets = [0, 0], sizes = [2, 32], strides = [1, 1]} : vector<2x128xf32> to vector<2x32xf32>
    %293 = vector.extract_strided_slice %291 {offsets = [0, 32], sizes = [2, 32], strides = [1, 1]} : vector<2x128xf32> to vector<2x32xf32>
    %294 = vector.extract_strided_slice %291 {offsets = [0, 64], sizes = [2, 32], strides = [1, 1]} : vector<2x128xf32> to vector<2x32xf32>
    %cst_91 = arith.constant 2.000000e+00 : f32
    %295 = vector.broadcast %cst_91 : f32 to vector<2x32xf32>
    %296 = arith.mulf %295, %294 : vector<2x32xf32>
    %cst_92 = arith.constant 1.000000e+00 : f32
    %297 = vector.broadcast %cst_92 : f32 to vector<2x32xf32>
    %298 = arith.subf %296, %297 : vector<2x32xf32>
    %299 = vector.extract_strided_slice %291 {offsets = [0, 96], sizes = [2, 32], strides = [1, 1]} : vector<2x128xf32> to vector<2x32xf32>
    %300 = arith.mulf %293, %280 : vector<2x32xf32>
    %301 = arith.mulf %292, %298 : vector<2x32xf32>
    %302 = arith.addf %300, %301 : vector<2x32xf32>
    %303 = math.tanh %302 : vector<2x32xf32>
    %304 = arith.mulf %299, %303 : vector<2x32xf32>
    %cst_93 = arith.constant dense<0.000000e+00> : vector<2x128xf32>
    %305 = tpu.matmul %304, %6, %cst_93 {dimension_numbers = #tpu.dot_dimension_numbers<[1], [0], [0], [1], [0, 0, 1, 1], [], []>} : vector<2x32xf32>, vector<32x128xf32>, vector<2x128xf32> -> vector<2x128xf32>
    %306 = arith.addf %78, %305 : vector<2x128xf32>
    %cst_94 = arith.constant 0.000000e+00 : f32
    %307 = vector.broadcast %cst_94 : f32 to vector<2x128xf32>
    %308 = arith.subf %307, %306 : vector<2x128xf32>
    %309 = math.exp %308 : vector<2x128xf32>
    %cst_95 = arith.constant 1.000000e+00 : f32
    %310 = vector.broadcast %cst_95 : f32 to vector<2x128xf32>
    %311 = arith.addf %310, %309 : vector<2x128xf32>
    %cst_96 = arith.constant 1.000000e+00 : f32
    %312 = vector.broadcast %cst_96 : f32 to vector<2x128xf32>
    %313 = arith.divf %312, %311 : vector<2x128xf32>
    %314 = vector.extract_strided_slice %313 {offsets = [0, 0], sizes = [2, 32], strides = [1, 1]} : vector<2x128xf32> to vector<2x32xf32>
    %315 = vector.extract_strided_slice %313 {offsets = [0, 32], sizes = [2, 32], strides = [1, 1]} : vector<2x128xf32> to vector<2x32xf32>
    %316 = vector.extract_strided_slice %313 {offsets = [0, 64], sizes = [2, 32], strides = [1, 1]} : vector<2x128xf32> to vector<2x32xf32>
    %cst_97 = arith.constant 2.000000e+00 : f32
    %317 = vector.broadcast %cst_97 : f32 to vector<2x32xf32>
    %318 = arith.mulf %317, %316 : vector<2x32xf32>
    %cst_98 = arith.constant 1.000000e+00 : f32
    %319 = vector.broadcast %cst_98 : f32 to vector<2x32xf32>
    %320 = arith.subf %318, %319 : vector<2x32xf32>
    %321 = vector.extract_strided_slice %313 {offsets = [0, 96], sizes = [2, 32], strides = [1, 1]} : vector<2x128xf32> to vector<2x32xf32>
    %322 = arith.mulf %315, %302 : vector<2x32xf32>
    %323 = arith.mulf %314, %320 : vector<2x32xf32>
    %324 = arith.addf %322, %323 : vector<2x32xf32>
    %325 = math.tanh %324 : vector<2x32xf32>
    %326 = arith.mulf %321, %325 : vector<2x32xf32>
    %cst_99 = arith.constant dense<0.000000e+00> : vector<2x128xf32>
    %327 = tpu.matmul %326, %6, %cst_99 {dimension_numbers = #tpu.dot_dimension_numbers<[1], [0], [0], [1], [0, 0, 1, 1], [], []>} : vector<2x32xf32>, vector<32x128xf32>, vector<2x128xf32> -> vector<2x128xf32>
    %328 = arith.addf %79, %327 : vector<2x128xf32>
    %cst_100 = arith.constant 0.000000e+00 : f32
    %329 = vector.broadcast %cst_100 : f32 to vector<2x128xf32>
    %330 = arith.subf %329, %328 : vector<2x128xf32>
    %331 = math.exp %330 : vector<2x128xf32>
    %cst_101 = arith.constant 1.000000e+00 : f32
    %332 = vector.broadcast %cst_101 : f32 to vector<2x128xf32>
    %333 = arith.addf %332, %331 : vector<2x128xf32>
    %cst_102 = arith.constant 1.000000e+00 : f32
    %334 = vector.broadcast %cst_102 : f32 to vector<2x128xf32>
    %335 = arith.divf %334, %333 : vector<2x128xf32>
    %336 = vector.extract_strided_slice %335 {offsets = [0, 0], sizes = [2, 32], strides = [1, 1]} : vector<2x128xf32> to vector<2x32xf32>
    %337 = vector.extract_strided_slice %335 {offsets = [0, 32], sizes = [2, 32], strides = [1, 1]} : vector<2x128xf32> to vector<2x32xf32>
    %338 = vector.extract_strided_slice %335 {offsets = [0, 64], sizes = [2, 32], strides = [1, 1]} : vector<2x128xf32> to vector<2x32xf32>
    %cst_103 = arith.constant 2.000000e+00 : f32
    %339 = vector.broadcast %cst_103 : f32 to vector<2x32xf32>
    %340 = arith.mulf %339, %338 : vector<2x32xf32>
    %cst_104 = arith.constant 1.000000e+00 : f32
    %341 = vector.broadcast %cst_104 : f32 to vector<2x32xf32>
    %342 = arith.subf %340, %341 : vector<2x32xf32>
    %343 = vector.extract_strided_slice %335 {offsets = [0, 96], sizes = [2, 32], strides = [1, 1]} : vector<2x128xf32> to vector<2x32xf32>
    %344 = arith.mulf %337, %324 : vector<2x32xf32>
    %345 = arith.mulf %336, %342 : vector<2x32xf32>
    %346 = arith.addf %344, %345 : vector<2x32xf32>
    %347 = math.tanh %346 : vector<2x32xf32>
    %348 = arith.mulf %343, %347 : vector<2x32xf32>
    %cst_105 = arith.constant dense<0.000000e+00> : vector<2x128xf32>
    %349 = tpu.matmul %348, %6, %cst_105 {dimension_numbers = #tpu.dot_dimension_numbers<[1], [0], [0], [1], [0, 0, 1, 1], [], []>} : vector<2x32xf32>, vector<32x128xf32>, vector<2x128xf32> -> vector<2x128xf32>
    %350 = arith.addf %80, %349 : vector<2x128xf32>
    %cst_106 = arith.constant 0.000000e+00 : f32
    %351 = vector.broadcast %cst_106 : f32 to vector<2x128xf32>
    %352 = arith.subf %351, %350 : vector<2x128xf32>
    %353 = math.exp %352 : vector<2x128xf32>
    %cst_107 = arith.constant 1.000000e+00 : f32
    %354 = vector.broadcast %cst_107 : f32 to vector<2x128xf32>
    %355 = arith.addf %354, %353 : vector<2x128xf32>
    %cst_108 = arith.constant 1.000000e+00 : f32
    %356 = vector.broadcast %cst_108 : f32 to vector<2x128xf32>
    %357 = arith.divf %356, %355 : vector<2x128xf32>
    %358 = vector.extract_strided_slice %357 {offsets = [0, 0], sizes = [2, 32], strides = [1, 1]} : vector<2x128xf32> to vector<2x32xf32>
    %359 = vector.extract_strided_slice %357 {offsets = [0, 32], sizes = [2, 32], strides = [1, 1]} : vector<2x128xf32> to vector<2x32xf32>
    %360 = vector.extract_strided_slice %357 {offsets = [0, 64], sizes = [2, 32], strides = [1, 1]} : vector<2x128xf32> to vector<2x32xf32>
    %cst_109 = arith.constant 2.000000e+00 : f32
    %361 = vector.broadcast %cst_109 : f32 to vector<2x32xf32>
    %362 = arith.mulf %361, %360 : vector<2x32xf32>
    %cst_110 = arith.constant 1.000000e+00 : f32
    %363 = vector.broadcast %cst_110 : f32 to vector<2x32xf32>
    %364 = arith.subf %362, %363 : vector<2x32xf32>
    %365 = vector.extract_strided_slice %357 {offsets = [0, 96], sizes = [2, 32], strides = [1, 1]} : vector<2x128xf32> to vector<2x32xf32>
    %366 = arith.mulf %359, %346 : vector<2x32xf32>
    %367 = arith.mulf %358, %364 : vector<2x32xf32>
    %368 = arith.addf %366, %367 : vector<2x32xf32>
    %369 = math.tanh %368 : vector<2x32xf32>
    %370 = arith.mulf %365, %369 : vector<2x32xf32>
    %cst_111 = arith.constant dense<0.000000e+00> : vector<2x128xf32>
    %371 = tpu.matmul %370, %6, %cst_111 {dimension_numbers = #tpu.dot_dimension_numbers<[1], [0], [0], [1], [0, 0, 1, 1], [], []>} : vector<2x32xf32>, vector<32x128xf32>, vector<2x128xf32> -> vector<2x128xf32>
    %372 = arith.addf %81, %371 : vector<2x128xf32>
    %cst_112 = arith.constant 0.000000e+00 : f32
    %373 = vector.broadcast %cst_112 : f32 to vector<2x128xf32>
    %374 = arith.subf %373, %372 : vector<2x128xf32>
    %375 = math.exp %374 : vector<2x128xf32>
    %cst_113 = arith.constant 1.000000e+00 : f32
    %376 = vector.broadcast %cst_113 : f32 to vector<2x128xf32>
    %377 = arith.addf %376, %375 : vector<2x128xf32>
    %cst_114 = arith.constant 1.000000e+00 : f32
    %378 = vector.broadcast %cst_114 : f32 to vector<2x128xf32>
    %379 = arith.divf %378, %377 : vector<2x128xf32>
    %380 = vector.extract_strided_slice %379 {offsets = [0, 0], sizes = [2, 32], strides = [1, 1]} : vector<2x128xf32> to vector<2x32xf32>
    %381 = vector.extract_strided_slice %379 {offsets = [0, 32], sizes = [2, 32], strides = [1, 1]} : vector<2x128xf32> to vector<2x32xf32>
    %382 = vector.extract_strided_slice %379 {offsets = [0, 64], sizes = [2, 32], strides = [1, 1]} : vector<2x128xf32> to vector<2x32xf32>
    %cst_115 = arith.constant 2.000000e+00 : f32
    %383 = vector.broadcast %cst_115 : f32 to vector<2x32xf32>
    %384 = arith.mulf %383, %382 : vector<2x32xf32>
    %cst_116 = arith.constant 1.000000e+00 : f32
    %385 = vector.broadcast %cst_116 : f32 to vector<2x32xf32>
    %386 = arith.subf %384, %385 : vector<2x32xf32>
    %387 = vector.extract_strided_slice %379 {offsets = [0, 96], sizes = [2, 32], strides = [1, 1]} : vector<2x128xf32> to vector<2x32xf32>
    %388 = arith.mulf %381, %368 : vector<2x32xf32>
    %389 = arith.mulf %380, %386 : vector<2x32xf32>
    %390 = arith.addf %388, %389 : vector<2x32xf32>
    %391 = math.tanh %390 : vector<2x32xf32>
    %392 = arith.mulf %387, %391 : vector<2x32xf32>
    %cst_117 = arith.constant dense<0.000000e+00> : vector<2x128xf32>
    %393 = tpu.matmul %392, %6, %cst_117 {dimension_numbers = #tpu.dot_dimension_numbers<[1], [0], [0], [1], [0, 0, 1, 1], [], []>} : vector<2x32xf32>, vector<32x128xf32>, vector<2x128xf32> -> vector<2x128xf32>
    %394 = arith.addf %82, %393 : vector<2x128xf32>
    %cst_118 = arith.constant 0.000000e+00 : f32
    %395 = vector.broadcast %cst_118 : f32 to vector<2x128xf32>
    %396 = arith.subf %395, %394 : vector<2x128xf32>
    %397 = math.exp %396 : vector<2x128xf32>
    %cst_119 = arith.constant 1.000000e+00 : f32
    %398 = vector.broadcast %cst_119 : f32 to vector<2x128xf32>
    %399 = arith.addf %398, %397 : vector<2x128xf32>
    %cst_120 = arith.constant 1.000000e+00 : f32
    %400 = vector.broadcast %cst_120 : f32 to vector<2x128xf32>
    %401 = arith.divf %400, %399 : vector<2x128xf32>
    %402 = vector.extract_strided_slice %401 {offsets = [0, 0], sizes = [2, 32], strides = [1, 1]} : vector<2x128xf32> to vector<2x32xf32>
    %403 = vector.extract_strided_slice %401 {offsets = [0, 32], sizes = [2, 32], strides = [1, 1]} : vector<2x128xf32> to vector<2x32xf32>
    %404 = vector.extract_strided_slice %401 {offsets = [0, 64], sizes = [2, 32], strides = [1, 1]} : vector<2x128xf32> to vector<2x32xf32>
    %cst_121 = arith.constant 2.000000e+00 : f32
    %405 = vector.broadcast %cst_121 : f32 to vector<2x32xf32>
    %406 = arith.mulf %405, %404 : vector<2x32xf32>
    %cst_122 = arith.constant 1.000000e+00 : f32
    %407 = vector.broadcast %cst_122 : f32 to vector<2x32xf32>
    %408 = arith.subf %406, %407 : vector<2x32xf32>
    %409 = vector.extract_strided_slice %401 {offsets = [0, 96], sizes = [2, 32], strides = [1, 1]} : vector<2x128xf32> to vector<2x32xf32>
    %410 = arith.mulf %403, %390 : vector<2x32xf32>
    %411 = arith.mulf %402, %408 : vector<2x32xf32>
    %412 = arith.addf %410, %411 : vector<2x32xf32>
    %413 = math.tanh %412 : vector<2x32xf32>
    %414 = arith.mulf %409, %413 : vector<2x32xf32>
    %415 = tpu.concatenate %106, %128, %150, %172, %194, %216, %238, %260, %282, %304, %326, %348, %370, %392, %414 in 0 : vector<2x32xf32>, vector<2x32xf32>, vector<2x32xf32>, vector<2x32xf32>, vector<2x32xf32>, vector<2x32xf32>, vector<2x32xf32>, vector<2x32xf32>, vector<2x32xf32>, vector<2x32xf32>, vector<2x32xf32>, vector<2x32xf32>, vector<2x32xf32>, vector<2x32xf32>, vector<2x32xf32> -> vector<30x32xf32>
    %cst_123 = arith.constant dense<0.000000e+00> : vector<30x1xf32>
    %416 = tpu.matmul %415, %7, %cst_123 {dimension_numbers = #tpu.dot_dimension_numbers<[1], [0], [0], [1], [0, 0, 1, 1], [], []>} : vector<30x32xf32>, vector<32x1xf32>, vector<30x1xf32> -> vector<30x1xf32>
    %417 = vector.broadcast %13 : vector<1x1xf32> to vector<30x1xf32>
    %418 = arith.addf %416, %417 : vector<30x1xf32>
    %cst_124 = arith.constant 0.000000e+00 : f32
    %419 = vector.broadcast %cst_124 : f32 to vector<30x1xf32>
    %420 = arith.subf %419, %418 : vector<30x1xf32>
    %421 = math.exp %420 : vector<30x1xf32>
    %cst_125 = arith.constant 1.000000e+00 : f32
    %422 = vector.broadcast %cst_125 : f32 to vector<30x1xf32>
    %423 = arith.addf %422, %421 : vector<30x1xf32>
    %cst_126 = arith.constant 1.000000e+00 : f32
    %424 = vector.broadcast %cst_126 : f32 to vector<30x1xf32>
    %425 = arith.divf %424, %423 : vector<30x1xf32>
    %cst_127 = arith.constant dense<0.000000e+00> : vector<2x1xf32>
    %426 = tpu.matmul %8, %425, %cst_127 {dimension_numbers = #tpu.dot_dimension_numbers<[1], [0], [0], [1], [0, 0, 1, 1], [], []>} : vector<2x30xf32>, vector<30x1xf32>, vector<2x1xf32> -> vector<2x1xf32>
    %cst_128 = arith.constant 0.000000e+00 : f32
    %427 = vector.broadcast %cst_128 : f32 to vector<2x63xf32>
    %428 = tpu.concatenate %414, %412, %426, %427 in 1 : vector<2x32xf32>, vector<2x32xf32>, vector<2x1xf32>, vector<2x63xf32> -> vector<2x128xf32>
    %c0_129 = arith.constant 0 : index
    %c0_130 = arith.constant 0 : index
    %429 = vector.load %arg4[%c0_129, %c0_130] : memref<2x128xf32, #tpu.memory_space<vmem>>, vector<2x128xf32>
    tpu.vector_store %arg4[%c0_129, %c0_130], %428 {strides = array<i32>} : memref<2x128xf32, #tpu.memory_space<vmem>>, vector<2x128xf32>,
    return
  }
}

</mosaic_0001>

<llo_original>
// kernel: forward.1
$region0: #{forward.1}
  #allocation0 [shape = 'u32[]', space=smem, size = 0x4, offset = 0x4, fixed_abs, tag = 'smem constant byte address 0x4 - core index']
  #allocation1 [shape = 'u32[144,128]{1,0:T(1,128)}', space=vmem, size = 0x12000, scoped, tag = 'internal scratch']
  %s0 = inlined_call_operand.hbm [shape: f32[2,256], index: 0, kind: input, shape index: {}]
  %s1 = inlined_call_operand.hbm [shape: f32[256,128], index: 1, kind: input, shape index: {}]
  %s2 = inlined_call_operand.vmem [shape: f32[2,32], index: 2, kind: input, shape index: {}]
  %s3 = inlined_call_operand.vmem [shape: f32[2,32], index: 3, kind: input, shape index: {}]
  %s4 = inlined_call_operand.vmem [shape: f32[2,128], index: 4, kind: output, shape index: {}]
  %s5 = sld [smem:[#allocation0]]
  $region34: #{forward.1} parent=0
    _
  %s7 = ssub.s32 1, %s5
  %s8 = scalar_select 0, %s7, %s5
  $region1: #{forward.1} parent=0
    #allocation2 [shape = 'u8[2048]{0}', space=vmem, size = 0x800, scoped, tag = 'input window, operand 0, single buffered']
    #allocation3 [shape = 's32[1]{0}', space=sflag, size = 0x4, scoped, tag = 'scoped memory for forward.1']
    #allocation4 [shape = 'u8[131072]{0}', space=vmem, size = 0x20000, scoped, tag = 'input window, operand 1, single buffered']
    #allocation5 [shape = 's32[1]{0}', space=sflag, size = 0x4, scoped, tag = 'scoped memory for forward.1']
    %9 = vsyncpa [#allocation3], 0
    %10 = vsyncpa [#allocation5], 0
    // Predicated region
    $region2: #{forward.1} parent=1 // pred_check
      _
    $region3: #{forward.1} parent=1 // pred_check_branch
      %12 = sbr.rel (0) target = $region5
    $region4: #{forward.1} parent=1 // pred_region
      %s14 = ssub.s32 64, 64
      %15 = vsyncadd [#allocation3], %s14
      %s17 = sshll.u32 [#allocation2], 4
      %s18 = int_to_ptr.vmem [resolvable:$true] %s17
      %20 = dma.hbm_to_vmem [thread:$0]  %s0, 64, %s18, [#allocation3]
    $region5: #{forward.1} parent=1 // pred_fallthru
      _
    // Predicated region
    $region6: #{forward.1} parent=1 // pred_check
      _
    $region7: #{forward.1} parent=1 // pred_check_branch
      %22 = sbr.rel (0) target = $region9
    $region8: #{forward.1} parent=1 // pred_region
      %s24 = ssub.s32 4096, 4096
      %25 = vsyncadd [#allocation5], %s24
      %s26 = sshll.u32 [#allocation4], 4
      %s27 = int_to_ptr.vmem [resolvable:$true] %s26
      %32 = dma.hbm_to_vmem [thread:$0]  %s1, 4096, %s27, [#allocation5], 128, 128, 8
    $region9: #{forward.1} parent=1 // pred_fallthru
      _
    // Predicated region
    $region10: #{forward.1} parent=1 // pred_check
      _
    $region11: #{forward.1} parent=1 // pred_check_branch
      %34 = sbr.rel (0) target = $region13
    $region12: #{forward.1} parent=1 // pred_region
      _
    $region13: #{forward.1} parent=1 // pred_fallthru
      _
    // Predicated region
    $region14: #{forward.1} parent=1 // pred_check
      _
    $region15: #{forward.1} parent=1 // pred_check_branch
      %36 = sbr.rel (0) target = $region17
    $region16: #{forward.1} parent=1 // pred_region
      _
    $region17: #{forward.1} parent=1 // pred_fallthru
      _
    // Predicated region
    $region18: #{forward.1} parent=1 // pred_check
      _
    $region19: #{forward.1} parent=1 // pred_check_branch
      %38 = sbr.rel (0) target = $region21
    $region20: #{forward.1} parent=1 // pred_region
      %39 = dma.done [#allocation3], 64
    $region21: #{forward.1} parent=1 // pred_fallthru
      _
    // Predicated region
    $region22: #{forward.1} parent=1 // pred_check
      _
    $region23: #{forward.1} parent=1 // pred_check_branch
      %41 = sbr.rel (0) target = $region25
    $region24: #{forward.1} parent=1 // pred_region
      %42 = dma.done [#allocation5], 4096
    $region25: #{forward.1} parent=1 // pred_fallthru
      _
    %v43 = vld [vmem:[#allocation4] sm:$0xff]
    %v44 = vld [vmem:[#allocation4 + $0x8] sm:$0xff]
    %v45 = vld [vmem:[#allocation4 + $0x10] sm:$0xff]
    %v46 = vld [vmem:[#allocation4 + $0x18] sm:$0xff]
    %v47 = vld [vmem:[#allocation4 + $0x20] sm:$0xff]
    %v48 = vld [vmem:[#allocation4 + $0x28] sm:$0xff]
    %v49 = vld [vmem:[#allocation4 + $0x30] sm:$0xff]
    %v50 = vld [vmem:[#allocation4 + $0x38] sm:$0x3f]
    %v51 = vld [vmem:[#allocation4 + $0x40] sm:$0xff]
    %v52 = vld [vmem:[#allocation4 + $0x48] sm:$0xff]
    %v53 = vld [vmem:[#allocation4 + $0x50] sm:$0xff]
    %v54 = vld [vmem:[#allocation4 + $0x58] sm:$0xff]
    %v55 = vld [vmem:[#allocation4 + $0x60] sm:$0xff]
    %v56 = vld [vmem:[#allocation4 + $0x68] sm:$0xff]
    %v57 = vld [vmem:[#allocation4 + $0x70] sm:$0xff]
    %v58 = vld [vmem:[#allocation4 + $0x78] sm:$0xff]
    %v59 = vld [vmem:[#allocation4 + $0x80] sm:$0xff]
    %v60 = vld [vmem:[#allocation4 + $0x88] sm:$0xff]
    %v61 = vld [vmem:[#allocation4 + $0x90] sm:$0xff]
    %v62 = vld [vmem:[#allocation4 + $0x98] sm:$0xff]
    %v63 = vld [vmem:[#allocation4 + $0xa0] sm:$0xff]
    %v64 = vld [vmem:[#allocation4 + $0xa8] sm:$0xff]
    %v65 = vld [vmem:[#allocation4 + $0xb0] sm:$0xff]
    %v66 = vld [vmem:[#allocation4 + $0xb8] sm:$0xff]
    %v67 = vld [vmem:[#allocation4 + $0xc0] sm:$0xff]
    %v68 = vld [vmem:[#allocation4 + $0xc8] sm:$0xff]
    %v69 = vld [vmem:[#allocation4 + $0xd0] sm:$0xff]
    %v70 = vld [vmem:[#allocation4 + $0xd8] sm:$0xff]
    %v71 = vld [vmem:[#allocation4 + $0xe0] sm:$0xff]
    %v72 = vld [vmem:[#allocation4 + $0xe8] sm:$0xff]
    %v73 = vld [vmem:[#allocation4 + $0xf0] sm:$0x3]
    %v74 = vld [vmem:[#allocation4 + $0xf8] sm:$0x1]
    %v75 = vld [vmem:[#allocation4 + $0xf9] sm:$0x1]
    %v76 = vld [vmem:[#allocation4 + $0xfa] sm:$0x1]
    %v77 = vld [vmem:[#allocation4 + $0xfb] sm:$0x1]
    %v78 = vld [vmem:[#allocation4 + $0xfc] sm:$0x1]
    %v79 = vld [vmem:[#allocation2] sm:$0xf]
    %v81 = vcombine.low %v79, %v79
    %v83 = vunpack.c.l.s4 1983009808
    %v84 = vunpack.c.0.s8 %v83
    %v85 = vlaneseq
    %v86 = vshrl.u32 %v85, 7
    %v87 = vsub.s32 %v84, %v86
    %v88 = vrot.slane %v81, %v87
    %v90 = vunpack.c.l.s4 1983009808
    %v91 = vunpack.c.0.s8 %v90
    %v92 = vlaneseq
    %v93 = vshrl.u32 %v92, 7
    %v94 = vsub.s32 %v91, %v93
    %v95 = vrot.slane %v79, %v94
    %96 = vrot.lane.b32.xlu0 %v88, 112
    %v97 = vpop.permute.xlu0 %96
    %v99 = vcombine.low %v95, %v95
    %100 = vrot.lane.b32.xlu0 %v99, 96
    %v101 = vpop.permute.xlu0 %100
    %v103 = vcombine.low %v88, %v88
    %104 = vrot.lane.b32.xlu0 %v103, 80
    %v105 = vpop.permute.xlu0 %104
    %107 = vrot.lane.b32.xlu0 %v95, 64
    %v108 = vpop.permute.xlu0 %107
    %110 = vrot.lane.b32.xlu0 %v88, 48
    %v111 = vpop.permute.xlu0 %110
    %113 = vrot.lane.b32.xlu0 %v99, 32
    %v114 = vpop.permute.xlu0 %113
    %116 = vrot.lane.b32.xlu0 %v103, 16
    %v117 = vpop.permute.xlu0 %116
    %118 = vrot.lane.b32.xlu0 %v88, 16
    %v119 = vpop.permute.xlu0 %118
    %vm120 = vcmask 130048
    %v121 = vsel %vm120, %v117, %v119
    %v123 = vcombine.high %v95, %v95
    %v125 = vcombine.high %v88, %v88
    %126 = vrot.lane.b32.xlu0 %v125, 112
    %v127 = vpop.permute.xlu0 %126
    %129 = vrot.lane.b32.xlu0 %v95, 96
    %v130 = vpop.permute.xlu0 %129
    %132 = vrot.lane.b32.xlu0 %v88, 80
    %v133 = vpop.permute.xlu0 %132
    %135 = vrot.lane.b32.xlu0 %v123, 64
    %v136 = vpop.permute.xlu0 %135
    %138 = vrot.lane.b32.xlu0 %v125, 48
    %v139 = vpop.permute.xlu0 %138
    %141 = vrot.lane.b32.xlu0 %v95, 32
    %v142 = vpop.permute.xlu0 %141
    %vm144 = vcmask 1041408
    %v145 = vsel %vm144, %v79, %v97
    %vm146 = vcmask 1043456
    %v147 = vsel %vm146, %v145, %v101
    %vm148 = vcmask 1045504
    %v149 = vsel %vm148, %v147, %v105
    %v150 = vsel %vm144, %v108, %v111
    %v151 = vsel %vm146, %v150, %v114
    %v152 = vsel %vm148, %v151, %v121
    %v153 = vsel %vm144, %v123, %v127
    %v154 = vsel %vm146, %v153, %v130
    %v155 = vsel %vm148, %v154, %v133
    %v156 = vsel %vm144, %v136, %v139
    %v157 = vsel %vm146, %v156, %v142
    %vm158 = vcmask 261120
    %v160 = vsel %vm158, %v149, 0
    %v163 = vsel %vm158, %v152, 0
    %v166 = vsel %vm158, %v155, 0
    %v169 = vsel %vm158, %v157, 0
    %171 = vmatprep.subr.mxu0 0.0
    %172 = vmatpush1.msra.mxu0 0.0
    %173 = vmatprep.subr.mxu0 0.0
    %174 = vmatpush1.msra.mxu0 0.0
    %175 = vmatprep.subr.mxu0 0.0
    %176 = vmatpush1.msra.mxu0 0.0
    %177 = vmatprep.subr.mxu0 0.0
    %178 = vmatpush1.msra.mxu0 0.0
    %179 = vmatprep.subr.mxu0 0.0
    %180 = vmatpush1.msra.mxu0 0.0
    %181 = vmatprep.subr.mxu0 0.0
    %182 = vmatpush1.msra.mxu0 0.0
    %183 = vmatprep.subr.mxu0 0.0
    %184 = vmatpush1.msra.mxu0 0.0
    %185 = vmatprep.subr.mxu0 0.0
    %186 = vmatpush1.msra.mxu0 0.0
    %187 = vmatprep.subr.mxu0 0.0
    %188 = vmatpush1.msra.mxu0 0.0
    %189 = vmatprep.subr.mxu0 0.0
    %190 = vmatpush1.msra.mxu0 0.0
    %191 = vmatprep.subr.mxu0 0.0
    %192 = vmatpush1.msra.mxu0 0.0
    %193 = vmatprep.subr.mxu0 0.0
    %194 = vmatpush1.msra.mxu0 0.0
    %195 = vmatprep.subr.mxu0 0.0
    %196 = vmatpush1.msra.mxu0 %v46
    %197 = vmatprep.subr.mxu0 0.0
    %198 = vmatpush1.msra.mxu0 %v45
    %199 = vmatprep.subr.mxu0 0.0
    %200 = vmatpush1.msra.mxu0 %v44
    %201 = vmatprep.subr.mxu0 0.0
    %202 = vmatpush1.msra.mxu0 %v43
    %203 = vmatprep.subr.mxu0 0.0
    %204 = vmatpush2.msra.mxu0 0.0
    %205 = vmatprep.subr.mxu0 0.0
    %206 = vmatpush2.msra.mxu0 0.0
    %207 = vmatprep.subr.mxu0 0.0
    %208 = vmatpush2.msra.mxu0 0.0
    %209 = vmatprep.subr.mxu0 0.0
    %210 = vmatpush2.msra.mxu0 0.0
    %211 = vmatprep.subr.mxu0 0.0
    %212 = vmatpush2.msra.mxu0 0.0
    %213 = vmatprep.subr.mxu0 0.0
    %214 = vmatpush2.msra.mxu0 0.0
    %215 = vmatprep.subr.mxu0 0.0
    %216 = vmatpush2.msra.mxu0 0.0
    %217 = vmatprep.subr.mxu0 0.0
    %218 = vmatpush2.msra.mxu0 0.0
    %219 = vmatprep.subr.mxu0 0.0
    %220 = vmatpush2.msra.mxu0 0.0
    %221 = vmatprep.subr.mxu0 0.0
    %222 = vmatpush2.msra.mxu0 0.0
    %223 = vmatprep.subr.mxu0 0.0
    %224 = vmatpush2.msra.mxu0 0.0
    %225 = vmatprep.subr.mxu0 0.0
    %226 = vmatpush2.msra.mxu0 0.0
    %227 = vmatprep.subr.mxu0 0.0
    %228 = vmatpush2.msra.mxu0 0.0
    %229 = vmatprep.subr.mxu0 0.0
    %230 = vmatpush2.msra.mxu0 0.0
    %231 = vmatprep.subr.mxu0 0.0
    %232 = vmatpush2.msra.mxu0 0.0
    %233 = vmatprep.subr.mxu0 0.0
    %234 = vmatpush2.msra.mxu0 0.0
    %235 = vmatprep.mubr.f32.mxu0 0.0
    %236 = vmatmul.mubr.f32.gmra.mxu0 %v160
    %v237 = vpop.f32.mrf.mxu0
    %v238 = vadd.f32 0.0, %v237
    %v239 = vpop.f32.mrf.mxu0
    %240 = vmatprep.mubr.f32.mxu0 0.0
    %241 = vmatmul.mubr.f32.gmra.mxu0 %v163
    %v242 = vpop.f32.mrf.mxu0
    %v243 = vadd.f32 0.0, %v242
    %v244 = vpop.f32.mrf.mxu0
    %245 = vmatprep.mubr.f32.mxu0 0.0
    %246 = vmatmul.mubr.f32.gmra.mxu0 %v166
    %v247 = vpop.f32.mrf.mxu0
    %v248 = vadd.f32 0.0, %v247
    %v249 = vpop.f32.mrf.mxu0
    %250 = vmatprep.mubr.f32.mxu0 0.0
    %251 = vmatmul.mubr.f32.gmra.mxu0 %v169
    %v252 = vpop.f32.mrf.mxu0
    %v253 = vadd.f32 0.0, %v252
    %v254 = vpop.f32.mrf.mxu0
    %255 = vdwg.mxu0
    %v256 = vmul.f32 %v238, %v238
    %v257 = vmul.f32 %v243, %v243
    %v258 = vmul.f32 %v248, %v248
    %v259 = vmul.f32 %v253, %v253
    %264 = vrot.lane.b32.xlu0 %v256, 112
    %v265 = vpop.permute.xlu0 %264
    %266 = vrot.lane.b32.xlu0 %v257, 112
    %v267 = vpop.permute.xlu0 %266
    %268 = vrot.lane.b32.xlu0 %v258, 112
    %v269 = vpop.permute.xlu0 %268
    %270 = vrot.lane.b32.xlu0 %v259, 112
    %v271 = vpop.permute.xlu0 %270
    %v276 = vadd.f32 %v256, %v265
    %v277 = vadd.f32 %v257, %v267
    %v278 = vadd.f32 %v258, %v269
    %v279 = vadd.f32 %v259, %v271
    %v280 = vadd.f32 %v276, 1e-09
    %v281 = vadd.f32 %v277, 1e-09
    %v282 = vadd.f32 %v278, 1e-09
    %v283 = vadd.f32 %v279, 1e-09
    %v284 = vrsqrt.pop %v280
    %v285 = vmul.f32 %v280, %v284
    %vm286 = vcmp.eq.f32.partialorder %v280, inf
    %v287 = vsel %vm286, %v280, %v285
    %vm288 = vcmp.eq.f32.partialorder %v280, 0.0
    %v289 = vand.u32 %v280, 2147483648
    %v290 = vsel %vm288, %v289, %v287
    %v291 = vrsqrt.pop %v281
    %v292 = vmul.f32 %v281, %v291
    %vm293 = vcmp.eq.f32.partialorder %v281, inf
    %v294 = vsel %vm293, %v281, %v292
    %vm295 = vcmp.eq.f32.partialorder %v281, 0.0
    %v296 = vand.u32 %v281, 2147483648
    %v297 = vsel %vm295, %v296, %v294
    %v298 = vrsqrt.pop %v282
    %v299 = vmul.f32 %v282, %v298
    %vm300 = vcmp.eq.f32.partialorder %v282, inf
    %v301 = vsel %vm300, %v282, %v299
    %vm302 = vcmp.eq.f32.partialorder %v282, 0.0
    %v303 = vand.u32 %v282, 2147483648
    %v304 = vsel %vm302, %v303, %v301
    %v305 = vrsqrt.pop %v283
    %v306 = vmul.f32 %v283, %v305
    %vm307 = vcmp.eq.f32.partialorder %v283, inf
    %v308 = vsel %vm307, %v283, %v306
    %vm309 = vcmp.eq.f32.partialorder %v283, 0.0
    %v310 = vand.u32 %v283, 2147483648
    %v311 = vsel %vm309, %v310, %v308
    %v312 = vadd.f32 %v290, 1.0
    %v313 = vadd.f32 %v297, 1.0
    %v314 = vadd.f32 %v304, 1.0
    %v315 = vadd.f32 %v311, 1.0
    %v316 = vlog2.pop %v312
    %v317 = vmul.f32 %v316, 0.6931472
    %v318 = vlog2.pop %v313
    %v319 = vmul.f32 %v318, 0.6931472
    %v320 = vlog2.pop %v314
    %v321 = vmul.f32 %v320, 0.6931472
    %v322 = vlog2.pop %v315
    %v323 = vmul.f32 %v322, 0.6931472
    %v324 = vadd.f32 %v317, 13.86294
    %v325 = vadd.f32 %v319, 13.86294
    %v326 = vadd.f32 %v321, 13.86294
    %v327 = vadd.f32 %v323, 13.86294
    %v329 = vsel %vm120, %v324, 0
    %v332 = vsel %vm120, %v325, 0
    %v335 = vsel %vm120, %v326, 0
    %v338 = vsel %vm120, %v327, 0
    %340 = vmatprep.subr.mxu0 0.0
    %341 = vmatpush1.msra.mxu0 0.0
    %342 = vmatprep.subr.mxu0 0.0
    %343 = vmatpush1.msra.mxu0 0.0
    %344 = vmatprep.subr.mxu0 0.0
    %345 = vmatpush1.msra.mxu0 0.0
    %346 = vmatprep.subr.mxu0 0.0
    %347 = vmatpush1.msra.mxu0 0.0
    %348 = vmatprep.subr.mxu0 0.0
    %349 = vmatpush1.msra.mxu0 0.0
    %350 = vmatprep.subr.mxu0 0.0
    %351 = vmatpush1.msra.mxu0 0.0
    %352 = vmatprep.subr.mxu0 0.0
    %353 = vmatpush1.msra.mxu0 0.0
    %354 = vmatprep.subr.mxu0 0.0
    %355 = vmatpush1.msra.mxu0 0.0
    %356 = vmatprep.subr.mxu0 0.0
    %357 = vmatpush1.msra.mxu0 0.0
    %358 = vmatprep.subr.mxu0 0.0
    %359 = vmatpush1.msra.mxu0 0.0
    %360 = vmatprep.subr.mxu0 0.0
    %361 = vmatpush1.msra.mxu0 0.0
    %362 = vmatprep.subr.mxu0 0.0
    %363 = vmatpush1.msra.mxu0 0.0
    %364 = vmatprep.subr.mxu0 0.0
    %365 = vmatpush1.msra.mxu0 0.0
    %366 = vmatprep.subr.mxu0 0.0
    %367 = vmatpush1.msra.mxu0 0.0
    %368 = vmatprep.subr.mxu0 0.0
    %369 = vmatpush1.msra.mxu0 0.0625
    %370 = vmatprep.subr.mxu0 0.0
    %371 = vmatpush1.msra.mxu0 0.0625
    %372 = vmatprep.subr.mxu0 0.0
    %373 = vmatpush2.msra.mxu0 0.0
    %374 = vmatprep.subr.mxu0 0.0
    %375 = vmatpush2.msra.mxu0 0.0
    %376 = vmatprep.subr.mxu0 0.0
    %377 = vmatpush2.msra.mxu0 0.0
    %378 = vmatprep.subr.mxu0 0.0
    %379 = vmatpush2.msra.mxu0 0.0
    %380 = vmatprep.subr.mxu0 0.0
    %381 = vmatpush2.msra.mxu0 0.0
    %382 = vmatprep.subr.mxu0 0.0
    %383 = vmatpush2.msra.mxu0 0.0
    %384 = vmatprep.subr.mxu0 0.0
    %385 = vmatpush2.msra.mxu0 0.0
    %386 = vmatprep.subr.mxu0 0.0
    %387 = vmatpush2.msra.mxu0 0.0
    %388 = vmatprep.subr.mxu0 0.0
    %389 = vmatpush2.msra.mxu0 0.0
    %390 = vmatprep.subr.mxu0 0.0
    %391 = vmatpush2.msra.mxu0 0.0
    %392 = vmatprep.subr.mxu0 0.0
    %393 = vmatpush2.msra.mxu0 0.0
    %394 = vmatprep.subr.mxu0 0.0
    %395 = vmatpush2.msra.mxu0 0.0
    %396 = vmatprep.subr.mxu0 0.0
    %397 = vmatpush2.msra.mxu0 0.0
    %398 = vmatprep.subr.mxu0 0.0
    %399 = vmatpush2.msra.mxu0 0.0
    %400 = vmatprep.subr.mxu0 0.0
    %401 = vmatpush2.msra.mxu0 0.0
    %402 = vmatprep.subr.mxu0 0.0
    %403 = vmatpush2.msra.mxu0 0.0
    %404 = vmatprep.mubr.f32.mxu0 0.0
    %405 = vmatmul.mubr.f32.gmra.mxu0 %v329
    %v406 = vpop.f32.mrf.mxu0
    %v407 = vadd.f32 0.0, %v406
    %v408 = vpop.f32.mrf.mxu0
    %409 = vmatprep.mubr.f32.mxu0 0.0
    %410 = vmatmul.mubr.f32.gmra.mxu0 %v332
    %v411 = vpop.f32.mrf.mxu0
    %v412 = vadd.f32 0.0, %v411
    %v413 = vpop.f32.mrf.mxu0
    %414 = vmatprep.mubr.f32.mxu0 0.0
    %415 = vmatmul.mubr.f32.gmra.mxu0 %v335
    %v416 = vpop.f32.mrf.mxu0
    %v417 = vadd.f32 0.0, %v416
    %v418 = vpop.f32.mrf.mxu0
    %419 = vmatprep.mubr.f32.mxu0 0.0
    %420 = vmatmul.mubr.f32.gmra.mxu0 %v338
    %v421 = vpop.f32.mrf.mxu0
    %v422 = vadd.f32 0.0, %v421
    %v423 = vpop.f32.mrf.mxu0
    %424 = vdwg.mxu0
    %vm425 = vcmask 244736
    %v427 = vsel %vm425, %v47, 0
    %v430 = vsel %vm425, %v48, 0
    %v433 = vsel %vm425, %v49, 0
    %v436 = vsel %vm425, %v50, 0
    %v439 = vsel %vm148, %v422, 0
    %441 = vmatprep.subr.mxu0 0.0
    %442 = vmatpush1.msra.mxu0 0.0
    %443 = vmatprep.subr.mxu0 0.0
    %444 = vmatpush1.msra.mxu0 0.0
    %445 = vmatprep.subr.mxu0 0.0
    %446 = vmatpush1.msra.mxu0 0.0
    %447 = vmatprep.subr.mxu0 0.0
    %448 = vmatpush1.msra.mxu0 0.0
    %449 = vmatprep.subr.mxu0 0.0
    %450 = vmatpush1.msra.mxu0 0.0
    %451 = vmatprep.subr.mxu0 0.0
    %452 = vmatpush1.msra.mxu0 0.0
    %453 = vmatprep.subr.mxu0 0.0
    %454 = vmatpush1.msra.mxu0 0.0
    %455 = vmatprep.subr.mxu0 0.0
    %456 = vmatpush1.msra.mxu0 0.0
    %457 = vmatprep.subr.mxu0 0.0
    %458 = vmatpush1.msra.mxu0 0.0
    %459 = vmatprep.subr.mxu0 0.0
    %460 = vmatpush1.msra.mxu0 0.0
    %461 = vmatprep.subr.mxu0 0.0
    %462 = vmatpush1.msra.mxu0 0.0
    %463 = vmatprep.subr.mxu0 0.0
    %464 = vmatpush1.msra.mxu0 0.0
    %465 = vmatprep.subr.mxu0 0.0
    %466 = vmatpush1.msra.mxu0 %v439
    %467 = vmatprep.subr.mxu0 0.0
    %468 = vmatpush1.msra.mxu0 %v417
    %469 = vmatprep.subr.mxu0 0.0
    %470 = vmatpush1.msra.mxu0 %v412
    %471 = vmatprep.subr.mxu0 0.0
    %472 = vmatpush1.msra.mxu0 %v407
    %473 = vmatprep.subr.mxu0 0.0
    %474 = vmatpush2.msra.mxu0 0.0
    %475 = vmatprep.subr.mxu0 0.0
    %476 = vmatpush2.msra.mxu0 0.0
    %477 = vmatprep.subr.mxu0 0.0
    %478 = vmatpush2.msra.mxu0 0.0
    %479 = vmatprep.subr.mxu0 0.0
    %480 = vmatpush2.msra.mxu0 0.0
    %481 = vmatprep.subr.mxu0 0.0
    %482 = vmatpush2.msra.mxu0 0.0
    %483 = vmatprep.subr.mxu0 0.0
    %484 = vmatpush2.msra.mxu0 0.0
    %485 = vmatprep.subr.mxu0 0.0
    %486 = vmatpush2.msra.mxu0 0.0
    %487 = vmatprep.subr.mxu0 0.0
    %488 = vmatpush2.msra.mxu0 0.0
    %489 = vmatprep.subr.mxu0 0.0
    %490 = vmatpush2.msra.mxu0 0.0
    %491 = vmatprep.subr.mxu0 0.0
    %492 = vmatpush2.msra.mxu0 0.0
    %493 = vmatprep.subr.mxu0 0.0
    %494 = vmatpush2.msra.mxu0 0.0
    %495 = vmatprep.subr.mxu0 0.0
    %496 = vmatpush2.msra.mxu0 0.0
    %497 = vmatprep.subr.mxu0 0.0
    %498 = vmatpush2.msra.mxu0 0.0
    %499 = vmatprep.subr.mxu0 0.0
    %500 = vmatpush2.msra.mxu0 0.0
    %501 = vmatprep.subr.mxu0 0.0
    %502 = vmatpush2.msra.mxu0 0.0
    %503 = vmatprep.subr.mxu0 0.0
    %504 = vmatpush2.msra.mxu0 0.0
    %505 = vmatprep.mubr.f32.mxu0 0.0
    %506 = vmatmul.mubr.f32.gmra.mxu0 %v427
    %v507 = vpop.f32.mrf.mxu0
    %v508 = vadd.f32 0.0, %v507
    %v509 = vpop.f32.mrf.mxu0
    %510 = vmatprep.mubr.f32.mxu0 0.0
    %511 = vmatmul.mubr.f32.gmra.mxu0 %v430
    %v512 = vpop.f32.mrf.mxu0
    %v513 = vadd.f32 0.0, %v512
    %v514 = vpop.f32.mrf.mxu0
    %515 = vmatprep.mubr.f32.mxu0 0.0
    %516 = vmatmul.mubr.f32.gmra.mxu0 %v433
    %v517 = vpop.f32.mrf.mxu0
    %v518 = vadd.f32 0.0, %v517
    %v519 = vpop.f32.mrf.mxu0
    %520 = vmatprep.mubr.f32.mxu0 0.0
    %521 = vmatmul.mubr.f32.gmra.mxu0 %v436
    %v522 = vpop.f32.mrf.mxu0
    %v523 = vadd.f32 0.0, %v522
    %v524 = vpop.f32.mrf.mxu0
    %525 = vdwg.mxu0
    %v526 = vsub.f32 %v324, %v508
    %v527 = vsub.f32 %v325, %v513
    %v528 = vsub.f32 %v326, %v518
    %v529 = vsub.f32 %v327, %v523
    %534 = vrot.lane.b32.xlu0 %v526, 16
    %v535 = vpop.permute.xlu0 %534
    %536 = vrot.lane.b32.xlu0 %v527, 16
    %v537 = vpop.permute.xlu0 %536
    %538 = vrot.lane.b32.xlu0 %v528, 16
    %v539 = vpop.permute.xlu0 %538
    %540 = vrot.lane.b32.xlu0 %v529, 16
    %v541 = vpop.permute.xlu0 %540
    %v546 = vsel %vm120, %v290, %v535
    %v547 = vsel %vm120, %v297, %v537
    %v548 = vsel %vm120, %v304, %v539
    %v549 = vsel %vm120, %v311, %v541
    %v550 = vlaneseq
    %v551 = vshrl.u32 %v550, 7
    %v552 = vsub.s32 0, %v551
    %v553 = vrot.slane %v74, %v552
    %v555 = vsel %vm158, %v546, 0
    %v558 = vsel %vm158, %v547, 0
    %v561 = vsel %vm158, %v548, 0
    %v564 = vsel %vm158, %v549, 0
    %566 = vmatprep.subr.mxu0 0.0
    %567 = vmatpush1.msra.mxu0 0.0
    %568 = vmatprep.subr.mxu0 0.0
    %569 = vmatpush1.msra.mxu0 0.0
    %570 = vmatprep.subr.mxu0 0.0
    %571 = vmatpush1.msra.mxu0 0.0
    %572 = vmatprep.subr.mxu0 0.0
    %573 = vmatpush1.msra.mxu0 0.0
    %574 = vmatprep.subr.mxu0 0.0
    %575 = vmatpush1.msra.mxu0 0.0
    %576 = vmatprep.subr.mxu0 0.0
    %577 = vmatpush1.msra.mxu0 0.0
    %578 = vmatprep.subr.mxu0 0.0
    %579 = vmatpush1.msra.mxu0 0.0
    %580 = vmatprep.subr.mxu0 0.0
    %581 = vmatpush1.msra.mxu0 0.0
    %582 = vmatprep.subr.mxu0 0.0
    %583 = vmatpush1.msra.mxu0 0.0
    %584 = vmatprep.subr.mxu0 0.0
    %585 = vmatpush1.msra.mxu0 0.0
    %586 = vmatprep.subr.mxu0 0.0
    %587 = vmatpush1.msra.mxu0 0.0
    %588 = vmatprep.subr.mxu0 0.0
    %589 = vmatpush1.msra.mxu0 0.0
    %590 = vmatprep.subr.mxu0 0.0
    %591 = vmatpush1.msra.mxu0 %v54
    %592 = vmatprep.subr.mxu0 0.0
    %593 = vmatpush1.msra.mxu0 %v53
    %594 = vmatprep.subr.mxu0 0.0
    %595 = vmatpush1.msra.mxu0 %v52
    %596 = vmatprep.subr.mxu0 0.0
    %597 = vmatpush1.msra.mxu0 %v51
    %598 = vmatprep.subr.mxu0 0.0
    %599 = vmatpush2.msra.mxu0 0.0
    %600 = vmatprep.subr.mxu0 0.0
    %601 = vmatpush2.msra.mxu0 0.0
    %602 = vmatprep.subr.mxu0 0.0
    %603 = vmatpush2.msra.mxu0 0.0
    %604 = vmatprep.subr.mxu0 0.0
    %605 = vmatpush2.msra.mxu0 0.0
    %606 = vmatprep.subr.mxu0 0.0
    %607 = vmatpush2.msra.mxu0 0.0
    %608 = vmatprep.subr.mxu0 0.0
    %609 = vmatpush2.msra.mxu0 0.0
    %610 = vmatprep.subr.mxu0 0.0
    %611 = vmatpush2.msra.mxu0 0.0
    %612 = vmatprep.subr.mxu0 0.0
    %613 = vmatpush2.msra.mxu0 0.0
    %614 = vmatprep.subr.mxu0 0.0
    %615 = vmatpush2.msra.mxu0 0.0
    %616 = vmatprep.subr.mxu0 0.0
    %617 = vmatpush2.msra.mxu0 0.0
    %618 = vmatprep.subr.mxu0 0.0
    %619 = vmatpush2.msra.mxu0 0.0
    %620 = vmatprep.subr.mxu0 0.0
    %621 = vmatpush2.msra.mxu0 0.0
    %622 = vmatprep.subr.mxu0 0.0
    %623 = vmatpush2.msra.mxu0 0.0
    %624 = vmatprep.subr.mxu0 0.0
    %625 = vmatpush2.msra.mxu0 0.0
    %626 = vmatprep.subr.mxu0 0.0
    %627 = vmatpush2.msra.mxu0 0.0
    %628 = vmatprep.subr.mxu0 0.0
    %629 = vmatpush2.msra.mxu0 0.0
    %630 = vmatprep.mubr.f32.mxu0 0.0
    %631 = vmatmul.mubr.f32.gmra.mxu0 %v555
    %v632 = vpop.f32.mrf.mxu0
    %v633 = vadd.f32 %v553, %v632
    %v634 = vpop.f32.mrf.mxu0
    %635 = vmatprep.mubr.f32.mxu0 0.0
    %636 = vmatmul.mubr.f32.gmra.mxu0 %v558
    %v637 = vpop.f32.mrf.mxu0
    %v638 = vadd.f32 %v553, %v637
    %v639 = vpop.f32.mrf.mxu0
    %640 = vmatprep.mubr.f32.mxu0 0.0
    %641 = vmatmul.mubr.f32.gmra.mxu0 %v561
    %v642 = vpop.f32.mrf.mxu0
    %v643 = vadd.f32 %v553, %v642
    %v644 = vpop.f32.mrf.mxu0
    %645 = vmatprep.mubr.f32.mxu0 0.0
    %646 = vmatmul.mubr.f32.gmra.mxu0 %v564
    %v647 = vpop.f32.mrf.mxu0
    %v648 = vadd.f32 %v553, %v647
    %v649 = vpop.f32.mrf.mxu0
    %650 = vdwg.mxu0
    %v651 = vmax.f32 %v633, 0.0
    %v652 = vmax.f32 %v638, 0.0
    %v653 = vmax.f32 %v643, 0.0
    %v654 = vmax.f32 %v648, 0.0
    %v655 = vlaneseq
    %v656 = vshrl.u32 %v655, 7
    %v657 = vsub.s32 0, %v656
    %v658 = vrot.slane %v75, %v657
    %v660 = vsel %vm120, %v651, 0
    %v663 = vsel %vm120, %v652, 0
    %v666 = vsel %vm120, %v653, 0
    %v669 = vsel %vm120, %v654, 0
    %671 = vmatprep.subr.mxu0 0.0
    %672 = vmatpush1.msra.mxu0 0.0
    %673 = vmatprep.subr.mxu0 0.0
    %674 = vmatpush1.msra.mxu0 0.0
    %675 = vmatprep.subr.mxu0 0.0
    %676 = vmatpush1.msra.mxu0 0.0
    %677 = vmatprep.subr.mxu0 0.0
    %678 = vmatpush1.msra.mxu0 0.0
    %679 = vmatprep.subr.mxu0 0.0
    %680 = vmatpush1.msra.mxu0 0.0
    %681 = vmatprep.subr.mxu0 0.0
    %682 = vmatpush1.msra.mxu0 0.0
    %683 = vmatprep.subr.mxu0 0.0
    %684 = vmatpush1.msra.mxu0 0.0
    %685 = vmatprep.subr.mxu0 0.0
    %686 = vmatpush1.msra.mxu0 0.0
    %687 = vmatprep.subr.mxu0 0.0
    %688 = vmatpush1.msra.mxu0 0.0
    %689 = vmatprep.subr.mxu0 0.0
    %690 = vmatpush1.msra.mxu0 0.0
    %691 = vmatprep.subr.mxu0 0.0
    %692 = vmatpush1.msra.mxu0 0.0
    %693 = vmatprep.subr.mxu0 0.0
    %694 = vmatpush1.msra.mxu0 0.0
    %695 = vmatprep.subr.mxu0 0.0
    %696 = vmatpush1.msra.mxu0 0.0
    %697 = vmatprep.subr.mxu0 0.0
    %698 = vmatpush1.msra.mxu0 0.0
    %699 = vmatprep.subr.mxu0 0.0
    %700 = vmatpush1.msra.mxu0 %v56
    %701 = vmatprep.subr.mxu0 0.0
    %702 = vmatpush1.msra.mxu0 %v55
    %703 = vmatprep.subr.mxu0 0.0
    %704 = vmatpush2.msra.mxu0 0.0
    %705 = vmatprep.subr.mxu0 0.0
    %706 = vmatpush2.msra.mxu0 0.0
    %707 = vmatprep.subr.mxu0 0.0
    %708 = vmatpush2.msra.mxu0 0.0
    %709 = vmatprep.subr.mxu0 0.0
    %710 = vmatpush2.msra.mxu0 0.0
    %711 = vmatprep.subr.mxu0 0.0
    %712 = vmatpush2.msra.mxu0 0.0
    %713 = vmatprep.subr.mxu0 0.0
    %714 = vmatpush2.msra.mxu0 0.0
    %715 = vmatprep.subr.mxu0 0.0
    %716 = vmatpush2.msra.mxu0 0.0
    %717 = vmatprep.subr.mxu0 0.0
    %718 = vmatpush2.msra.mxu0 0.0
    %719 = vmatprep.subr.mxu0 0.0
    %720 = vmatpush2.msra.mxu0 0.0
    %721 = vmatprep.subr.mxu0 0.0
    %722 = vmatpush2.msra.mxu0 0.0
    %723 = vmatprep.subr.mxu0 0.0
    %724 = vmatpush2.msra.mxu0 0.0
    %725 = vmatprep.subr.mxu0 0.0
    %726 = vmatpush2.msra.mxu0 0.0
    %727 = vmatprep.subr.mxu0 0.0
    %728 = vmatpush2.msra.mxu0 0.0
    %729 = vmatprep.subr.mxu0 0.0
    %730 = vmatpush2.msra.mxu0 0.0
    %731 = vmatprep.subr.mxu0 0.0
    %732 = vmatpush2.msra.mxu0 0.0
    %733 = vmatprep.subr.mxu0 0.0
    %734 = vmatpush2.msra.mxu0 0.0
    %735 = vmatprep.mubr.f32.mxu0 0.0
    %736 = vmatmul.mubr.f32.gmra.mxu0 %v660
    %v737 = vpop.f32.mrf.mxu0
    %v738 = vadd.f32 %v658, %v737
    %v739 = vpop.f32.mrf.mxu0
    %740 = vmatprep.mubr.f32.mxu0 0.0
    %741 = vmatmul.mubr.f32.gmra.mxu0 %v663
    %v742 = vpop.f32.mrf.mxu0
    %v743 = vadd.f32 %v658, %v742
    %v744 = vpop.f32.mrf.mxu0
    %745 = vmatprep.mubr.f32.mxu0 0.0
    %746 = vmatmul.mubr.f32.gmra.mxu0 %v666
    %v747 = vpop.f32.mrf.mxu0
    %v748 = vadd.f32 %v658, %v747
    %v749 = vpop.f32.mrf.mxu0
    %750 = vmatprep.mubr.f32.mxu0 0.0
    %751 = vmatmul.mubr.f32.gmra.mxu0 %v669
    %v752 = vpop.f32.mrf.mxu0
    %v753 = vadd.f32 %v658, %v752
    %v754 = vpop.f32.mrf.mxu0
    %755 = vdwg.mxu0
    %v756 = vmax.f32 %v738, 0.0
    %v757 = vmax.f32 %v743, 0.0
    %v758 = vmax.f32 %v748, 0.0
    %v759 = vmax.f32 %v753, 0.0
    %v760 = vlaneseq
    %v761 = vshrl.u32 %v760, 7
    %v762 = vsub.s32 0, %v761
    %v763 = vrot.slane %v76, %v762
    %v765 = vsel %vm158, %v756, 0
    %v768 = vsel %vm158, %v757, 0
    %v771 = vsel %vm158, %v758, 0
    %v774 = vsel %vm158, %v759, 0
    %776 = vmatprep.subr.mxu0 0.0
    %777 = vmatpush1.msra.mxu0 0.0
    %778 = vmatprep.subr.mxu0 0.0
    %779 = vmatpush1.msra.mxu0 0.0
    %780 = vmatprep.subr.mxu0 0.0
    %781 = vmatpush1.msra.mxu0 0.0
    %782 = vmatprep.subr.mxu0 0.0
    %783 = vmatpush1.msra.mxu0 0.0
    %784 = vmatprep.subr.mxu0 0.0
    %785 = vmatpush1.msra.mxu0 0.0
    %786 = vmatprep.subr.mxu0 0.0
    %787 = vmatpush1.msra.mxu0 0.0
    %788 = vmatprep.subr.mxu0 0.0
    %789 = vmatpush1.msra.mxu0 0.0
    %790 = vmatprep.subr.mxu0 0.0
    %791 = vmatpush1.msra.mxu0 0.0
    %792 = vmatprep.subr.mxu0 0.0
    %793 = vmatpush1.msra.mxu0 0.0
    %794 = vmatprep.subr.mxu0 0.0
    %795 = vmatpush1.msra.mxu0 0.0
    %796 = vmatprep.subr.mxu0 0.0
    %797 = vmatpush1.msra.mxu0 0.0
    %798 = vmatprep.subr.mxu0 0.0
    %799 = vmatpush1.msra.mxu0 0.0
    %800 = vmatprep.subr.mxu0 0.0
    %801 = vmatpush1.msra.mxu0 %v60
    %802 = vmatprep.subr.mxu0 0.0
    %803 = vmatpush1.msra.mxu0 %v59
    %804 = vmatprep.subr.mxu0 0.0
    %805 = vmatpush1.msra.mxu0 %v58
    %806 = vmatprep.subr.mxu0 0.0
    %807 = vmatpush1.msra.mxu0 %v57
    %808 = vmatprep.subr.mxu0 0.0
    %809 = vmatpush2.msra.mxu0 0.0
    %810 = vmatprep.subr.mxu0 0.0
    %811 = vmatpush2.msra.mxu0 0.0
    %812 = vmatprep.subr.mxu0 0.0
    %813 = vmatpush2.msra.mxu0 0.0
    %814 = vmatprep.subr.mxu0 0.0
    %815 = vmatpush2.msra.mxu0 0.0
    %816 = vmatprep.subr.mxu0 0.0
    %817 = vmatpush2.msra.mxu0 0.0
    %818 = vmatprep.subr.mxu0 0.0
    %819 = vmatpush2.msra.mxu0 0.0
    %820 = vmatprep.subr.mxu0 0.0
    %821 = vmatpush2.msra.mxu0 0.0
    %822 = vmatprep.subr.mxu0 0.0
    %823 = vmatpush2.msra.mxu0 0.0
    %824 = vmatprep.subr.mxu0 0.0
    %825 = vmatpush2.msra.mxu0 0.0
    %826 = vmatprep.subr.mxu0 0.0
    %827 = vmatpush2.msra.mxu0 0.0
    %828 = vmatprep.subr.mxu0 0.0
    %829 = vmatpush2.msra.mxu0 0.0
    %830 = vmatprep.subr.mxu0 0.0
    %831 = vmatpush2.msra.mxu0 0.0
    %832 = vmatprep.subr.mxu0 0.0
    %833 = vmatpush2.msra.mxu0 0.0
    %834 = vmatprep.subr.mxu0 0.0
    %835 = vmatpush2.msra.mxu0 0.0
    %836 = vmatprep.subr.mxu0 0.0
    %837 = vmatpush2.msra.mxu0 0.0
    %838 = vmatprep.subr.mxu0 0.0
    %839 = vmatpush2.msra.mxu0 0.0
    %840 = vmatprep.mubr.f32.mxu0 0.0
    %841 = vmatmul.mubr.f32.gmra.mxu0 %v765
    %v842 = vpop.f32.mrf.mxu0
    %v843 = vadd.f32 %v763, %v842
    %v844 = vpop.f32.mrf.mxu0
    %845 = vmatprep.mubr.f32.mxu0 0.0
    %846 = vmatmul.mubr.f32.gmra.mxu0 %v768
    %v847 = vpop.f32.mrf.mxu0
    %v848 = vadd.f32 %v763, %v847
    %v849 = vpop.f32.mrf.mxu0
    %850 = vmatprep.mubr.f32.mxu0 0.0
    %851 = vmatmul.mubr.f32.gmra.mxu0 %v771
    %v852 = vpop.f32.mrf.mxu0
    %v853 = vadd.f32 %v763, %v852
    %v854 = vpop.f32.mrf.mxu0
    %855 = vmatprep.mubr.f32.mxu0 0.0
    %856 = vmatmul.mubr.f32.gmra.mxu0 %v774
    %v857 = vpop.f32.mrf.mxu0
    %v858 = vadd.f32 %v763, %v857
    %v859 = vpop.f32.mrf.mxu0
    %860 = vdwg.mxu0
    %v861 = vmax.f32 %v843, 0.0
    %v862 = vmax.f32 %v848, 0.0
    %v863 = vmax.f32 %v853, 0.0
    %v864 = vmax.f32 %v858, 0.0
    %v865 = vlaneseq
    %v866 = vshrl.u32 %v865, 7
    %v867 = vsub.s32 0, %v866
    %v868 = vrot.slane %v77, %v867
    %v870 = vsel %vm158, %v861, 0
    %v873 = vsel %vm158, %v862, 0
    %v876 = vsel %vm158, %v863, 0
    %v879 = vsel %vm158, %v864, 0
    %881 = vmatprep.subr.mxu0 0.0
    %882 = vmatpush1.msra.mxu0 0.0
    %883 = vmatprep.subr.mxu0 0.0
    %884 = vmatpush1.msra.mxu0 0.0
    %885 = vmatprep.subr.mxu0 0.0
    %886 = vmatpush1.msra.mxu0 0.0
    %887 = vmatprep.subr.mxu0 0.0
    %888 = vmatpush1.msra.mxu0 0.0
    %889 = vmatprep.subr.mxu0 0.0
    %890 = vmatpush1.msra.mxu0 0.0
    %891 = vmatprep.subr.mxu0 0.0
    %892 = vmatpush1.msra.mxu0 0.0
    %893 = vmatprep.subr.mxu0 0.0
    %894 = vmatpush1.msra.mxu0 0.0
    %895 = vmatprep.subr.mxu0 0.0
    %896 = vmatpush1.msra.mxu0 0.0
    %897 = vmatprep.subr.mxu0 0.0
    %898 = vmatpush1.msra.mxu0 0.0
    %899 = vmatprep.subr.mxu0 0.0
    %900 = vmatpush1.msra.mxu0 0.0
    %901 = vmatprep.subr.mxu0 0.0
    %902 = vmatpush1.msra.mxu0 0.0
    %903 = vmatprep.subr.mxu0 0.0
    %904 = vmatpush1.msra.mxu0 0.0
    %905 = vmatprep.subr.mxu0 0.0
    %906 = vmatpush1.msra.mxu0 %v64
    %907 = vmatprep.subr.mxu0 0.0
    %908 = vmatpush1.msra.mxu0 %v63
    %909 = vmatprep.subr.mxu0 0.0
    %910 = vmatpush1.msra.mxu0 %v62
    %911 = vmatprep.subr.mxu0 0.0
    %912 = vmatpush1.msra.mxu0 %v61
    %913 = vmatprep.subr.mxu0 0.0
    %914 = vmatpush2.msra.mxu0 0.0
    %915 = vmatprep.subr.mxu0 0.0
    %916 = vmatpush2.msra.mxu0 0.0
    %917 = vmatprep.subr.mxu0 0.0
    %918 = vmatpush2.msra.mxu0 0.0
    %919 = vmatprep.subr.mxu0 0.0
    %920 = vmatpush2.msra.mxu0 0.0
    %921 = vmatprep.subr.mxu0 0.0
    %922 = vmatpush2.msra.mxu0 0.0
    %923 = vmatprep.subr.mxu0 0.0
    %924 = vmatpush2.msra.mxu0 0.0
    %925 = vmatprep.subr.mxu0 0.0
    %926 = vmatpush2.msra.mxu0 0.0
    %927 = vmatprep.subr.mxu0 0.0
    %928 = vmatpush2.msra.mxu0 0.0
    %929 = vmatprep.subr.mxu0 0.0
    %930 = vmatpush2.msra.mxu0 0.0
    %931 = vmatprep.subr.mxu0 0.0
    %932 = vmatpush2.msra.mxu0 0.0
    %933 = vmatprep.subr.mxu0 0.0
    %934 = vmatpush2.msra.mxu0 0.0
    %935 = vmatprep.subr.mxu0 0.0
    %936 = vmatpush2.msra.mxu0 0.0
    %937 = vmatprep.subr.mxu0 0.0
    %938 = vmatpush2.msra.mxu0 0.0
    %939 = vmatprep.subr.mxu0 0.0
    %940 = vmatpush2.msra.mxu0 0.0
    %941 = vmatprep.subr.mxu0 0.0
    %942 = vmatpush2.msra.mxu0 0.0
    %943 = vmatprep.subr.mxu0 0.0
    %944 = vmatpush2.msra.mxu0 0.0
    %945 = vmatprep.mubr.f32.mxu0 0.0
    %946 = vmatmul.mubr.f32.gmra.mxu0 %v870
    %v947 = vpop.f32.mrf.mxu0
    %v948 = vadd.f32 %v868, %v947
    %v949 = vpop.f32.mrf.mxu0
    %950 = vmatprep.mubr.f32.mxu0 0.0
    %951 = vmatmul.mubr.f32.gmra.mxu0 %v873
    %v952 = vpop.f32.mrf.mxu0
    %v953 = vadd.f32 %v868, %v952
    %v954 = vpop.f32.mrf.mxu0
    %955 = vmatprep.mubr.f32.mxu0 0.0
    %956 = vmatmul.mubr.f32.gmra.mxu0 %v876
    %v957 = vpop.f32.mrf.mxu0
    %v958 = vadd.f32 %v868, %v957
    %v959 = vpop.f32.mrf.mxu0
    %960 = vmatprep.mubr.f32.mxu0 0.0
    %961 = vmatmul.mubr.f32.gmra.mxu0 %v879
    %v962 = vpop.f32.mrf.mxu0
    %v963 = vadd.f32 %v868, %v962
    %v964 = vpop.f32.mrf.mxu0
    %965 = vdwg.mxu0
    %v966 = vld [vmem:[%s2] sm:$0x3]
    %v967 = vld [vmem:[%s3] sm:$0x3]
    %v969 = vsel %vm158, %v966, 0
    %971 = vmatprep.subr.mxu0 0.0
    %972 = vmatpush1.msra.mxu0 0.0
    %973 = vmatprep.subr.mxu0 0.0
    %974 = vmatpush1.msra.mxu0 0.0
    %975 = vmatprep.subr.mxu0 0.0
    %976 = vmatpush1.msra.mxu0 0.0
    %977 = vmatprep.subr.mxu0 0.0
    %978 = vmatpush1.msra.mxu0 0.0
    %979 = vmatprep.subr.mxu0 0.0
    %980 = vmatpush1.msra.mxu0 0.0
    %981 = vmatprep.subr.mxu0 0.0
    %982 = vmatpush1.msra.mxu0 0.0
    %983 = vmatprep.subr.mxu0 0.0
    %984 = vmatpush1.msra.mxu0 0.0
    %985 = vmatprep.subr.mxu0 0.0
    %986 = vmatpush1.msra.mxu0 0.0
    %987 = vmatprep.subr.mxu0 0.0
    %988 = vmatpush1.msra.mxu0 0.0
    %989 = vmatprep.subr.mxu0 0.0
    %990 = vmatpush1.msra.mxu0 0.0
    %991 = vmatprep.subr.mxu0 0.0
    %992 = vmatpush1.msra.mxu0 0.0
    %993 = vmatprep.subr.mxu0 0.0
    %994 = vmatpush1.msra.mxu0 0.0
    %995 = vmatprep.subr.mxu0 0.0
    %996 = vmatpush1.msra.mxu0 %v68
    %997 = vmatprep.subr.mxu0 0.0
    %998 = vmatpush1.msra.mxu0 %v67
    %999 = vmatprep.subr.mxu0 0.0
    %1000 = vmatpush1.msra.mxu0 %v66
    %1001 = vmatprep.subr.mxu0 0.0
    %1002 = vmatpush1.msra.mxu0 %v65
    %1003 = vmatprep.subr.mxu0 0.0
    %1004 = vmatpush2.msra.mxu0 0.0
    %1005 = vmatprep.subr.mxu0 0.0
    %1006 = vmatpush2.msra.mxu0 0.0
    %1007 = vmatprep.subr.mxu0 0.0
    %1008 = vmatpush2.msra.mxu0 0.0
    %1009 = vmatprep.subr.mxu0 0.0
    %1010 = vmatpush2.msra.mxu0 0.0
    %1011 = vmatprep.subr.mxu0 0.0
    %1012 = vmatpush2.msra.mxu0 0.0
    %1013 = vmatprep.subr.mxu0 0.0
    %1014 = vmatpush2.msra.mxu0 0.0
    %1015 = vmatprep.subr.mxu0 0.0
    %1016 = vmatpush2.msra.mxu0 0.0
    %1017 = vmatprep.subr.mxu0 0.0
    %1018 = vmatpush2.msra.mxu0 0.0
    %1019 = vmatprep.subr.mxu0 0.0
    %1020 = vmatpush2.msra.mxu0 0.0
    %1021 = vmatprep.subr.mxu0 0.0
    %1022 = vmatpush2.msra.mxu0 0.0
    %1023 = vmatprep.subr.mxu0 0.0
    %1024 = vmatpush2.msra.mxu0 0.0
    %1025 = vmatprep.subr.mxu0 0.0
    %1026 = vmatpush2.msra.mxu0 0.0
    %1027 = vmatprep.subr.mxu0 0.0
    %1028 = vmatpush2.msra.mxu0 0.0
    %1029 = vmatprep.subr.mxu0 0.0
    %1030 = vmatpush2.msra.mxu0 0.0
    %1031 = vmatprep.subr.mxu0 0.0
    %1032 = vmatpush2.msra.mxu0 0.0
    %1033 = vmatprep.subr.mxu0 0.0
    %1034 = vmatpush2.msra.mxu0 0.0
    %1035 = vmatprep.mubr.f32.mxu0 0.0
    %1036 = vmatmul.mubr.f32.gmra.mxu0 %v969
    %v1037 = vpop.f32.mrf.mxu0
    %v1038 = vadd.f32 0.0, %v1037
    %v1039 = vpop.f32.mrf.mxu0
    %1040 = vdwg.mxu0
    %v1041 = vadd.f32 %v948, %v1038
    %v1042 = vsub.f32 0.0, %v1041
    %v1043 = vmul.f32 %v1042, 1.442695
    %v1044 = vpow.pop %v1043
    %v1045 = vadd.f32 %v1044, 1.0
    %v1046 = vrcp.pop %v1045
    %v1047 = vmul.f32 1.0, %v1046
    %v1048 = vmul.f32 %v1047, 2.0
    %v1049 = vsub.f32 %v1048, 1.0
    %1051 = vrot.lane.b32.xlu0 %v967, 32
    %v1052 = vpop.permute.xlu0 %1051
    %v1054 = vmul.f32 %v1047, %v1052
    %1056 = vrot.lane.b32.xlu0 %v1049, 64
    %v1057 = vpop.permute.xlu0 %1056
    %v1059 = vmul.f32 %v1047, %v1057
    %1061 = vrot.lane.b32.xlu0 %v1059, 32
    %v1062 = vpop.permute.xlu0 %1061
    %v1064 = vadd.f32 %v1054, %v1062
    %v1065 = vtanh.pop %v1064
    %1067 = vrot.lane.b32.xlu0 %v1065, 64
    %v1068 = vpop.permute.xlu0 %1067
    %v1070 = vmul.f32 %v1047, %v1068
    %1072 = vrot.lane.b32.xlu0 %v1070, 32
    %v1073 = vpop.permute.xlu0 %1072
    %v1074 = vsel %vm158, %v1073, 0
    %1076 = vmatprep.subr.mxu0 0.0
    %1077 = vmatpush1.msra.mxu0 0.0
    %1078 = vmatprep.subr.mxu0 0.0
    %1079 = vmatpush1.msra.mxu0 0.0
    %1080 = vmatprep.subr.mxu0 0.0
    %1081 = vmatpush1.msra.mxu0 0.0
    %1082 = vmatprep.subr.mxu0 0.0
    %1083 = vmatpush1.msra.mxu0 0.0
    %1084 = vmatprep.subr.mxu0 0.0
    %1085 = vmatpush1.msra.mxu0 0.0
    %1086 = vmatprep.subr.mxu0 0.0
    %1087 = vmatpush1.msra.mxu0 0.0
    %1088 = vmatprep.subr.mxu0 0.0
    %1089 = vmatpush1.msra.mxu0 0.0
    %1090 = vmatprep.subr.mxu0 0.0
    %1091 = vmatpush1.msra.mxu0 0.0
    %1092 = vmatprep.subr.mxu0 0.0
    %1093 = vmatpush1.msra.mxu0 0.0
    %1094 = vmatprep.subr.mxu0 0.0
    %1095 = vmatpush1.msra.mxu0 0.0
    %1096 = vmatprep.subr.mxu0 0.0
    %1097 = vmatpush1.msra.mxu0 0.0
    %1098 = vmatprep.subr.mxu0 0.0
    %1099 = vmatpush1.msra.mxu0 0.0
    %1100 = vmatprep.subr.mxu0 0.0
    %1101 = vmatpush1.msra.mxu0 %v68
    %1102 = vmatprep.subr.mxu0 0.0
    %1103 = vmatpush1.msra.mxu0 %v67
    %1104 = vmatprep.subr.mxu0 0.0
    %1105 = vmatpush1.msra.mxu0 %v66
    %1106 = vmatprep.subr.mxu0 0.0
    %1107 = vmatpush1.msra.mxu0 %v65
    %1108 = vmatprep.subr.mxu0 0.0
    %1109 = vmatpush2.msra.mxu0 0.0
    %1110 = vmatprep.subr.mxu0 0.0
    %1111 = vmatpush2.msra.mxu0 0.0
    %1112 = vmatprep.subr.mxu0 0.0
    %1113 = vmatpush2.msra.mxu0 0.0
    %1114 = vmatprep.subr.mxu0 0.0
    %1115 = vmatpush2.msra.mxu0 0.0
    %1116 = vmatprep.subr.mxu0 0.0
    %1117 = vmatpush2.msra.mxu0 0.0
    %1118 = vmatprep.subr.mxu0 0.0
    %1119 = vmatpush2.msra.mxu0 0.0
    %1120 = vmatprep.subr.mxu0 0.0
    %1121 = vmatpush2.msra.mxu0 0.0
    %1122 = vmatprep.subr.mxu0 0.0
    %1123 = vmatpush2.msra.mxu0 0.0
    %1124 = vmatprep.subr.mxu0 0.0
    %1125 = vmatpush2.msra.mxu0 0.0
    %1126 = vmatprep.subr.mxu0 0.0
    %1127 = vmatpush2.msra.mxu0 0.0
    %1128 = vmatprep.subr.mxu0 0.0
    %1129 = vmatpush2.msra.mxu0 0.0
    %1130 = vmatprep.subr.mxu0 0.0
    %1131 = vmatpush2.msra.mxu0 0.0
    %1132 = vmatprep.subr.mxu0 0.0
    %1133 = vmatpush2.msra.mxu0 0.0
    %1134 = vmatprep.subr.mxu0 0.0
    %1135 = vmatpush2.msra.mxu0 0.0
    %1136 = vmatprep.subr.mxu0 0.0
    %1137 = vmatpush2.msra.mxu0 0.0
    %1138 = vmatprep.subr.mxu0 0.0
    %1139 = vmatpush2.msra.mxu0 0.0
    %1140 = vmatprep.mubr.f32.mxu0 0.0
    %1141 = vmatmul.mubr.f32.gmra.mxu0 %v1074
    %v1142 = vpop.f32.mrf.mxu0
    %v1143 = vadd.f32 0.0, %v1142
    %v1144 = vpop.f32.mrf.mxu0
    %1145 = vdwg.mxu0
    %v1147 = vrot.slane %v1143, 6
    %v1149 = vadd.f32 %v948, %v1147
    %v1150 = vsub.f32 0.0, %v1149
    %v1151 = vmul.f32 %v1150, 1.442695
    %v1152 = vpow.pop %v1151
    %v1153 = vadd.f32 %v1152, 1.0
    %v1154 = vrcp.pop %v1153
    %v1155 = vmul.f32 1.0, %v1154
    %v1156 = vmul.f32 %v1155, 2.0
    %v1157 = vsub.f32 %v1156, 1.0
    %v1159 = vrot.slane %v1064, 6
    %v1161 = vmul.f32 %v1155, %v1159
    %1163 = vrot.lane.b32.xlu0 %v1157, 64
    %v1164 = vpop.permute.xlu0 %1163
    %v1166 = vmul.f32 %v1155, %v1164
    %1168 = vrot.lane.b32.xlu0 %v1166, 32
    %v1169 = vpop.permute.xlu0 %1168
    %v1171 = vadd.f32 %v1161, %v1169
    %v1172 = vtanh.pop %v1171
    %1174 = vrot.lane.b32.xlu0 %v1172, 64
    %v1175 = vpop.permute.xlu0 %1174
    %v1177 = vmul.f32 %v1155, %v1175
    %v1179 = vrot.slane %v1177, 2
    %1180 = vrot.lane.b32.xlu0 %v1179, 32
    %v1181 = vpop.permute.xlu0 %1180
    %v1182 = vsel %vm158, %v1181, 0
    %1184 = vmatprep.subr.mxu0 0.0
    %1185 = vmatpush1.msra.mxu0 0.0
    %1186 = vmatprep.subr.mxu0 0.0
    %1187 = vmatpush1.msra.mxu0 0.0
    %1188 = vmatprep.subr.mxu0 0.0
    %1189 = vmatpush1.msra.mxu0 0.0
    %1190 = vmatprep.subr.mxu0 0.0
    %1191 = vmatpush1.msra.mxu0 0.0
    %1192 = vmatprep.subr.mxu0 0.0
    %1193 = vmatpush1.msra.mxu0 0.0
    %1194 = vmatprep.subr.mxu0 0.0
    %1195 = vmatpush1.msra.mxu0 0.0
    %1196 = vmatprep.subr.mxu0 0.0
    %1197 = vmatpush1.msra.mxu0 0.0
    %1198 = vmatprep.subr.mxu0 0.0
    %1199 = vmatpush1.msra.mxu0 0.0
    %1200 = vmatprep.subr.mxu0 0.0
    %1201 = vmatpush1.msra.mxu0 0.0
    %1202 = vmatprep.subr.mxu0 0.0
    %1203 = vmatpush1.msra.mxu0 0.0
    %1204 = vmatprep.subr.mxu0 0.0
    %1205 = vmatpush1.msra.mxu0 0.0
    %1206 = vmatprep.subr.mxu0 0.0
    %1207 = vmatpush1.msra.mxu0 0.0
    %1208 = vmatprep.subr.mxu0 0.0
    %1209 = vmatpush1.msra.mxu0 %v68
    %1210 = vmatprep.subr.mxu0 0.0
    %1211 = vmatpush1.msra.mxu0 %v67
    %1212 = vmatprep.subr.mxu0 0.0
    %1213 = vmatpush1.msra.mxu0 %v66
    %1214 = vmatprep.subr.mxu0 0.0
    %1215 = vmatpush1.msra.mxu0 %v65
    %1216 = vmatprep.subr.mxu0 0.0
    %1217 = vmatpush2.msra.mxu0 0.0
    %1218 = vmatprep.subr.mxu0 0.0
    %1219 = vmatpush2.msra.mxu0 0.0
    %1220 = vmatprep.subr.mxu0 0.0
    %1221 = vmatpush2.msra.mxu0 0.0
    %1222 = vmatprep.subr.mxu0 0.0
    %1223 = vmatpush2.msra.mxu0 0.0
    %1224 = vmatprep.subr.mxu0 0.0
    %1225 = vmatpush2.msra.mxu0 0.0
    %1226 = vmatprep.subr.mxu0 0.0
    %1227 = vmatpush2.msra.mxu0 0.0
    %1228 = vmatprep.subr.mxu0 0.0
    %1229 = vmatpush2.msra.mxu0 0.0
    %1230 = vmatprep.subr.mxu0 0.0
    %1231 = vmatpush2.msra.mxu0 0.0
    %1232 = vmatprep.subr.mxu0 0.0
    %1233 = vmatpush2.msra.mxu0 0.0
    %1234 = vmatprep.subr.mxu0 0.0
    %1235 = vmatpush2.msra.mxu0 0.0
    %1236 = vmatprep.subr.mxu0 0.0
    %1237 = vmatpush2.msra.mxu0 0.0
    %1238 = vmatprep.subr.mxu0 0.0
    %1239 = vmatpush2.msra.mxu0 0.0
    %1240 = vmatprep.subr.mxu0 0.0
    %1241 = vmatpush2.msra.mxu0 0.0
    %1242 = vmatprep.subr.mxu0 0.0
    %1243 = vmatpush2.msra.mxu0 0.0
    %1244 = vmatprep.subr.mxu0 0.0
    %1245 = vmatpush2.msra.mxu0 0.0
    %1246 = vmatprep.subr.mxu0 0.0
    %1247 = vmatpush2.msra.mxu0 0.0
    %1248 = vmatprep.mubr.f32.mxu0 0.0
    %1249 = vmatmul.mubr.f32.gmra.mxu0 %v1182
    %v1250 = vpop.f32.mrf.mxu0
    %v1251 = vadd.f32 0.0, %v1250
    %v1252 = vpop.f32.mrf.mxu0
    %1253 = vdwg.mxu0
    %v1255 = vrot.slane %v1251, 4
    %v1257 = vadd.f32 %v948, %v1255
    %v1258 = vsub.f32 0.0, %v1257
    %v1259 = vmul.f32 %v1258, 1.442695
    %v1260 = vpow.pop %v1259
    %v1261 = vadd.f32 %v1260, 1.0
    %v1262 = vrcp.pop %v1261
    %v1263 = vmul.f32 1.0, %v1262
    %v1264 = vmul.f32 %v1263, 2.0
    %v1265 = vsub.f32 %v1264, 1.0
    %v1267 = vrot.slane %v1171, 6
    %v1269 = vmul.f32 %v1263, %v1267
    %1271 = vrot.lane.b32.xlu0 %v1265, 64
    %v1272 = vpop.permute.xlu0 %1271
    %v1274 = vmul.f32 %v1263, %v1272
    %1276 = vrot.lane.b32.xlu0 %v1274, 32
    %v1277 = vpop.permute.xlu0 %1276
    %v1279 = vadd.f32 %v1269, %v1277
    %v1280 = vtanh.pop %v1279
    %1282 = vrot.lane.b32.xlu0 %v1280, 64
    %v1283 = vpop.permute.xlu0 %1282
    %v1285 = vmul.f32 %v1263, %v1283
    %v1287 = vrot.slane %v1285, 4
    %1288 = vrot.lane.b32.xlu0 %v1287, 32
    %v1289 = vpop.permute.xlu0 %1288
    %v1290 = vsel %vm158, %v1289, 0
    %1292 = vmatprep.subr.mxu0 0.0
    %1293 = vmatpush1.msra.mxu0 0.0
    %1294 = vmatprep.subr.mxu0 0.0
    %1295 = vmatpush1.msra.mxu0 0.0
    %1296 = vmatprep.subr.mxu0 0.0
    %1297 = vmatpush1.msra.mxu0 0.0
    %1298 = vmatprep.subr.mxu0 0.0
    %1299 = vmatpush1.msra.mxu0 0.0
    %1300 = vmatprep.subr.mxu0 0.0
    %1301 = vmatpush1.msra.mxu0 0.0
    %1302 = vmatprep.subr.mxu0 0.0
    %1303 = vmatpush1.msra.mxu0 0.0
    %1304 = vmatprep.subr.mxu0 0.0
    %1305 = vmatpush1.msra.mxu0 0.0
    %1306 = vmatprep.subr.mxu0 0.0
    %1307 = vmatpush1.msra.mxu0 0.0
    %1308 = vmatprep.subr.mxu0 0.0
    %1309 = vmatpush1.msra.mxu0 0.0
    %1310 = vmatprep.subr.mxu0 0.0
    %1311 = vmatpush1.msra.mxu0 0.0
    %1312 = vmatprep.subr.mxu0 0.0
    %1313 = vmatpush1.msra.mxu0 0.0
    %1314 = vmatprep.subr.mxu0 0.0
    %1315 = vmatpush1.msra.mxu0 0.0
    %1316 = vmatprep.subr.mxu0 0.0
    %1317 = vmatpush1.msra.mxu0 %v68
    %1318 = vmatprep.subr.mxu0 0.0
    %1319 = vmatpush1.msra.mxu0 %v67
    %1320 = vmatprep.subr.mxu0 0.0
    %1321 = vmatpush1.msra.mxu0 %v66
    %1322 = vmatprep.subr.mxu0 0.0
    %1323 = vmatpush1.msra.mxu0 %v65
    %1324 = vmatprep.subr.mxu0 0.0
    %1325 = vmatpush2.msra.mxu0 0.0
    %1326 = vmatprep.subr.mxu0 0.0
    %1327 = vmatpush2.msra.mxu0 0.0
    %1328 = vmatprep.subr.mxu0 0.0
    %1329 = vmatpush2.msra.mxu0 0.0
    %1330 = vmatprep.subr.mxu0 0.0
    %1331 = vmatpush2.msra.mxu0 0.0
    %1332 = vmatprep.subr.mxu0 0.0
    %1333 = vmatpush2.msra.mxu0 0.0
    %1334 = vmatprep.subr.mxu0 0.0
    %1335 = vmatpush2.msra.mxu0 0.0
    %1336 = vmatprep.subr.mxu0 0.0
    %1337 = vmatpush2.msra.mxu0 0.0
    %1338 = vmatprep.subr.mxu0 0.0
    %1339 = vmatpush2.msra.mxu0 0.0
    %1340 = vmatprep.subr.mxu0 0.0
    %1341 = vmatpush2.msra.mxu0 0.0
    %1342 = vmatprep.subr.mxu0 0.0
    %1343 = vmatpush2.msra.mxu0 0.0
    %1344 = vmatprep.subr.mxu0 0.0
    %1345 = vmatpush2.msra.mxu0 0.0
    %1346 = vmatprep.subr.mxu0 0.0
    %1347 = vmatpush2.msra.mxu0 0.0
    %1348 = vmatprep.subr.mxu0 0.0
    %1349 = vmatpush2.msra.mxu0 0.0
    %1350 = vmatprep.subr.mxu0 0.0
    %1351 = vmatpush2.msra.mxu0 0.0
    %1352 = vmatprep.subr.mxu0 0.0
    %1353 = vmatpush2.msra.mxu0 0.0
    %1354 = vmatprep.subr.mxu0 0.0
    %1355 = vmatpush2.msra.mxu0 0.0
    %1356 = vmatprep.mubr.f32.mxu0 0.0
    %1357 = vmatmul.mubr.f32.gmra.mxu0 %v1290
    %v1358 = vpop.f32.mrf.mxu0
    %v1359 = vadd.f32 0.0, %v1358
    %v1360 = vpop.f32.mrf.mxu0
    %1361 = vdwg.mxu0
    %v1363 = vrot.slane %v1359, 2
    %v1365 = vadd.f32 %v948, %v1363
    %v1366 = vsub.f32 0.0, %v1365
    %v1367 = vmul.f32 %v1366, 1.442695
    %v1368 = vpow.pop %v1367
    %v1369 = vadd.f32 %v1368, 1.0
    %v1370 = vrcp.pop %v1369
    %v1371 = vmul.f32 1.0, %v1370
    %v1372 = vmul.f32 %v1371, 2.0
    %v1373 = vsub.f32 %v1372, 1.0
    %v1375 = vrot.slane %v1279, 6
    %v1377 = vmul.f32 %v1371, %v1375
    %1379 = vrot.lane.b32.xlu0 %v1373, 64
    %v1380 = vpop.permute.xlu0 %1379
    %v1382 = vmul.f32 %v1371, %v1380
    %1384 = vrot.lane.b32.xlu0 %v1382, 32
    %v1385 = vpop.permute.xlu0 %1384
    %v1387 = vadd.f32 %v1377, %v1385
    %v1388 = vtanh.pop %v1387
    %1390 = vrot.lane.b32.xlu0 %v1388, 64
    %v1391 = vpop.permute.xlu0 %1390
    %v1393 = vmul.f32 %v1371, %v1391
    %v1395 = vrot.slane %v1393, 6
    %1396 = vrot.lane.b32.xlu0 %v1395, 32
    %v1397 = vpop.permute.xlu0 %1396
    %v1398 = vsel %vm158, %v1397, 0
    %1400 = vmatprep.subr.mxu0 0.0
    %1401 = vmatpush1.msra.mxu0 0.0
    %1402 = vmatprep.subr.mxu0 0.0
    %1403 = vmatpush1.msra.mxu0 0.0
    %1404 = vmatprep.subr.mxu0 0.0
    %1405 = vmatpush1.msra.mxu0 0.0
    %1406 = vmatprep.subr.mxu0 0.0
    %1407 = vmatpush1.msra.mxu0 0.0
    %1408 = vmatprep.subr.mxu0 0.0
    %1409 = vmatpush1.msra.mxu0 0.0
    %1410 = vmatprep.subr.mxu0 0.0
    %1411 = vmatpush1.msra.mxu0 0.0
    %1412 = vmatprep.subr.mxu0 0.0
    %1413 = vmatpush1.msra.mxu0 0.0
    %1414 = vmatprep.subr.mxu0 0.0
    %1415 = vmatpush1.msra.mxu0 0.0
    %1416 = vmatprep.subr.mxu0 0.0
    %1417 = vmatpush1.msra.mxu0 0.0
    %1418 = vmatprep.subr.mxu0 0.0
    %1419 = vmatpush1.msra.mxu0 0.0
    %1420 = vmatprep.subr.mxu0 0.0
    %1421 = vmatpush1.msra.mxu0 0.0
    %1422 = vmatprep.subr.mxu0 0.0
    %1423 = vmatpush1.msra.mxu0 0.0
    %1424 = vmatprep.subr.mxu0 0.0
    %1425 = vmatpush1.msra.mxu0 %v68
    %1426 = vmatprep.subr.mxu0 0.0
    %1427 = vmatpush1.msra.mxu0 %v67
    %1428 = vmatprep.subr.mxu0 0.0
    %1429 = vmatpush1.msra.mxu0 %v66
    %1430 = vmatprep.subr.mxu0 0.0
    %1431 = vmatpush1.msra.mxu0 %v65
    %1432 = vmatprep.subr.mxu0 0.0
    %1433 = vmatpush2.msra.mxu0 0.0
    %1434 = vmatprep.subr.mxu0 0.0
    %1435 = vmatpush2.msra.mxu0 0.0
    %1436 = vmatprep.subr.mxu0 0.0
    %1437 = vmatpush2.msra.mxu0 0.0
    %1438 = vmatprep.subr.mxu0 0.0
    %1439 = vmatpush2.msra.mxu0 0.0
    %1440 = vmatprep.subr.mxu0 0.0
    %1441 = vmatpush2.msra.mxu0 0.0
    %1442 = vmatprep.subr.mxu0 0.0
    %1443 = vmatpush2.msra.mxu0 0.0
    %1444 = vmatprep.subr.mxu0 0.0
    %1445 = vmatpush2.msra.mxu0 0.0
    %1446 = vmatprep.subr.mxu0 0.0
    %1447 = vmatpush2.msra.mxu0 0.0
    %1448 = vmatprep.subr.mxu0 0.0
    %1449 = vmatpush2.msra.mxu0 0.0
    %1450 = vmatprep.subr.mxu0 0.0
    %1451 = vmatpush2.msra.mxu0 0.0
    %1452 = vmatprep.subr.mxu0 0.0
    %1453 = vmatpush2.msra.mxu0 0.0
    %1454 = vmatprep.subr.mxu0 0.0
    %1455 = vmatpush2.msra.mxu0 0.0
    %1456 = vmatprep.subr.mxu0 0.0
    %1457 = vmatpush2.msra.mxu0 0.0
    %1458 = vmatprep.subr.mxu0 0.0
    %1459 = vmatpush2.msra.mxu0 0.0
    %1460 = vmatprep.subr.mxu0 0.0
    %1461 = vmatpush2.msra.mxu0 0.0
    %1462 = vmatprep.subr.mxu0 0.0
    %1463 = vmatpush2.msra.mxu0 0.0
    %1464 = vmatprep.mubr.f32.mxu0 0.0
    %1465 = vmatmul.mubr.f32.gmra.mxu0 %v1398
    %v1466 = vpop.f32.mrf.mxu0
    %v1467 = vadd.f32 0.0, %v1466
    %v1468 = vpop.f32.mrf.mxu0
    %1469 = vdwg.mxu0
    %v1470 = vadd.f32 %v953, %v1467
    %v1471 = vsub.f32 0.0, %v1470
    %v1472 = vmul.f32 %v1471, 1.442695
    %v1473 = vpow.pop %v1472
    %v1474 = vadd.f32 %v1473, 1.0
    %v1475 = vrcp.pop %v1474
    %v1476 = vmul.f32 1.0, %v1475
    %v1477 = vmul.f32 %v1476, 2.0
    %v1478 = vsub.f32 %v1477, 1.0
    %v1480 = vrot.slane %v1387, 6
    %v1482 = vmul.f32 %v1476, %v1480
    %1484 = vrot.lane.b32.xlu0 %v1478, 64
    %v1485 = vpop.permute.xlu0 %1484
    %v1487 = vmul.f32 %v1476, %v1485
    %1489 = vrot.lane.b32.xlu0 %v1487, 32
    %v1490 = vpop.permute.xlu0 %1489
    %v1492 = vadd.f32 %v1482, %v1490
    %v1493 = vtanh.pop %v1492
    %1495 = vrot.lane.b32.xlu0 %v1493, 64
    %v1496 = vpop.permute.xlu0 %1495
    %v1498 = vmul.f32 %v1476, %v1496
    %1500 = vrot.lane.b32.xlu0 %v1498, 32
    %v1501 = vpop.permute.xlu0 %1500
    %v1502 = vsel %vm158, %v1501, 0
    %1504 = vmatprep.subr.mxu0 0.0
    %1505 = vmatpush1.msra.mxu0 0.0
    %1506 = vmatprep.subr.mxu0 0.0
    %1507 = vmatpush1.msra.mxu0 0.0
    %1508 = vmatprep.subr.mxu0 0.0
    %1509 = vmatpush1.msra.mxu0 0.0
    %1510 = vmatprep.subr.mxu0 0.0
    %1511 = vmatpush1.msra.mxu0 0.0
    %1512 = vmatprep.subr.mxu0 0.0
    %1513 = vmatpush1.msra.mxu0 0.0
    %1514 = vmatprep.subr.mxu0 0.0
    %1515 = vmatpush1.msra.mxu0 0.0
    %1516 = vmatprep.subr.mxu0 0.0
    %1517 = vmatpush1.msra.mxu0 0.0
    %1518 = vmatprep.subr.mxu0 0.0
    %1519 = vmatpush1.msra.mxu0 0.0
    %1520 = vmatprep.subr.mxu0 0.0
    %1521 = vmatpush1.msra.mxu0 0.0
    %1522 = vmatprep.subr.mxu0 0.0
    %1523 = vmatpush1.msra.mxu0 0.0
    %1524 = vmatprep.subr.mxu0 0.0
    %1525 = vmatpush1.msra.mxu0 0.0
    %1526 = vmatprep.subr.mxu0 0.0
    %1527 = vmatpush1.msra.mxu0 0.0
    %1528 = vmatprep.subr.mxu0 0.0
    %1529 = vmatpush1.msra.mxu0 %v68
    %1530 = vmatprep.subr.mxu0 0.0
    %1531 = vmatpush1.msra.mxu0 %v67
    %1532 = vmatprep.subr.mxu0 0.0
    %1533 = vmatpush1.msra.mxu0 %v66
    %1534 = vmatprep.subr.mxu0 0.0
    %1535 = vmatpush1.msra.mxu0 %v65
    %1536 = vmatprep.subr.mxu0 0.0
    %1537 = vmatpush2.msra.mxu0 0.0
    %1538 = vmatprep.subr.mxu0 0.0
    %1539 = vmatpush2.msra.mxu0 0.0
    %1540 = vmatprep.subr.mxu0 0.0
    %1541 = vmatpush2.msra.mxu0 0.0
    %1542 = vmatprep.subr.mxu0 0.0
    %1543 = vmatpush2.msra.mxu0 0.0
    %1544 = vmatprep.subr.mxu0 0.0
    %1545 = vmatpush2.msra.mxu0 0.0
    %1546 = vmatprep.subr.mxu0 0.0
    %1547 = vmatpush2.msra.mxu0 0.0
    %1548 = vmatprep.subr.mxu0 0.0
    %1549 = vmatpush2.msra.mxu0 0.0
    %1550 = vmatprep.subr.mxu0 0.0
    %1551 = vmatpush2.msra.mxu0 0.0
    %1552 = vmatprep.subr.mxu0 0.0
    %1553 = vmatpush2.msra.mxu0 0.0
    %1554 = vmatprep.subr.mxu0 0.0
    %1555 = vmatpush2.msra.mxu0 0.0
    %1556 = vmatprep.subr.mxu0 0.0
    %1557 = vmatpush2.msra.mxu0 0.0
    %1558 = vmatprep.subr.mxu0 0.0
    %1559 = vmatpush2.msra.mxu0 0.0
    %1560 = vmatprep.subr.mxu0 0.0
    %1561 = vmatpush2.msra.mxu0 0.0
    %1562 = vmatprep.subr.mxu0 0.0
    %1563 = vmatpush2.msra.mxu0 0.0
    %1564 = vmatprep.subr.mxu0 0.0
    %1565 = vmatpush2.msra.mxu0 0.0
    %1566 = vmatprep.subr.mxu0 0.0
    %1567 = vmatpush2.msra.mxu0 0.0
    %1568 = vmatprep.mubr.f32.mxu0 0.0
    %1569 = vmatmul.mubr.f32.gmra.mxu0 %v1502
    %v1570 = vpop.f32.mrf.mxu0
    %v1571 = vadd.f32 0.0, %v1570
    %v1572 = vpop.f32.mrf.mxu0
    %1573 = vdwg.mxu0
    %v1575 = vrot.slane %v1571, 6
    %v1577 = vadd.f32 %v953, %v1575
    %v1578 = vsub.f32 0.0, %v1577
    %v1579 = vmul.f32 %v1578, 1.442695
    %v1580 = vpow.pop %v1579
    %v1581 = vadd.f32 %v1580, 1.0
    %v1582 = vrcp.pop %v1581
    %v1583 = vmul.f32 1.0, %v1582
    %v1584 = vmul.f32 %v1583, 2.0
    %v1585 = vsub.f32 %v1584, 1.0
    %v1587 = vrot.slane %v1492, 6
    %v1589 = vmul.f32 %v1583, %v1587
    %1591 = vrot.lane.b32.xlu0 %v1585, 64
    %v1592 = vpop.permute.xlu0 %1591
    %v1594 = vmul.f32 %v1583, %v1592
    %1596 = vrot.lane.b32.xlu0 %v1594, 32
    %v1597 = vpop.permute.xlu0 %1596
    %v1599 = vadd.f32 %v1589, %v1597
    %v1600 = vtanh.pop %v1599
    %1602 = vrot.lane.b32.xlu0 %v1600, 64
    %v1603 = vpop.permute.xlu0 %1602
    %v1605 = vmul.f32 %v1583, %v1603
    %v1607 = vrot.slane %v1605, 2
    %1608 = vrot.lane.b32.xlu0 %v1607, 32
    %v1609 = vpop.permute.xlu0 %1608
    %v1610 = vsel %vm158, %v1609, 0
    %1612 = vmatprep.subr.mxu0 0.0
    %1613 = vmatpush1.msra.mxu0 0.0
    %1614 = vmatprep.subr.mxu0 0.0
    %1615 = vmatpush1.msra.mxu0 0.0
    %1616 = vmatprep.subr.mxu0 0.0
    %1617 = vmatpush1.msra.mxu0 0.0
    %1618 = vmatprep.subr.mxu0 0.0
    %1619 = vmatpush1.msra.mxu0 0.0
    %1620 = vmatprep.subr.mxu0 0.0
    %1621 = vmatpush1.msra.mxu0 0.0
    %1622 = vmatprep.subr.mxu0 0.0
    %1623 = vmatpush1.msra.mxu0 0.0
    %1624 = vmatprep.subr.mxu0 0.0
    %1625 = vmatpush1.msra.mxu0 0.0
    %1626 = vmatprep.subr.mxu0 0.0
    %1627 = vmatpush1.msra.mxu0 0.0
    %1628 = vmatprep.subr.mxu0 0.0
    %1629 = vmatpush1.msra.mxu0 0.0
    %1630 = vmatprep.subr.mxu0 0.0
    %1631 = vmatpush1.msra.mxu0 0.0
    %1632 = vmatprep.subr.mxu0 0.0
    %1633 = vmatpush1.msra.mxu0 0.0
    %1634 = vmatprep.subr.mxu0 0.0
    %1635 = vmatpush1.msra.mxu0 0.0
    %1636 = vmatprep.subr.mxu0 0.0
    %1637 = vmatpush1.msra.mxu0 %v68
    %1638 = vmatprep.subr.mxu0 0.0
    %1639 = vmatpush1.msra.mxu0 %v67
    %1640 = vmatprep.subr.mxu0 0.0
    %1641 = vmatpush1.msra.mxu0 %v66
    %1642 = vmatprep.subr.mxu0 0.0
    %1643 = vmatpush1.msra.mxu0 %v65
    %1644 = vmatprep.subr.mxu0 0.0
    %1645 = vmatpush2.msra.mxu0 0.0
    %1646 = vmatprep.subr.mxu0 0.0
    %1647 = vmatpush2.msra.mxu0 0.0
    %1648 = vmatprep.subr.mxu0 0.0
    %1649 = vmatpush2.msra.mxu0 0.0
    %1650 = vmatprep.subr.mxu0 0.0
    %1651 = vmatpush2.msra.mxu0 0.0
    %1652 = vmatprep.subr.mxu0 0.0
    %1653 = vmatpush2.msra.mxu0 0.0
    %1654 = vmatprep.subr.mxu0 0.0
    %1655 = vmatpush2.msra.mxu0 0.0
    %1656 = vmatprep.subr.mxu0 0.0
    %1657 = vmatpush2.msra.mxu0 0.0
    %1658 = vmatprep.subr.mxu0 0.0
    %1659 = vmatpush2.msra.mxu0 0.0
    %1660 = vmatprep.subr.mxu0 0.0
    %1661 = vmatpush2.msra.mxu0 0.0
    %1662 = vmatprep.subr.mxu0 0.0
    %1663 = vmatpush2.msra.mxu0 0.0
    %1664 = vmatprep.subr.mxu0 0.0
    %1665 = vmatpush2.msra.mxu0 0.0
    %1666 = vmatprep.subr.mxu0 0.0
    %1667 = vmatpush2.msra.mxu0 0.0
    %1668 = vmatprep.subr.mxu0 0.0
    %1669 = vmatpush2.msra.mxu0 0.0
    %1670 = vmatprep.subr.mxu0 0.0
    %1671 = vmatpush2.msra.mxu0 0.0
    %1672 = vmatprep.subr.mxu0 0.0
    %1673 = vmatpush2.msra.mxu0 0.0
    %1674 = vmatprep.subr.mxu0 0.0
    %1675 = vmatpush2.msra.mxu0 0.0
    %1676 = vmatprep.mubr.f32.mxu0 0.0
    %1677 = vmatmul.mubr.f32.gmra.mxu0 %v1610
    %v1678 = vpop.f32.mrf.mxu0
    %v1679 = vadd.f32 0.0, %v1678
    %v1680 = vpop.f32.mrf.mxu0
    %1681 = vdwg.mxu0
    %v1683 = vrot.slane %v1679, 4
    %v1685 = vadd.f32 %v953, %v1683
    %v1686 = vsub.f32 0.0, %v1685
    %v1687 = vmul.f32 %v1686, 1.442695
    %v1688 = vpow.pop %v1687
    %v1689 = vadd.f32 %v1688, 1.0
    %v1690 = vrcp.pop %v1689
    %v1691 = vmul.f32 1.0, %v1690
    %v1692 = vmul.f32 %v1691, 2.0
    %v1693 = vsub.f32 %v1692, 1.0
    %v1695 = vrot.slane %v1599, 6
    %v1697 = vmul.f32 %v1691, %v1695
    %1699 = vrot.lane.b32.xlu0 %v1693, 64
    %v1700 = vpop.permute.xlu0 %1699
    %v1702 = vmul.f32 %v1691, %v1700
    %1704 = vrot.lane.b32.xlu0 %v1702, 32
    %v1705 = vpop.permute.xlu0 %1704
    %v1707 = vadd.f32 %v1697, %v1705
    %v1708 = vtanh.pop %v1707
    %1710 = vrot.lane.b32.xlu0 %v1708, 64
    %v1711 = vpop.permute.xlu0 %1710
    %v1713 = vmul.f32 %v1691, %v1711
    %v1715 = vrot.slane %v1713, 4
    %1716 = vrot.lane.b32.xlu0 %v1715, 32
    %v1717 = vpop.permute.xlu0 %1716
    %v1718 = vsel %vm158, %v1717, 0
    %1720 = vmatprep.subr.mxu0 0.0
    %1721 = vmatpush1.msra.mxu0 0.0
    %1722 = vmatprep.subr.mxu0 0.0
    %1723 = vmatpush1.msra.mxu0 0.0
    %1724 = vmatprep.subr.mxu0 0.0
    %1725 = vmatpush1.msra.mxu0 0.0
    %1726 = vmatprep.subr.mxu0 0.0
    %1727 = vmatpush1.msra.mxu0 0.0
    %1728 = vmatprep.subr.mxu0 0.0
    %1729 = vmatpush1.msra.mxu0 0.0
    %1730 = vmatprep.subr.mxu0 0.0
    %1731 = vmatpush1.msra.mxu0 0.0
    %1732 = vmatprep.subr.mxu0 0.0
    %1733 = vmatpush1.msra.mxu0 0.0
    %1734 = vmatprep.subr.mxu0 0.0
    %1735 = vmatpush1.msra.mxu0 0.0
    %1736 = vmatprep.subr.mxu0 0.0
    %1737 = vmatpush1.msra.mxu0 0.0
    %1738 = vmatprep.subr.mxu0 0.0
    %1739 = vmatpush1.msra.mxu0 0.0
    %1740 = vmatprep.subr.mxu0 0.0
    %1741 = vmatpush1.msra.mxu0 0.0
    %1742 = vmatprep.subr.mxu0 0.0
    %1743 = vmatpush1.msra.mxu0 0.0
    %1744 = vmatprep.subr.mxu0 0.0
    %1745 = vmatpush1.msra.mxu0 %v68
    %1746 = vmatprep.subr.mxu0 0.0
    %1747 = vmatpush1.msra.mxu0 %v67
    %1748 = vmatprep.subr.mxu0 0.0
    %1749 = vmatpush1.msra.mxu0 %v66
    %1750 = vmatprep.subr.mxu0 0.0
    %1751 = vmatpush1.msra.mxu0 %v65
    %1752 = vmatprep.subr.mxu0 0.0
    %1753 = vmatpush2.msra.mxu0 0.0
    %1754 = vmatprep.subr.mxu0 0.0
    %1755 = vmatpush2.msra.mxu0 0.0
    %1756 = vmatprep.subr.mxu0 0.0
    %1757 = vmatpush2.msra.mxu0 0.0
    %1758 = vmatprep.subr.mxu0 0.0
    %1759 = vmatpush2.msra.mxu0 0.0
    %1760 = vmatprep.subr.mxu0 0.0
    %1761 = vmatpush2.msra.mxu0 0.0
    %1762 = vmatprep.subr.mxu0 0.0
    %1763 = vmatpush2.msra.mxu0 0.0
    %1764 = vmatprep.subr.mxu0 0.0
    %1765 = vmatpush2.msra.mxu0 0.0
    %1766 = vmatprep.subr.mxu0 0.0
    %1767 = vmatpush2.msra.mxu0 0.0
    %1768 = vmatprep.subr.mxu0 0.0
    %1769 = vmatpush2.msra.mxu0 0.0
    %1770 = vmatprep.subr.mxu0 0.0
    %1771 = vmatpush2.msra.mxu0 0.0
    %1772 = vmatprep.subr.mxu0 0.0
    %1773 = vmatpush2.msra.mxu0 0.0
    %1774 = vmatprep.subr.mxu0 0.0
    %1775 = vmatpush2.msra.mxu0 0.0
    %1776 = vmatprep.subr.mxu0 0.0
    %1777 = vmatpush2.msra.mxu0 0.0
    %1778 = vmatprep.subr.mxu0 0.0
    %1779 = vmatpush2.msra.mxu0 0.0
    %1780 = vmatprep.subr.mxu0 0.0
    %1781 = vmatpush2.msra.mxu0 0.0
    %1782 = vmatprep.subr.mxu0 0.0
    %1783 = vmatpush2.msra.mxu0 0.0
    %1784 = vmatprep.mubr.f32.mxu0 0.0
    %1785 = vmatmul.mubr.f32.gmra.mxu0 %v1718
    %v1786 = vpop.f32.mrf.mxu0
    %v1787 = vadd.f32 0.0, %v1786
    %v1788 = vpop.f32.mrf.mxu0
    %1789 = vdwg.mxu0
    %v1791 = vrot.slane %v1787, 2
    %v1793 = vadd.f32 %v953, %v1791
    %v1794 = vsub.f32 0.0, %v1793
    %v1795 = vmul.f32 %v1794, 1.442695
    %v1796 = vpow.pop %v1795
    %v1797 = vadd.f32 %v1796, 1.0
    %v1798 = vrcp.pop %v1797
    %v1799 = vmul.f32 1.0, %v1798
    %v1800 = vmul.f32 %v1799, 2.0
    %v1801 = vsub.f32 %v1800, 1.0
    %v1803 = vrot.slane %v1707, 6
    %v1805 = vmul.f32 %v1799, %v1803
    %1807 = vrot.lane.b32.xlu0 %v1801, 64
    %v1808 = vpop.permute.xlu0 %1807
    %v1810 = vmul.f32 %v1799, %v1808
    %1812 = vrot.lane.b32.xlu0 %v1810, 32
    %v1813 = vpop.permute.xlu0 %1812
    %v1815 = vadd.f32 %v1805, %v1813
    %v1816 = vtanh.pop %v1815
    %1818 = vrot.lane.b32.xlu0 %v1816, 64
    %v1819 = vpop.permute.xlu0 %1818
    %v1821 = vmul.f32 %v1799, %v1819
    %v1823 = vrot.slane %v1821, 6
    %1824 = vrot.lane.b32.xlu0 %v1823, 32
    %v1825 = vpop.permute.xlu0 %1824
    %v1826 = vsel %vm158, %v1825, 0
    %1828 = vmatprep.subr.mxu0 0.0
    %1829 = vmatpush1.msra.mxu0 0.0
    %1830 = vmatprep.subr.mxu0 0.0
    %1831 = vmatpush1.msra.mxu0 0.0
    %1832 = vmatprep.subr.mxu0 0.0
    %1833 = vmatpush1.msra.mxu0 0.0
    %1834 = vmatprep.subr.mxu0 0.0
    %1835 = vmatpush1.msra.mxu0 0.0
    %1836 = vmatprep.subr.mxu0 0.0
    %1837 = vmatpush1.msra.mxu0 0.0
    %1838 = vmatprep.subr.mxu0 0.0
    %1839 = vmatpush1.msra.mxu0 0.0
    %1840 = vmatprep.subr.mxu0 0.0
    %1841 = vmatpush1.msra.mxu0 0.0
    %1842 = vmatprep.subr.mxu0 0.0
    %1843 = vmatpush1.msra.mxu0 0.0
    %1844 = vmatprep.subr.mxu0 0.0
    %1845 = vmatpush1.msra.mxu0 0.0
    %1846 = vmatprep.subr.mxu0 0.0
    %1847 = vmatpush1.msra.mxu0 0.0
    %1848 = vmatprep.subr.mxu0 0.0
    %1849 = vmatpush1.msra.mxu0 0.0
    %1850 = vmatprep.subr.mxu0 0.0
    %1851 = vmatpush1.msra.mxu0 0.0
    %1852 = vmatprep.subr.mxu0 0.0
    %1853 = vmatpush1.msra.mxu0 %v68
    %1854 = vmatprep.subr.mxu0 0.0
    %1855 = vmatpush1.msra.mxu0 %v67
    %1856 = vmatprep.subr.mxu0 0.0
    %1857 = vmatpush1.msra.mxu0 %v66
    %1858 = vmatprep.subr.mxu0 0.0
    %1859 = vmatpush1.msra.mxu0 %v65
    %1860 = vmatprep.subr.mxu0 0.0
    %1861 = vmatpush2.msra.mxu0 0.0
    %1862 = vmatprep.subr.mxu0 0.0
    %1863 = vmatpush2.msra.mxu0 0.0
    %1864 = vmatprep.subr.mxu0 0.0
    %1865 = vmatpush2.msra.mxu0 0.0
    %1866 = vmatprep.subr.mxu0 0.0
    %1867 = vmatpush2.msra.mxu0 0.0
    %1868 = vmatprep.subr.mxu0 0.0
    %1869 = vmatpush2.msra.mxu0 0.0
    %1870 = vmatprep.subr.mxu0 0.0
    %1871 = vmatpush2.msra.mxu0 0.0
    %1872 = vmatprep.subr.mxu0 0.0
    %1873 = vmatpush2.msra.mxu0 0.0
    %1874 = vmatprep.subr.mxu0 0.0
    %1875 = vmatpush2.msra.mxu0 0.0
    %1876 = vmatprep.subr.mxu0 0.0
    %1877 = vmatpush2.msra.mxu0 0.0
    %1878 = vmatprep.subr.mxu0 0.0
    %1879 = vmatpush2.msra.mxu0 0.0
    %1880 = vmatprep.subr.mxu0 0.0
    %1881 = vmatpush2.msra.mxu0 0.0
    %1882 = vmatprep.subr.mxu0 0.0
    %1883 = vmatpush2.msra.mxu0 0.0
    %1884 = vmatprep.subr.mxu0 0.0
    %1885 = vmatpush2.msra.mxu0 0.0
    %1886 = vmatprep.subr.mxu0 0.0
    %1887 = vmatpush2.msra.mxu0 0.0
    %1888 = vmatprep.subr.mxu0 0.0
    %1889 = vmatpush2.msra.mxu0 0.0
    %1890 = vmatprep.subr.mxu0 0.0
    %1891 = vmatpush2.msra.mxu0 0.0
    %1892 = vmatprep.mubr.f32.mxu0 0.0
    %1893 = vmatmul.mubr.f32.gmra.mxu0 %v1826
    %v1894 = vpop.f32.mrf.mxu0
    %v1895 = vadd.f32 0.0, %v1894
    %v1896 = vpop.f32.mrf.mxu0
    %1897 = vdwg.mxu0
    %v1898 = vadd.f32 %v958, %v1895
    %v1899 = vsub.f32 0.0, %v1898
    %v1900 = vmul.f32 %v1899, 1.442695
    %v1901 = vpow.pop %v1900
    %v1902 = vadd.f32 %v1901, 1.0
    %v1903 = vrcp.pop %v1902
    %v1904 = vmul.f32 1.0, %v1903
    %v1905 = vmul.f32 %v1904, 2.0
    %v1906 = vsub.f32 %v1905, 1.0
    %v1908 = vrot.slane %v1815, 6
    %v1910 = vmul.f32 %v1904, %v1908
    %1912 = vrot.lane.b32.xlu0 %v1906, 64
    %v1913 = vpop.permute.xlu0 %1912
    %v1915 = vmul.f32 %v1904, %v1913
    %1917 = vrot.lane.b32.xlu0 %v1915, 32
    %v1918 = vpop.permute.xlu0 %1917
    %v1920 = vadd.f32 %v1910, %v1918
    %v1921 = vtanh.pop %v1920
    %1923 = vrot.lane.b32.xlu0 %v1921, 64
    %v1924 = vpop.permute.xlu0 %1923
    %v1926 = vmul.f32 %v1904, %v1924
    %1928 = vrot.lane.b32.xlu0 %v1926, 32
    %v1929 = vpop.permute.xlu0 %1928
    %v1930 = vsel %vm158, %v1929, 0
    %1932 = vmatprep.subr.mxu0 0.0
    %1933 = vmatpush1.msra.mxu0 0.0
    %1934 = vmatprep.subr.mxu0 0.0
    %1935 = vmatpush1.msra.mxu0 0.0
    %1936 = vmatprep.subr.mxu0 0.0
    %1937 = vmatpush1.msra.mxu0 0.0
    %1938 = vmatprep.subr.mxu0 0.0
    %1939 = vmatpush1.msra.mxu0 0.0
    %1940 = vmatprep.subr.mxu0 0.0
    %1941 = vmatpush1.msra.mxu0 0.0
    %1942 = vmatprep.subr.mxu0 0.0
    %1943 = vmatpush1.msra.mxu0 0.0
    %1944 = vmatprep.subr.mxu0 0.0
    %1945 = vmatpush1.msra.mxu0 0.0
    %1946 = vmatprep.subr.mxu0 0.0
    %1947 = vmatpush1.msra.mxu0 0.0
    %1948 = vmatprep.subr.mxu0 0.0
    %1949 = vmatpush1.msra.mxu0 0.0
    %1950 = vmatprep.subr.mxu0 0.0
    %1951 = vmatpush1.msra.mxu0 0.0
    %1952 = vmatprep.subr.mxu0 0.0
    %1953 = vmatpush1.msra.mxu0 0.0
    %1954 = vmatprep.subr.mxu0 0.0
    %1955 = vmatpush1.msra.mxu0 0.0
    %1956 = vmatprep.subr.mxu0 0.0
    %1957 = vmatpush1.msra.mxu0 %v68
    %1958 = vmatprep.subr.mxu0 0.0
    %1959 = vmatpush1.msra.mxu0 %v67
    %1960 = vmatprep.subr.mxu0 0.0
    %1961 = vmatpush1.msra.mxu0 %v66
    %1962 = vmatprep.subr.mxu0 0.0
    %1963 = vmatpush1.msra.mxu0 %v65
    %1964 = vmatprep.subr.mxu0 0.0
    %1965 = vmatpush2.msra.mxu0 0.0
    %1966 = vmatprep.subr.mxu0 0.0
    %1967 = vmatpush2.msra.mxu0 0.0
    %1968 = vmatprep.subr.mxu0 0.0
    %1969 = vmatpush2.msra.mxu0 0.0
    %1970 = vmatprep.subr.mxu0 0.0
    %1971 = vmatpush2.msra.mxu0 0.0
    %1972 = vmatprep.subr.mxu0 0.0
    %1973 = vmatpush2.msra.mxu0 0.0
    %1974 = vmatprep.subr.mxu0 0.0
    %1975 = vmatpush2.msra.mxu0 0.0
    %1976 = vmatprep.subr.mxu0 0.0
    %1977 = vmatpush2.msra.mxu0 0.0
    %1978 = vmatprep.subr.mxu0 0.0
    %1979 = vmatpush2.msra.mxu0 0.0
    %1980 = vmatprep.subr.mxu0 0.0
    %1981 = vmatpush2.msra.mxu0 0.0
    %1982 = vmatprep.subr.mxu0 0.0
    %1983 = vmatpush2.msra.mxu0 0.0
    %1984 = vmatprep.subr.mxu0 0.0
    %1985 = vmatpush2.msra.mxu0 0.0
    %1986 = vmatprep.subr.mxu0 0.0
    %1987 = vmatpush2.msra.mxu0 0.0
    %1988 = vmatprep.subr.mxu0 0.0
    %1989 = vmatpush2.msra.mxu0 0.0
    %1990 = vmatprep.subr.mxu0 0.0
    %1991 = vmatpush2.msra.mxu0 0.0
    %1992 = vmatprep.subr.mxu0 0.0
    %1993 = vmatpush2.msra.mxu0 0.0
    %1994 = vmatprep.subr.mxu0 0.0
    %1995 = vmatpush2.msra.mxu0 0.0
    %1996 = vmatprep.mubr.f32.mxu0 0.0
    %1997 = vmatmul.mubr.f32.gmra.mxu0 %v1930
    %v1998 = vpop.f32.mrf.mxu0
    %v1999 = vadd.f32 0.0, %v1998
    %v2000 = vpop.f32.mrf.mxu0
    %2001 = vdwg.mxu0
    %v2003 = vrot.slane %v1999, 6
    %v2005 = vadd.f32 %v958, %v2003
    %v2006 = vsub.f32 0.0, %v2005
    %v2007 = vmul.f32 %v2006, 1.442695
    %v2008 = vpow.pop %v2007
    %v2009 = vadd.f32 %v2008, 1.0
    %v2010 = vrcp.pop %v2009
    %v2011 = vmul.f32 1.0, %v2010
    %v2012 = vmul.f32 %v2011, 2.0
    %v2013 = vsub.f32 %v2012, 1.0
    %v2015 = vrot.slane %v1920, 6
    %v2017 = vmul.f32 %v2011, %v2015
    %2019 = vrot.lane.b32.xlu0 %v2013, 64
    %v2020 = vpop.permute.xlu0 %2019
    %v2022 = vmul.f32 %v2011, %v2020
    %2024 = vrot.lane.b32.xlu0 %v2022, 32
    %v2025 = vpop.permute.xlu0 %2024
    %v2027 = vadd.f32 %v2017, %v2025
    %v2028 = vtanh.pop %v2027
    %2030 = vrot.lane.b32.xlu0 %v2028, 64
    %v2031 = vpop.permute.xlu0 %2030
    %v2033 = vmul.f32 %v2011, %v2031
    %v2035 = vrot.slane %v2033, 2
    %2036 = vrot.lane.b32.xlu0 %v2035, 32
    %v2037 = vpop.permute.xlu0 %2036
    %v2038 = vsel %vm158, %v2037, 0
    %2040 = vmatprep.subr.mxu0 0.0
    %2041 = vmatpush1.msra.mxu0 0.0
    %2042 = vmatprep.subr.mxu0 0.0
    %2043 = vmatpush1.msra.mxu0 0.0
    %2044 = vmatprep.subr.mxu0 0.0
    %2045 = vmatpush1.msra.mxu0 0.0
    %2046 = vmatprep.subr.mxu0 0.0
    %2047 = vmatpush1.msra.mxu0 0.0
    %2048 = vmatprep.subr.mxu0 0.0
    %2049 = vmatpush1.msra.mxu0 0.0
    %2050 = vmatprep.subr.mxu0 0.0
    %2051 = vmatpush1.msra.mxu0 0.0
    %2052 = vmatprep.subr.mxu0 0.0
    %2053 = vmatpush1.msra.mxu0 0.0
    %2054 = vmatprep.subr.mxu0 0.0
    %2055 = vmatpush1.msra.mxu0 0.0
    %2056 = vmatprep.subr.mxu0 0.0
    %2057 = vmatpush1.msra.mxu0 0.0
    %2058 = vmatprep.subr.mxu0 0.0
    %2059 = vmatpush1.msra.mxu0 0.0
    %2060 = vmatprep.subr.mxu0 0.0
    %2061 = vmatpush1.msra.mxu0 0.0
    %2062 = vmatprep.subr.mxu0 0.0
    %2063 = vmatpush1.msra.mxu0 0.0
    %2064 = vmatprep.subr.mxu0 0.0
    %2065 = vmatpush1.msra.mxu0 %v68
    %2066 = vmatprep.subr.mxu0 0.0
    %2067 = vmatpush1.msra.mxu0 %v67
    %2068 = vmatprep.subr.mxu0 0.0
    %2069 = vmatpush1.msra.mxu0 %v66
    %2070 = vmatprep.subr.mxu0 0.0
    %2071 = vmatpush1.msra.mxu0 %v65
    %2072 = vmatprep.subr.mxu0 0.0
    %2073 = vmatpush2.msra.mxu0 0.0
    %2074 = vmatprep.subr.mxu0 0.0
    %2075 = vmatpush2.msra.mxu0 0.0
    %2076 = vmatprep.subr.mxu0 0.0
    %2077 = vmatpush2.msra.mxu0 0.0
    %2078 = vmatprep.subr.mxu0 0.0
    %2079 = vmatpush2.msra.mxu0 0.0
    %2080 = vmatprep.subr.mxu0 0.0
    %2081 = vmatpush2.msra.mxu0 0.0
    %2082 = vmatprep.subr.mxu0 0.0
    %2083 = vmatpush2.msra.mxu0 0.0
    %2084 = vmatprep.subr.mxu0 0.0
    %2085 = vmatpush2.msra.mxu0 0.0
    %2086 = vmatprep.subr.mxu0 0.0
    %2087 = vmatpush2.msra.mxu0 0.0
    %2088 = vmatprep.subr.mxu0 0.0
    %2089 = vmatpush2.msra.mxu0 0.0
    %2090 = vmatprep.subr.mxu0 0.0
    %2091 = vmatpush2.msra.mxu0 0.0
    %2092 = vmatprep.subr.mxu0 0.0
    %2093 = vmatpush2.msra.mxu0 0.0
    %2094 = vmatprep.subr.mxu0 0.0
    %2095 = vmatpush2.msra.mxu0 0.0
    %2096 = vmatprep.subr.mxu0 0.0
    %2097 = vmatpush2.msra.mxu0 0.0
    %2098 = vmatprep.subr.mxu0 0.0
    %2099 = vmatpush2.msra.mxu0 0.0
    %2100 = vmatprep.subr.mxu0 0.0
    %2101 = vmatpush2.msra.mxu0 0.0
    %2102 = vmatprep.subr.mxu0 0.0
    %2103 = vmatpush2.msra.mxu0 0.0
    %2104 = vmatprep.mubr.f32.mxu0 0.0
    %2105 = vmatmul.mubr.f32.gmra.mxu0 %v2038
    %v2106 = vpop.f32.mrf.mxu0
    %v2107 = vadd.f32 0.0, %v2106
    %v2108 = vpop.f32.mrf.mxu0
    %2109 = vdwg.mxu0
    %v2111 = vrot.slane %v2107, 4
    %v2113 = vadd.f32 %v958, %v2111
    %v2114 = vsub.f32 0.0, %v2113
    %v2115 = vmul.f32 %v2114, 1.442695
    %v2116 = vpow.pop %v2115
    %v2117 = vadd.f32 %v2116, 1.0
    %v2118 = vrcp.pop %v2117
    %v2119 = vmul.f32 1.0, %v2118
    %v2120 = vmul.f32 %v2119, 2.0
    %v2121 = vsub.f32 %v2120, 1.0
    %v2123 = vrot.slane %v2027, 6
    %v2125 = vmul.f32 %v2119, %v2123
    %2127 = vrot.lane.b32.xlu0 %v2121, 64
    %v2128 = vpop.permute.xlu0 %2127
    %v2130 = vmul.f32 %v2119, %v2128
    %2132 = vrot.lane.b32.xlu0 %v2130, 32
    %v2133 = vpop.permute.xlu0 %2132
    %v2135 = vadd.f32 %v2125, %v2133
    %v2136 = vtanh.pop %v2135
    %2138 = vrot.lane.b32.xlu0 %v2136, 64
    %v2139 = vpop.permute.xlu0 %2138
    %v2141 = vmul.f32 %v2119, %v2139
    %v2143 = vrot.slane %v2141, 4
    %2144 = vrot.lane.b32.xlu0 %v2143, 32
    %v2145 = vpop.permute.xlu0 %2144
    %v2146 = vsel %vm158, %v2145, 0
    %2148 = vmatprep.subr.mxu0 0.0
    %2149 = vmatpush1.msra.mxu0 0.0
    %2150 = vmatprep.subr.mxu0 0.0
    %2151 = vmatpush1.msra.mxu0 0.0
    %2152 = vmatprep.subr.mxu0 0.0
    %2153 = vmatpush1.msra.mxu0 0.0
    %2154 = vmatprep.subr.mxu0 0.0
    %2155 = vmatpush1.msra.mxu0 0.0
    %2156 = vmatprep.subr.mxu0 0.0
    %2157 = vmatpush1.msra.mxu0 0.0
    %2158 = vmatprep.subr.mxu0 0.0
    %2159 = vmatpush1.msra.mxu0 0.0
    %2160 = vmatprep.subr.mxu0 0.0
    %2161 = vmatpush1.msra.mxu0 0.0
    %2162 = vmatprep.subr.mxu0 0.0
    %2163 = vmatpush1.msra.mxu0 0.0
    %2164 = vmatprep.subr.mxu0 0.0
    %2165 = vmatpush1.msra.mxu0 0.0
    %2166 = vmatprep.subr.mxu0 0.0
    %2167 = vmatpush1.msra.mxu0 0.0
    %2168 = vmatprep.subr.mxu0 0.0
    %2169 = vmatpush1.msra.mxu0 0.0
    %2170 = vmatprep.subr.mxu0 0.0
    %2171 = vmatpush1.msra.mxu0 0.0
    %2172 = vmatprep.subr.mxu0 0.0
    %2173 = vmatpush1.msra.mxu0 %v68
    %2174 = vmatprep.subr.mxu0 0.0
    %2175 = vmatpush1.msra.mxu0 %v67
    %2176 = vmatprep.subr.mxu0 0.0
    %2177 = vmatpush1.msra.mxu0 %v66
    %2178 = vmatprep.subr.mxu0 0.0
    %2179 = vmatpush1.msra.mxu0 %v65
    %2180 = vmatprep.subr.mxu0 0.0
    %2181 = vmatpush2.msra.mxu0 0.0
    %2182 = vmatprep.subr.mxu0 0.0
    %2183 = vmatpush2.msra.mxu0 0.0
    %2184 = vmatprep.subr.mxu0 0.0
    %2185 = vmatpush2.msra.mxu0 0.0
    %2186 = vmatprep.subr.mxu0 0.0
    %2187 = vmatpush2.msra.mxu0 0.0
    %2188 = vmatprep.subr.mxu0 0.0
    %2189 = vmatpush2.msra.mxu0 0.0
    %2190 = vmatprep.subr.mxu0 0.0
    %2191 = vmatpush2.msra.mxu0 0.0
    %2192 = vmatprep.subr.mxu0 0.0
    %2193 = vmatpush2.msra.mxu0 0.0
    %2194 = vmatprep.subr.mxu0 0.0
    %2195 = vmatpush2.msra.mxu0 0.0
    %2196 = vmatprep.subr.mxu0 0.0
    %2197 = vmatpush2.msra.mxu0 0.0
    %2198 = vmatprep.subr.mxu0 0.0
    %2199 = vmatpush2.msra.mxu0 0.0
    %2200 = vmatprep.subr.mxu0 0.0
    %2201 = vmatpush2.msra.mxu0 0.0
    %2202 = vmatprep.subr.mxu0 0.0
    %2203 = vmatpush2.msra.mxu0 0.0
    %2204 = vmatprep.subr.mxu0 0.0
    %2205 = vmatpush2.msra.mxu0 0.0
    %2206 = vmatprep.subr.mxu0 0.0
    %2207 = vmatpush2.msra.mxu0 0.0
    %2208 = vmatprep.subr.mxu0 0.0
    %2209 = vmatpush2.msra.mxu0 0.0
    %2210 = vmatprep.subr.mxu0 0.0
    %2211 = vmatpush2.msra.mxu0 0.0
    %2212 = vmatprep.mubr.f32.mxu0 0.0
    %2213 = vmatmul.mubr.f32.gmra.mxu0 %v2146
    %v2214 = vpop.f32.mrf.mxu0
    %v2215 = vadd.f32 0.0, %v2214
    %v2216 = vpop.f32.mrf.mxu0
    %2217 = vdwg.mxu0
    %v2219 = vrot.slane %v2215, 2
    %v2221 = vadd.f32 %v958, %v2219
    %v2222 = vsub.f32 0.0, %v2221
    %v2223 = vmul.f32 %v2222, 1.442695
    %v2224 = vpow.pop %v2223
    %v2225 = vadd.f32 %v2224, 1.0
    %v2226 = vrcp.pop %v2225
    %v2227 = vmul.f32 1.0, %v2226
    %v2228 = vmul.f32 %v2227, 2.0
    %v2229 = vsub.f32 %v2228, 1.0
    %v2231 = vrot.slane %v2135, 6
    %v2233 = vmul.f32 %v2227, %v2231
    %2235 = vrot.lane.b32.xlu0 %v2229, 64
    %v2236 = vpop.permute.xlu0 %2235
    %v2238 = vmul.f32 %v2227, %v2236
    %2240 = vrot.lane.b32.xlu0 %v2238, 32
    %v2241 = vpop.permute.xlu0 %2240
    %v2243 = vadd.f32 %v2233, %v2241
    %v2244 = vtanh.pop %v2243
    %2246 = vrot.lane.b32.xlu0 %v2244, 64
    %v2247 = vpop.permute.xlu0 %2246
    %v2249 = vmul.f32 %v2227, %v2247
    %v2251 = vrot.slane %v2249, 6
    %2252 = vrot.lane.b32.xlu0 %v2251, 32
    %v2253 = vpop.permute.xlu0 %2252
    %v2254 = vsel %vm158, %v2253, 0
    %2256 = vmatprep.subr.mxu0 0.0
    %2257 = vmatpush1.msra.mxu0 0.0
    %2258 = vmatprep.subr.mxu0 0.0
    %2259 = vmatpush1.msra.mxu0 0.0
    %2260 = vmatprep.subr.mxu0 0.0
    %2261 = vmatpush1.msra.mxu0 0.0
    %2262 = vmatprep.subr.mxu0 0.0
    %2263 = vmatpush1.msra.mxu0 0.0
    %2264 = vmatprep.subr.mxu0 0.0
    %2265 = vmatpush1.msra.mxu0 0.0
    %2266 = vmatprep.subr.mxu0 0.0
    %2267 = vmatpush1.msra.mxu0 0.0
    %2268 = vmatprep.subr.mxu0 0.0
    %2269 = vmatpush1.msra.mxu0 0.0
    %2270 = vmatprep.subr.mxu0 0.0
    %2271 = vmatpush1.msra.mxu0 0.0
    %2272 = vmatprep.subr.mxu0 0.0
    %2273 = vmatpush1.msra.mxu0 0.0
    %2274 = vmatprep.subr.mxu0 0.0
    %2275 = vmatpush1.msra.mxu0 0.0
    %2276 = vmatprep.subr.mxu0 0.0
    %2277 = vmatpush1.msra.mxu0 0.0
    %2278 = vmatprep.subr.mxu0 0.0
    %2279 = vmatpush1.msra.mxu0 0.0
    %2280 = vmatprep.subr.mxu0 0.0
    %2281 = vmatpush1.msra.mxu0 %v68
    %2282 = vmatprep.subr.mxu0 0.0
    %2283 = vmatpush1.msra.mxu0 %v67
    %2284 = vmatprep.subr.mxu0 0.0
    %2285 = vmatpush1.msra.mxu0 %v66
    %2286 = vmatprep.subr.mxu0 0.0
    %2287 = vmatpush1.msra.mxu0 %v65
    %2288 = vmatprep.subr.mxu0 0.0
    %2289 = vmatpush2.msra.mxu0 0.0
    %2290 = vmatprep.subr.mxu0 0.0
    %2291 = vmatpush2.msra.mxu0 0.0
    %2292 = vmatprep.subr.mxu0 0.0
    %2293 = vmatpush2.msra.mxu0 0.0
    %2294 = vmatprep.subr.mxu0 0.0
    %2295 = vmatpush2.msra.mxu0 0.0
    %2296 = vmatprep.subr.mxu0 0.0
    %2297 = vmatpush2.msra.mxu0 0.0
    %2298 = vmatprep.subr.mxu0 0.0
    %2299 = vmatpush2.msra.mxu0 0.0
    %2300 = vmatprep.subr.mxu0 0.0
    %2301 = vmatpush2.msra.mxu0 0.0
    %2302 = vmatprep.subr.mxu0 0.0
    %2303 = vmatpush2.msra.mxu0 0.0
    %2304 = vmatprep.subr.mxu0 0.0
    %2305 = vmatpush2.msra.mxu0 0.0
    %2306 = vmatprep.subr.mxu0 0.0
    %2307 = vmatpush2.msra.mxu0 0.0
    %2308 = vmatprep.subr.mxu0 0.0
    %2309 = vmatpush2.msra.mxu0 0.0
    %2310 = vmatprep.subr.mxu0 0.0
    %2311 = vmatpush2.msra.mxu0 0.0
    %2312 = vmatprep.subr.mxu0 0.0
    %2313 = vmatpush2.msra.mxu0 0.0
    %2314 = vmatprep.subr.mxu0 0.0
    %2315 = vmatpush2.msra.mxu0 0.0
    %2316 = vmatprep.subr.mxu0 0.0
    %2317 = vmatpush2.msra.mxu0 0.0
    %2318 = vmatprep.subr.mxu0 0.0
    %2319 = vmatpush2.msra.mxu0 0.0
    %2320 = vmatprep.mubr.f32.mxu0 0.0
    %2321 = vmatmul.mubr.f32.gmra.mxu0 %v2254
    %v2322 = vpop.f32.mrf.mxu0
    %v2323 = vadd.f32 0.0, %v2322
    %v2324 = vpop.f32.mrf.mxu0
    %2325 = vdwg.mxu0
    %v2326 = vadd.f32 %v963, %v2323
    %v2327 = vsub.f32 0.0, %v2326
    %v2328 = vmul.f32 %v2327, 1.442695
    %v2329 = vpow.pop %v2328
    %v2330 = vadd.f32 %v2329, 1.0
    %v2331 = vrcp.pop %v2330
    %v2332 = vmul.f32 1.0, %v2331
    %v2333 = vmul.f32 %v2332, 2.0
    %v2334 = vsub.f32 %v2333, 1.0
    %v2336 = vrot.slane %v2243, 6
    %v2338 = vmul.f32 %v2332, %v2336
    %2340 = vrot.lane.b32.xlu0 %v2334, 64
    %v2341 = vpop.permute.xlu0 %2340
    %v2343 = vmul.f32 %v2332, %v2341
    %2345 = vrot.lane.b32.xlu0 %v2343, 32
    %v2346 = vpop.permute.xlu0 %2345
    %v2348 = vadd.f32 %v2338, %v2346
    %v2349 = vtanh.pop %v2348
    %2351 = vrot.lane.b32.xlu0 %v2349, 64
    %v2352 = vpop.permute.xlu0 %2351
    %v2354 = vmul.f32 %v2332, %v2352
    %2356 = vrot.lane.b32.xlu0 %v2354, 32
    %v2357 = vpop.permute.xlu0 %2356
    %v2358 = vsel %vm158, %v2357, 0
    %2360 = vmatprep.subr.mxu0 0.0
    %2361 = vmatpush1.msra.mxu0 0.0
    %2362 = vmatprep.subr.mxu0 0.0
    %2363 = vmatpush1.msra.mxu0 0.0
    %2364 = vmatprep.subr.mxu0 0.0
    %2365 = vmatpush1.msra.mxu0 0.0
    %2366 = vmatprep.subr.mxu0 0.0
    %2367 = vmatpush1.msra.mxu0 0.0
    %2368 = vmatprep.subr.mxu0 0.0
    %2369 = vmatpush1.msra.mxu0 0.0
    %2370 = vmatprep.subr.mxu0 0.0
    %2371 = vmatpush1.msra.mxu0 0.0
    %2372 = vmatprep.subr.mxu0 0.0
    %2373 = vmatpush1.msra.mxu0 0.0
    %2374 = vmatprep.subr.mxu0 0.0
    %2375 = vmatpush1.msra.mxu0 0.0
    %2376 = vmatprep.subr.mxu0 0.0
    %2377 = vmatpush1.msra.mxu0 0.0
    %2378 = vmatprep.subr.mxu0 0.0
    %2379 = vmatpush1.msra.mxu0 0.0
    %2380 = vmatprep.subr.mxu0 0.0
    %2381 = vmatpush1.msra.mxu0 0.0
    %2382 = vmatprep.subr.mxu0 0.0
    %2383 = vmatpush1.msra.mxu0 0.0
    %2384 = vmatprep.subr.mxu0 0.0
    %2385 = vmatpush1.msra.mxu0 %v68
    %2386 = vmatprep.subr.mxu0 0.0
    %2387 = vmatpush1.msra.mxu0 %v67
    %2388 = vmatprep.subr.mxu0 0.0
    %2389 = vmatpush1.msra.mxu0 %v66
    %2390 = vmatprep.subr.mxu0 0.0
    %2391 = vmatpush1.msra.mxu0 %v65
    %2392 = vmatprep.subr.mxu0 0.0
    %2393 = vmatpush2.msra.mxu0 0.0
    %2394 = vmatprep.subr.mxu0 0.0
    %2395 = vmatpush2.msra.mxu0 0.0
    %2396 = vmatprep.subr.mxu0 0.0
    %2397 = vmatpush2.msra.mxu0 0.0
    %2398 = vmatprep.subr.mxu0 0.0
    %2399 = vmatpush2.msra.mxu0 0.0
    %2400 = vmatprep.subr.mxu0 0.0
    %2401 = vmatpush2.msra.mxu0 0.0
    %2402 = vmatprep.subr.mxu0 0.0
    %2403 = vmatpush2.msra.mxu0 0.0
    %2404 = vmatprep.subr.mxu0 0.0
    %2405 = vmatpush2.msra.mxu0 0.0
    %2406 = vmatprep.subr.mxu0 0.0
    %2407 = vmatpush2.msra.mxu0 0.0
    %2408 = vmatprep.subr.mxu0 0.0
    %2409 = vmatpush2.msra.mxu0 0.0
    %2410 = vmatprep.subr.mxu0 0.0
    %2411 = vmatpush2.msra.mxu0 0.0
    %2412 = vmatprep.subr.mxu0 0.0
    %2413 = vmatpush2.msra.mxu0 0.0
    %2414 = vmatprep.subr.mxu0 0.0
    %2415 = vmatpush2.msra.mxu0 0.0
    %2416 = vmatprep.subr.mxu0 0.0
    %2417 = vmatpush2.msra.mxu0 0.0
    %2418 = vmatprep.subr.mxu0 0.0
    %2419 = vmatpush2.msra.mxu0 0.0
    %2420 = vmatprep.subr.mxu0 0.0
    %2421 = vmatpush2.msra.mxu0 0.0
    %2422 = vmatprep.subr.mxu0 0.0
    %2423 = vmatpush2.msra.mxu0 0.0
    %2424 = vmatprep.mubr.f32.mxu0 0.0
    %2425 = vmatmul.mubr.f32.gmra.mxu0 %v2358
    %v2426 = vpop.f32.mrf.mxu0
    %v2427 = vadd.f32 0.0, %v2426
    %v2428 = vpop.f32.mrf.mxu0
    %2429 = vdwg.mxu0
    %v2431 = vrot.slane %v2427, 6
    %v2433 = vadd.f32 %v963, %v2431
    %v2434 = vsub.f32 0.0, %v2433
    %v2435 = vmul.f32 %v2434, 1.442695
    %v2436 = vpow.pop %v2435
    %v2437 = vadd.f32 %v2436, 1.0
    %v2438 = vrcp.pop %v2437
    %v2439 = vmul.f32 1.0, %v2438
    %v2440 = vmul.f32 %v2439, 2.0
    %v2441 = vsub.f32 %v2440, 1.0
    %v2443 = vrot.slane %v2348, 6
    %v2445 = vmul.f32 %v2439, %v2443
    %2447 = vrot.lane.b32.xlu0 %v2441, 64
    %v2448 = vpop.permute.xlu0 %2447
    %v2450 = vmul.f32 %v2439, %v2448
    %2452 = vrot.lane.b32.xlu0 %v2450, 32
    %v2453 = vpop.permute.xlu0 %2452
    %v2455 = vadd.f32 %v2445, %v2453
    %v2456 = vtanh.pop %v2455
    %2458 = vrot.lane.b32.xlu0 %v2456, 64
    %v2459 = vpop.permute.xlu0 %2458
    %v2461 = vmul.f32 %v2439, %v2459
    %v2463 = vrot.slane %v2461, 2
    %2464 = vrot.lane.b32.xlu0 %v2463, 32
    %v2465 = vpop.permute.xlu0 %2464
    %v2466 = vsel %vm158, %v2465, 0
    %2468 = vmatprep.subr.mxu0 0.0
    %2469 = vmatpush1.msra.mxu0 0.0
    %2470 = vmatprep.subr.mxu0 0.0
    %2471 = vmatpush1.msra.mxu0 0.0
    %2472 = vmatprep.subr.mxu0 0.0
    %2473 = vmatpush1.msra.mxu0 0.0
    %2474 = vmatprep.subr.mxu0 0.0
    %2475 = vmatpush1.msra.mxu0 0.0
    %2476 = vmatprep.subr.mxu0 0.0
    %2477 = vmatpush1.msra.mxu0 0.0
    %2478 = vmatprep.subr.mxu0 0.0
    %2479 = vmatpush1.msra.mxu0 0.0
    %2480 = vmatprep.subr.mxu0 0.0
    %2481 = vmatpush1.msra.mxu0 0.0
    %2482 = vmatprep.subr.mxu0 0.0
    %2483 = vmatpush1.msra.mxu0 0.0
    %2484 = vmatprep.subr.mxu0 0.0
    %2485 = vmatpush1.msra.mxu0 0.0
    %2486 = vmatprep.subr.mxu0 0.0
    %2487 = vmatpush1.msra.mxu0 0.0
    %2488 = vmatprep.subr.mxu0 0.0
    %2489 = vmatpush1.msra.mxu0 0.0
    %2490 = vmatprep.subr.mxu0 0.0
    %2491 = vmatpush1.msra.mxu0 0.0
    %2492 = vmatprep.subr.mxu0 0.0
    %2493 = vmatpush1.msra.mxu0 %v68
    %2494 = vmatprep.subr.mxu0 0.0
    %2495 = vmatpush1.msra.mxu0 %v67
    %2496 = vmatprep.subr.mxu0 0.0
    %2497 = vmatpush1.msra.mxu0 %v66
    %2498 = vmatprep.subr.mxu0 0.0
    %2499 = vmatpush1.msra.mxu0 %v65
    %2500 = vmatprep.subr.mxu0 0.0
    %2501 = vmatpush2.msra.mxu0 0.0
    %2502 = vmatprep.subr.mxu0 0.0
    %2503 = vmatpush2.msra.mxu0 0.0
    %2504 = vmatprep.subr.mxu0 0.0
    %2505 = vmatpush2.msra.mxu0 0.0
    %2506 = vmatprep.subr.mxu0 0.0
    %2507 = vmatpush2.msra.mxu0 0.0
    %2508 = vmatprep.subr.mxu0 0.0
    %2509 = vmatpush2.msra.mxu0 0.0
    %2510 = vmatprep.subr.mxu0 0.0
    %2511 = vmatpush2.msra.mxu0 0.0
    %2512 = vmatprep.subr.mxu0 0.0
    %2513 = vmatpush2.msra.mxu0 0.0
    %2514 = vmatprep.subr.mxu0 0.0
    %2515 = vmatpush2.msra.mxu0 0.0
    %2516 = vmatprep.subr.mxu0 0.0
    %2517 = vmatpush2.msra.mxu0 0.0
    %2518 = vmatprep.subr.mxu0 0.0
    %2519 = vmatpush2.msra.mxu0 0.0
    %2520 = vmatprep.subr.mxu0 0.0
    %2521 = vmatpush2.msra.mxu0 0.0
    %2522 = vmatprep.subr.mxu0 0.0
    %2523 = vmatpush2.msra.mxu0 0.0
    %2524 = vmatprep.subr.mxu0 0.0
    %2525 = vmatpush2.msra.mxu0 0.0
    %2526 = vmatprep.subr.mxu0 0.0
    %2527 = vmatpush2.msra.mxu0 0.0
    %2528 = vmatprep.subr.mxu0 0.0
    %2529 = vmatpush2.msra.mxu0 0.0
    %2530 = vmatprep.subr.mxu0 0.0
    %2531 = vmatpush2.msra.mxu0 0.0
    %2532 = vmatprep.mubr.f32.mxu0 0.0
    %2533 = vmatmul.mubr.f32.gmra.mxu0 %v2466
    %v2534 = vpop.f32.mrf.mxu0
    %v2535 = vadd.f32 0.0, %v2534
    %v2536 = vpop.f32.mrf.mxu0
    %2537 = vdwg.mxu0
    %v2539 = vrot.slane %v2535, 4
    %v2541 = vadd.f32 %v963, %v2539
    %v2542 = vsub.f32 0.0, %v2541
    %v2543 = vmul.f32 %v2542, 1.442695
    %v2544 = vpow.pop %v2543
    %v2545 = vadd.f32 %v2544, 1.0
    %v2546 = vrcp.pop %v2545
    %v2547 = vmul.f32 1.0, %v2546
    %v2548 = vmul.f32 %v2547, 2.0
    %v2549 = vsub.f32 %v2548, 1.0
    %v2551 = vrot.slane %v2455, 6
    %v2553 = vmul.f32 %v2547, %v2551
    %2555 = vrot.lane.b32.xlu0 %v2549, 64
    %v2556 = vpop.permute.xlu0 %2555
    %v2558 = vmul.f32 %v2547, %v2556
    %2560 = vrot.lane.b32.xlu0 %v2558, 32
    %v2561 = vpop.permute.xlu0 %2560
    %v2563 = vadd.f32 %v2553, %v2561
    %v2564 = vtanh.pop %v2563
    %2566 = vrot.lane.b32.xlu0 %v2564, 64
    %v2567 = vpop.permute.xlu0 %2566
    %v2569 = vmul.f32 %v2547, %v2567
    %v2570 = vsel %vm144, %v1070, %v1177
    %v2571 = vsel %vm146, %v2570, %v1285
    %v2572 = vsel %vm148, %v2571, %v1393
    %v2573 = vsel %vm144, %v1498, %v1605
    %v2574 = vsel %vm146, %v2573, %v1713
    %v2575 = vsel %vm148, %v2574, %v1821
    %v2576 = vsel %vm144, %v1926, %v2033
    %v2577 = vsel %vm146, %v2576, %v2141
    %v2578 = vsel %vm148, %v2577, %v2249
    %v2579 = vsel %vm144, %v2354, %v2461
    %v2580 = vsel %vm146, %v2579, %v2569
    %v2581 = vlaneseq
    %v2582 = vshrl.u32 %v2581, 7
    %v2583 = vsub.s32 0, %v2582
    %v2584 = vrot.slane %v78, %v2583
    %2589 = vrot.lane.b32.xlu0 %v2572, 32
    %v2590 = vpop.permute.xlu0 %2589
    %2591 = vrot.lane.b32.xlu0 %v2575, 32
    %v2592 = vpop.permute.xlu0 %2591
    %2593 = vrot.lane.b32.xlu0 %v2578, 32
    %v2594 = vpop.permute.xlu0 %2593
    %2595 = vrot.lane.b32.xlu0 %v2580, 32
    %v2596 = vpop.permute.xlu0 %2595
    %v2597 = vsel %vm158, %v2590, 0
    %v2599 = vsel %vm158, %v2592, 0
    %v2601 = vsel %vm158, %v2594, 0
    %v2603 = vsel %vm158, %v2596, 0
    %2605 = vmatprep.subr.mxu0 0.0
    %2606 = vmatpush1.msra.mxu0 0.0
    %2607 = vmatprep.subr.mxu0 0.0
    %2608 = vmatpush1.msra.mxu0 0.0
    %2609 = vmatprep.subr.mxu0 0.0
    %2610 = vmatpush1.msra.mxu0 0.0
    %2611 = vmatprep.subr.mxu0 0.0
    %2612 = vmatpush1.msra.mxu0 0.0
    %2613 = vmatprep.subr.mxu0 0.0
    %2614 = vmatpush1.msra.mxu0 0.0
    %2615 = vmatprep.subr.mxu0 0.0
    %2616 = vmatpush1.msra.mxu0 0.0
    %2617 = vmatprep.subr.mxu0 0.0
    %2618 = vmatpush1.msra.mxu0 0.0
    %2619 = vmatprep.subr.mxu0 0.0
    %2620 = vmatpush1.msra.mxu0 0.0
    %2621 = vmatprep.subr.mxu0 0.0
    %2622 = vmatpush1.msra.mxu0 0.0
    %2623 = vmatprep.subr.mxu0 0.0
    %2624 = vmatpush1.msra.mxu0 0.0
    %2625 = vmatprep.subr.mxu0 0.0
    %2626 = vmatpush1.msra.mxu0 0.0
    %2627 = vmatprep.subr.mxu0 0.0
    %2628 = vmatpush1.msra.mxu0 0.0
    %2629 = vmatprep.subr.mxu0 0.0
    %2630 = vmatpush1.msra.mxu0 %v72
    %2631 = vmatprep.subr.mxu0 0.0
    %2632 = vmatpush1.msra.mxu0 %v71
    %2633 = vmatprep.subr.mxu0 0.0
    %2634 = vmatpush1.msra.mxu0 %v70
    %2635 = vmatprep.subr.mxu0 0.0
    %2636 = vmatpush1.msra.mxu0 %v69
    %2637 = vmatprep.subr.mxu0 0.0
    %2638 = vmatpush2.msra.mxu0 0.0
    %2639 = vmatprep.subr.mxu0 0.0
    %2640 = vmatpush2.msra.mxu0 0.0
    %2641 = vmatprep.subr.mxu0 0.0
    %2642 = vmatpush2.msra.mxu0 0.0
    %2643 = vmatprep.subr.mxu0 0.0
    %2644 = vmatpush2.msra.mxu0 0.0
    %2645 = vmatprep.subr.mxu0 0.0
    %2646 = vmatpush2.msra.mxu0 0.0
    %2647 = vmatprep.subr.mxu0 0.0
    %2648 = vmatpush2.msra.mxu0 0.0
    %2649 = vmatprep.subr.mxu0 0.0
    %2650 = vmatpush2.msra.mxu0 0.0
    %2651 = vmatprep.subr.mxu0 0.0
    %2652 = vmatpush2.msra.mxu0 0.0
    %2653 = vmatprep.subr.mxu0 0.0
    %2654 = vmatpush2.msra.mxu0 0.0
    %2655 = vmatprep.subr.mxu0 0.0
    %2656 = vmatpush2.msra.mxu0 0.0
    %2657 = vmatprep.subr.mxu0 0.0
    %2658 = vmatpush2.msra.mxu0 0.0
    %2659 = vmatprep.subr.mxu0 0.0
    %2660 = vmatpush2.msra.mxu0 0.0
    %2661 = vmatprep.subr.mxu0 0.0
    %2662 = vmatpush2.msra.mxu0 0.0
    %2663 = vmatprep.subr.mxu0 0.0
    %2664 = vmatpush2.msra.mxu0 0.0
    %2665 = vmatprep.subr.mxu0 0.0
    %2666 = vmatpush2.msra.mxu0 0.0
    %2667 = vmatprep.subr.mxu0 0.0
    %2668 = vmatpush2.msra.mxu0 0.0
    %2669 = vmatprep.mubr.f32.mxu0 0.0
    %2670 = vmatmul.mubr.f32.gmra.mxu0 %v2597
    %v2671 = vpop.f32.mrf.mxu0
    %v2672 = vadd.f32 %v2584, %v2671
    %v2673 = vpop.f32.mrf.mxu0
    %2674 = vmatprep.mubr.f32.mxu0 0.0
    %2675 = vmatmul.mubr.f32.gmra.mxu0 %v2599
    %v2676 = vpop.f32.mrf.mxu0
    %v2677 = vadd.f32 %v2584, %v2676
    %v2678 = vpop.f32.mrf.mxu0
    %2679 = vmatprep.mubr.f32.mxu0 0.0
    %2680 = vmatmul.mubr.f32.gmra.mxu0 %v2601
    %v2681 = vpop.f32.mrf.mxu0
    %v2682 = vadd.f32 %v2584, %v2681
    %v2683 = vpop.f32.mrf.mxu0
    %2684 = vmatprep.mubr.f32.mxu0 0.0
    %2685 = vmatmul.mubr.f32.gmra.mxu0 %v2603
    %v2686 = vpop.f32.mrf.mxu0
    %v2687 = vadd.f32 %v2584, %v2686
    %v2688 = vpop.f32.mrf.mxu0
    %2689 = vdwg.mxu0
    %v2690 = vsub.f32 0.0, %v2672
    %v2691 = vsub.f32 0.0, %v2677
    %v2692 = vsub.f32 0.0, %v2682
    %v2693 = vsub.f32 0.0, %v2687
    %v2694 = vmul.f32 %v2690, 1.442695
    %v2695 = vpow.pop %v2694
    %v2696 = vmul.f32 %v2691, 1.442695
    %v2697 = vpow.pop %v2696
    %v2698 = vmul.f32 %v2692, 1.442695
    %v2699 = vpow.pop %v2698
    %v2700 = vmul.f32 %v2693, 1.442695
    %v2701 = vpow.pop %v2700
    %v2702 = vadd.f32 %v2695, 1.0
    %v2703 = vadd.f32 %v2697, 1.0
    %v2704 = vadd.f32 %v2699, 1.0
    %v2705 = vadd.f32 %v2701, 1.0
    %v2706 = vrcp.pop %v2702
    %v2707 = vmul.f32 1.0, %v2706
    %v2708 = vrcp.pop %v2703
    %v2709 = vmul.f32 1.0, %v2708
    %v2710 = vrcp.pop %v2704
    %v2711 = vmul.f32 1.0, %v2710
    %v2712 = vrcp.pop %v2705
    %v2713 = vmul.f32 1.0, %v2712
    %v2715 = vsel %vm425, %v73, 0
    %v2718 = vsel %vm148, %v2713, 0
    %2720 = vmatprep.subr.mxu0 0.0
    %2721 = vmatpush1.msra.mxu0 0.0
    %2722 = vmatprep.subr.mxu0 0.0
    %2723 = vmatpush1.msra.mxu0 0.0
    %2724 = vmatprep.subr.mxu0 0.0
    %2725 = vmatpush1.msra.mxu0 0.0
    %2726 = vmatprep.subr.mxu0 0.0
    %2727 = vmatpush1.msra.mxu0 0.0
    %2728 = vmatprep.subr.mxu0 0.0
    %2729 = vmatpush1.msra.mxu0 0.0
    %2730 = vmatprep.subr.mxu0 0.0
    %2731 = vmatpush1.msra.mxu0 0.0
    %2732 = vmatprep.subr.mxu0 0.0
    %2733 = vmatpush1.msra.mxu0 0.0
    %2734 = vmatprep.subr.mxu0 0.0
    %2735 = vmatpush1.msra.mxu0 0.0
    %2736 = vmatprep.subr.mxu0 0.0
    %2737 = vmatpush1.msra.mxu0 0.0
    %2738 = vmatprep.subr.mxu0 0.0
    %2739 = vmatpush1.msra.mxu0 0.0
    %2740 = vmatprep.subr.mxu0 0.0
    %2741 = vmatpush1.msra.mxu0 0.0
    %2742 = vmatprep.subr.mxu0 0.0
    %2743 = vmatpush1.msra.mxu0 0.0
    %2744 = vmatprep.subr.mxu0 0.0
    %2745 = vmatpush1.msra.mxu0 %v2718
    %2746 = vmatprep.subr.mxu0 0.0
    %2747 = vmatpush1.msra.mxu0 %v2711
    %2748 = vmatprep.subr.mxu0 0.0
    %2749 = vmatpush1.msra.mxu0 %v2709
    %2750 = vmatprep.subr.mxu0 0.0
    %2751 = vmatpush1.msra.mxu0 %v2707
    %2752 = vmatprep.subr.mxu0 0.0
    %2753 = vmatpush2.msra.mxu0 0.0
    %2754 = vmatprep.subr.mxu0 0.0
    %2755 = vmatpush2.msra.mxu0 0.0
    %2756 = vmatprep.subr.mxu0 0.0
    %2757 = vmatpush2.msra.mxu0 0.0
    %2758 = vmatprep.subr.mxu0 0.0
    %2759 = vmatpush2.msra.mxu0 0.0
    %2760 = vmatprep.subr.mxu0 0.0
    %2761 = vmatpush2.msra.mxu0 0.0
    %2762 = vmatprep.subr.mxu0 0.0
    %2763 = vmatpush2.msra.mxu0 0.0
    %2764 = vmatprep.subr.mxu0 0.0
    %2765 = vmatpush2.msra.mxu0 0.0
    %2766 = vmatprep.subr.mxu0 0.0
    %2767 = vmatpush2.msra.mxu0 0.0
    %2768 = vmatprep.subr.mxu0 0.0
    %2769 = vmatpush2.msra.mxu0 0.0
    %2770 = vmatprep.subr.mxu0 0.0
    %2771 = vmatpush2.msra.mxu0 0.0
    %2772 = vmatprep.subr.mxu0 0.0
    %2773 = vmatpush2.msra.mxu0 0.0
    %2774 = vmatprep.subr.mxu0 0.0
    %2775 = vmatpush2.msra.mxu0 0.0
    %2776 = vmatprep.subr.mxu0 0.0
    %2777 = vmatpush2.msra.mxu0 0.0
    %2778 = vmatprep.subr.mxu0 0.0
    %2779 = vmatpush2.msra.mxu0 0.0
    %2780 = vmatprep.subr.mxu0 0.0
    %2781 = vmatpush2.msra.mxu0 0.0
    %2782 = vmatprep.subr.mxu0 0.0
    %2783 = vmatpush2.msra.mxu0 0.0
    %2784 = vmatprep.mubr.f32.mxu0 0.0
    %2785 = vmatmul.mubr.f32.gmra.mxu0 %v2715
    %v2786 = vpop.f32.mrf.mxu0
    %v2787 = vadd.f32 0.0, %v2786
    %v2788 = vpop.f32.mrf.mxu0
    %2789 = vdwg.mxu0
    %2791 = vrot.lane.b32.xlu0 %v2569, 32
    %v2792 = vpop.permute.xlu0 %2791
    %v2795 = vrot.slane %v2787, 4
    %2796 = vrot.lane.b32.xlu0 %v2795, 64
    %v2797 = vpop.permute.xlu0 %2796
    %v2799 = vsel %vm158, %v2792, %v2563
    %vm2800 = vcmask 523264
    %v2801 = vsel %vm2800, %v2799, %v2797
    %vm2802 = vcmask 531456
    %v2803 = vsel %vm2802, %v2801, 0.0
    %2804 = vst [vmem:[%s4 - $0x4] sm:$0x30] %v2803
    // Predicated region
    $region26: #{forward.1} parent=1 // pred_check
      _
    $region27: #{forward.1} parent=1 // pred_check_branch
      %2806 = sbr.rel (0) target = $region29
    $region28: #{forward.1} parent=1 // pred_region
      _
    $region29: #{forward.1} parent=1 // pred_fallthru
      _
    // Predicated region
    $region30: #{forward.1} parent=1 // pred_check
      _
    $region31: #{forward.1} parent=1 // pred_check_branch
      %2808 = sbr.rel (0) target = $region33
    $region32: #{forward.1} parent=1 // pred_region
      _
    $region33: #{forward.1} parent=1 // pred_fallthru
      _
    %2809 = vsyncpa [#allocation3], 1
    %2810 = vsyncpa [#allocation5], 1

</llo_original>
